<compile_context>
chip_gen: v6e
topology: v6e:2x2x1
jax: 0.10.0
libtpu: 0.0.40
codegen_flags: <defaults>
</compile_context>

<pallas_src>
import numpy as np
import jax
import jax.numpy as jnp
from jax.experimental import pallas as pl
from jax.experimental.pallas import tpu as pltpu

BN_EPS = 1e-5
SLAB_W = 256          # lane width of the packed constant slab (>= widest block, 193)


def _round8(n):
    return ((n + 7) // 8) * 8


# ----------------------------------------------------------------------------
# Static geometry helpers (pure python / numpy; compile-time data only).
# ----------------------------------------------------------------------------
def _phase_geometry(k, stride, pad):
    """ConvTranspose1d(k, stride, pad) as `stride` stride-1 convs (one per output phase)."""
    left = k - 1 - pad
    k0 = [(left - r) % stride for r in range(stride)]
    ntap = [-(-(k - k0[r]) // stride) for r in range(stride)]
    dr = [(r + k0[r] - left) // stride for r in range(stride)]
    d0 = min(dr)
    n_taps = max(ntap[r] + dr[r] for r in range(stride)) - d0
    return dict(k0=k0, ntap=ntap, dr=dr, d0=d0, n_taps=n_taps)


def _even_select(l_in, l_valid, batch):
    """0/1 compaction: output column (b, m) <- input column (b, 2*m), m < l_valid//2."""
    lhalf = l_valid // 2
    e = np.zeros((batch * l_in, batch * lhalf), np.float32)
    for b in range(batch):
        for m in range(lhalf):
            e[b * l_in + 2 * m, b * lhalf + m] = 1.0
    return e


def _interleave(lq, stride, r, batch):
    """0/1 scatter: input column (b, q) -> output column (b, q*stride + r)."""
    f = np.zeros((batch * lq, batch * lq * stride), np.float32)
    for b in range(batch):
        for q in range(lq):
            f[b * lq + q, b * lq * stride + q * stride + r] = 1.0
    return f


def _tap_masks(l_in, shifts, batch):
    """Row t: 1.0 where column (b, j) may read in-batch position j + shifts[t], else 0."""
    m = np.zeros((len(shifts), batch * l_in), np.float32)
    for t, s in enumerate(shifts):
        for col in range(batch * l_in):
            j = col % l_in
            if 0 <= j + s < l_in:
                m[t, col] = 1.0
    return m


# ----------------------------------------------------------------------------
# Plan: all static geometry + slab row offsets + param-independent constants.
# ----------------------------------------------------------------------------
def make_plan(enc_cfg, dec_cfg, latent_dim, batch, in_ch, input_size):
    plan = dict(batch=batch, in_ch=in_ch, input_size=input_size, latent=latent_dim,
                slab_width=SLAB_W)
    const_blocks = []
    cursor = [0]

    def alloc(rows, cols):
        assert cols <= SLAB_W, (cols, SLAB_W)
        off = cursor[0]
        cursor[0] += _round8(rows)
        return off

    def alloc_const(arr):
        arr = np.asarray(arr, np.float32)
        off = alloc(arr.shape[0], arr.shape[1])
        const_blocks.append((off, arr))
        return off

    # ---- encoder block 1 (conv k=64, s=16 via wrapper-side im2col) ----
    ci, co, k, s, p = enc_cfg[0]
    l1 = (input_size + 2 * p - k) // s + 1
    assert l1 % 2 == 0
    plan['enc1'] = dict(ci=ci, co=co, k=k, stride=s, pad=p, lout=l1,
                        n=batch * l1, kc=ci * k,
                        w_off=alloc(co, ci * k + 1), w_rows=co, w_cols=ci * k + 1,
                        e_off=alloc_const(_even_select(l1, l1, batch)),
                        e_cols=batch * (l1 // 2))
    l_cur = l1 // 2

    # ---- encoder blocks 2..5 (k=3, stride 1): lane-shift taps + one matmul ----
    enc_rest = []
    for li in range(1, len(enc_cfg)):
        ci, co, k, s, p = enc_cfg[li]
        assert s == 1
        lout = l_cur + 2 * p - (k - 1)
        assert lout >= 2 and lout % 2 == 0
        shifts = [t - p for t in range(k)]
        enc_rest.append(dict(
            ci=ci, co=co, lin=l_cur, lout=lout, n=batch * l_cur, shifts=shifts,
            w_off=alloc(co, k * ci + 1), w_rows=co, w_cols=k * ci + 1,
            mask_off=alloc_const(_tap_masks(l_cur, shifts, batch)),
            e_off=alloc_const(_even_select(l_cur, lout, batch)),
            e_cols=batch * (lout // 2)))
        l_cur = lout // 2
    plan['enc_rest'] = enc_rest

    # TODO(synk): generalize the flatten / linear stage for encoder output length > 1.
    assert l_cur == 1, "fused kernel assumes encoder output length == 1"
    lin_input = enc_cfg[-1][1]
    plan['lin_input'] = lin_input

    plan['lin1'] = dict(w_off=alloc(latent_dim, lin_input + 1),
                        rows=latent_dim, cols=lin_input + 1)
    plan['lin2'] = dict(w_off=alloc(lin_input, latent_dim + 1),
                        rows=lin_input, cols=latent_dim + 1)

    # ---- decoder block 1 (input length 1 -> direct (Lout*Co, Ci) expansion) ----
    ci, co, k, s, p, op = dec_cfg[0]
    lout1 = k + op - 2 * p                                   # (Lin-1)*s - 2p + k + op, Lin=1
    plan['dec1'] = dict(ci=ci, co=co, k=k, pad=p, lout=lout1, b=batch,
                        w_off=alloc(lout1 * co, ci + 1),
                        rows=lout1 * co, cols=ci + 1,
                        f_offs=[alloc_const(_interleave(1, lout1, m, batch))
                                for m in range(lout1)])
    l_cur = lout1

    # ---- decoder blocks 2..5 (phase-decomposed transposed convs) ----
    dec_mid = []
    for li in range(1, len(dec_cfg)):
        ci, co, k, s, p, op = dec_cfg[li]
        geo = _phase_geometry(k, s, p)
        lout = (l_cur - 1) * s - 2 * p + k + op
        assert lout == s * l_cur, "lane-shift decoder path needs L_out == stride * L_in"
        shifts = [j + geo['d0'] for j in range(geo['n_taps'])]
        d = dict(ci=ci, co=co, stride=s, lin=l_cur, lout=lout, lq=l_cur,
                 n=batch * l_cur, jtaps=geo['n_taps'], shifts=shifts, geo=geo,
                 w_off=alloc(s * co, geo['n_taps'] * ci + 1),
                 w_rows=s * co, w_cols=geo['n_taps'] * ci + 1,
                 mask_off=alloc_const(_tap_masks(l_cur, shifts, batch)))
        if li < len(dec_cfg) - 1:
            d['f_offs'] = [alloc_const(_interleave(l_cur, s, r, batch)) for r in range(s)]
            dec_mid.append(d)
        else:
            plan['dec5'] = d
        l_cur = lout
    plan['dec_mid'] = dec_mid

    plan['slab_rows'] = _round8(cursor[0])
    plan['const_blocks'] = const_blocks

    d5 = plan['dec5']
    assert plan['latent'] <= d5['stride'] * d5['co'] and batch <= d5['n']
    plan['out_rows'] = d5['stride'] * d5['co']          # phased rows (phase, channel) = 64
    plan['phase_cols'] = d5['n']                        # B * Lq of the last block   = 64
    plan['out_cols'] = 2 * d5['n']                      # lane-dense packed width    = 128
    return plan


# ----------------------------------------------------------------------------
# Parameter folding and packed constant slab construction (done once, reused).
# ----------------------------------------------------------------------------
def fold_bn(bias, gamma, beta, mean, var):
    scale = gamma / jnp.sqrt(var + BN_EPS)
    shift = (bias - mean) * scale + beta
    return scale, shift


def _phase_decompose_weights(w_conv, geo, stride):
    """w_conv: (Co, Ci, K) equivalent-conv weight (BN scale folded) -> (J, stride*Co, Ci)."""
    co, ci, _ = w_conv.shape
    zero = jnp.zeros((co, ci), jnp.float32)
    taps = []
    for j in range(geo['n_taps']):
        rows = []
        for r in range(stride):
            jj = j + geo['d0'] - geo['dr'][r]
            if 0 <= jj < geo['ntap'][r]:
                rows.append(w_conv[:, :, geo['k0'][r] + stride * jj])
            else:
                rows.append(zero)
        taps.append(jnp.concatenate(rows, axis=0))
    return jnp.stack(taps, axis=0)


def build_const_slab(params, plan, enc_cfg, dec_cfg):
    """Pack every weight / BN shift / glue constant into one (rows, 256) f32 slab."""
    base = np.zeros((plan['slab_rows'], plan['slab_width']), np.float32)
    for off, arr in plan['const_blocks']:
        base[off:off + arr.shape[0], :arr.shape[1]] = arr
    slab = jnp.asarray(base)

    def put(off, arr):
        nonlocal slab
        arr = jnp.asarray(arr, jnp.float32)
        assert arr.shape[1] <= plan['slab_width']
        slab = slab.at[off:off + arr.shape[0], :arr.shape[1]].set(arr)

    # encoder block 1: im2col weight (BN scale folded) + bias column
    pe = plan['enc1']
    prm = params['enc'][0]
    scale, shift = fold_bn(prm['b'], prm['gamma'], prm['beta'], prm['mean'], prm['var'])
    w1 = (prm['w'] * scale[:, None, None]).reshape(pe['co'], pe['kc'])
    put(pe['w_off'], jnp.concatenate([w1, shift[:, None]], axis=1))

    # encoder blocks 2..5: W_cat with columns ordered (tap, ci) + bias column
    for pe, prm, cfg in zip(plan['enc_rest'], params['enc'][1:], enc_cfg[1:]):
        ci, co, k, s, p = cfg
        scale, shift = fold_bn(prm['b'], prm['gamma'], prm['beta'], prm['mean'], prm['var'])
        wcat = jnp.transpose(prm['w'] * scale[:, None, None], (0, 2, 1)).reshape(co, k * ci)
        put(pe['w_off'], jnp.concatenate([wcat, shift[:, None]], axis=1))

    # bottleneck linears
    for name, pln in (('enc_lin', plan['lin1']), ('dec_lin', plan['lin2'])):
        prm = params[name]
        scale, shift = fold_bn(prm['b'], prm['gamma'], prm['beta'], prm['mean'], prm['var'])
        put(pln['w_off'], jnp.concatenate([prm['w'] * scale[:, None], shift[:, None]], axis=1))

    # decoder block 1: direct expansion, rows = (output position, channel)
    pd = plan['dec1']
    prm = params['dec'][0]
    ci, co, k, s, p, op = dec_cfg[0]
    scale, shift = fold_bn(prm['b'], prm['gamma'], prm['beta'], prm['mean'], prm['var'])
    pieces = []
    for m in range(pd['lout']):
        t = m + p
        if 0 <= t < k:
            pieces.append(prm['w'][:, :, t].T * scale[:, None])      # (co, ci)
        else:
            pieces.append(jnp.zeros((co, ci), jnp.float32))          # only bias reaches here
    wexp = jnp.concatenate(pieces, axis=0)
    put(pd['w_off'], jnp.concatenate([wexp, jnp.tile(shift, pd['lout'])[:, None]], axis=1))

    # decoder blocks 2..5: phase-decomposed weights, taps packed along columns
    for pd, prm, cfg in zip(plan['dec_mid'] + [plan['dec5']], params['dec'][1:], dec_cfg[1:]):
        ci, co, k, s, p, op = cfg
        scale, shift = fold_bn(prm['b'], prm['gamma'], prm['beta'], prm['mean'], prm['var'])
        # PyTorch ConvTranspose1d weight (Ci, Co, K) -> equivalent conv weight (Co, Ci, K)
        w_conv = jnp.flip(jnp.transpose(prm['w'], (1, 0, 2)), axis=-1) * scale[:, None, None]
        wz = _phase_decompose_weights(w_conv, pd['geo'], s)          # (J, s*Co, Ci)
        wcat = jnp.transpose(wz, (1, 0, 2)).reshape(s * co, pd['jtaps'] * ci)
        put(pd['w_off'], jnp.concatenate([wcat, jnp.tile(shift, s)[:, None]], axis=1))

    return slab


# ----------------------------------------------------------------------------
# The single fused Pallas kernel: whole WDCNN_AE forward, everything in VMEM.
# ----------------------------------------------------------------------------
def _shift_cols(x, s):
    """A[:, c] = x[:, c + s] (zeros where out of range).  Lowers to lane shifts."""
    if s == 0:
        return x
    rows, n = x.shape
    pad = jnp.zeros((rows, abs(s)), jnp.float32)
    if s > 0:
        return jnp.concatenate([x[:, s:], pad], axis=1)
    return jnp.concatenate([pad, x[:, :n + s]], axis=1)


def _make_kernel(plan):
    enc1, enc_rest = plan['enc1'], plan['enc_rest']
    lin1, lin2 = plan['lin1'], plan['lin2']
    dec1, dec_mid, dec5 = plan['dec1'], plan['dec_mid'], plan['dec5']
    latent_dim = plan['latent']

    def kernel(xcols_ref, const_ref, out_ref):
        def blk(off, rows, cols):
            return const_ref[off:off + rows, 0:cols]       # static slice of the slab

        def mm(a, b):
            return jnp.dot(a, b, preferred_element_type=jnp.float32)

        def ones_row(n):
            return jnp.ones((1, n), jnp.float32)

        def tap_matmul(act, p):
            """All taps + bias stacked along K -> ONE MXU matmul per block."""
            w = blk(p['w_off'], p['w_rows'], p['w_cols'])
            parts = []
            for t, s in enumerate(p['shifts']):
                a = _shift_cols(act, s)
                if s != 0:                                  # zero cross-batch / OOB reads
                    a = a * blk(p['mask_off'] + t, 1, p['n'])
                parts.append(a)
            parts.append(ones_row(p['n']))                  # drives the folded BN/bias column
            return mm(w, jnp.concatenate(parts, axis=0))

        def maxpool2(z, p):
            # The eval-mode BN shift is per-channel and already inside z, so pooling
            # before ReLU is exact (max and ReLU are monotonic).
            pooled = jnp.maximum(z, _shift_cols(z, 1))
            return jnp.maximum(mm(pooled, blk(p['e_off'], p['n'], p['e_cols'])), 0.0)

        # ---------------- encoder ----------------
        w1 = blk(enc1['w_off'], enc1['w_rows'], enc1['w_cols'])
        z = mm(w1, jnp.concatenate([xcols_ref[...], ones_row(enc1['n'])], axis=0))
        act = maxpool2(z, enc1)
        for p in enc_rest:
            act = maxpool2(tap_matmul(act, p), p)

        # ---------------- bottleneck linears ----------------
        w = blk(lin1['w_off'], lin1['rows'], lin1['cols'])
        latent = jnp.maximum(mm(w, jnp.concatenate([act, ones_row(act.shape[1])], axis=0)), 0.0)
        w = blk(lin2['w_off'], lin2['rows'], lin2['cols'])
        act = jnp.maximum(mm(w, jnp.concatenate([latent, ones_row(latent.shape[1])], axis=0)), 0.0)

        # ---------------- decoder ----------------
        # block 1 (input length 1): one matmul + tiny position-scatter matmuls
        w = blk(dec1['w_off'], dec1['rows'], dec1['cols'])
        z = jnp.maximum(mm(w, jnp.concatenate([act, ones_row(act.shape[1])], axis=0)), 0.0)
        co = dec1['co']
        act = None
        for m, f_off in enumerate(dec1['f_offs']):
            f = blk(f_off, dec1['b'], dec1['b'] * dec1['lout'])
            part = mm(z[m * co:(m + 1) * co, :], f)
            act = part if act is None else act + part

        # blocks 2..4: phase-decomposed transposed conv (one matmul) + phase interleave
        for p in dec_mid:
            z = jnp.maximum(tap_matmul(act, p), 0.0)        # rows = (phase, channel)
            co = p['co']
            act = None
            for r, f_off in enumerate(p['f_offs']):
                f = blk(f_off, p['n'], p['stride'] * p['n'])
                part = mm(z[r * co:(r + 1) * co, :], f)
                act = part if act is None else act + part

        # block 5: emit phase-major; the wrapper interleaves the 32 phases.
        phased = jnp.maximum(tap_matmul(act, dec5), 0.0)     # (s*Co, B*Lq)

        # ---------------- lane-dense packed output (64, 128) ----------------
        lat = jnp.concatenate(
            [latent, jnp.zeros((latent_dim, dec5['n'] - latent.shape[1]), jnp.float32)], axis=1)
        lat = jnp.concatenate(
            [lat, jnp.zeros((phased.shape[0] - latent_dim, dec5['n']), jnp.float32)], axis=0)
        out_ref[...] = jnp.concatenate([phased, lat], axis=1)

    return kernel


# ----------------------------------------------------------------------------
# Wrapper: im2col of the first layer, fused pallas_call, output unpacking.
# ----------------------------------------------------------------------------
def wdcnn_ae_forward(x, const_slab, plan):
    batch, in_ch = plan['batch'], plan['in_ch']
    e1 = plan['enc1']
    x3 = x.reshape(batch, in_ch, -1).astype(jnp.float32)

    # first layer im2col (wrapper-side gather; XLA fuses it into a single op)
    k, s, p, l1 = e1['k'], e1['stride'], e1['pad'], e1['lout']
    xp = jnp.pad(x3, ((0, 0), (0, 0), (p, p)))
    idx = np.arange(l1)[None, :] * s + np.arange(k)[:, None]
    cols = xp[:, :, idx]                                              # (B, ci, k, l1)
    xcols = jnp.transpose(cols, (1, 2, 0, 3)).reshape(e1['kc'], batch * l1)

    vmem = pl.BlockSpec(memory_space=pltpu.MemorySpace.VMEM)
    out_slab = pl.pallas_call(
        _make_kernel(plan),
        out_shape=jax.ShapeDtypeStruct((plan['out_rows'], plan['out_cols']), jnp.float32),
        in_specs=[vmem, vmem],
        out_specs=vmem,
        compiler_params=pltpu.CompilerParams(vmem_limit_bytes=32 * 1024 * 1024),
    )(xcols, const_slab)

    d5 = plan['dec5']
    s5, co5, lq5 = d5['stride'], d5['co'], d5['lq']
    nphase = plan['phase_cols']
    phased = out_slab[:, :nphase]
    latent = out_slab[:plan['latent'], nphase:nphase + batch]
    out = (phased.reshape(s5, co5, batch, lq5)
                 .transpose(2, 1, 3, 0)
                 .reshape(batch, co5, lq5 * s5))
    return out.reshape(batch, in_ch, -1), latent.T


# ----------------------------------------------------------------------------
# Deterministic parameter init (synthetic; shapes follow the nn.Module __init__)
# ----------------------------------------------------------------------------
def init_params(key, enc_cfg, dec_cfg, lin_input, latent):
    keys = iter(jax.random.split(key, 128))

    def nrm(shape, sc):
        return sc * jax.random.normal(next(keys), shape, jnp.float32)

    def bn(c):
        return dict(gamma=1.0 + nrm((c,), 0.05), beta=nrm((c,), 0.05),
                    mean=nrm((c,), 0.05), var=1.0 + jnp.abs(nrm((c,), 0.05)))

    enc = []
    for (ci, co, k, s, p) in enc_cfg:
        d = dict(w=nrm((co, ci, k), 0.5 / (ci * k) ** 0.5), b=nrm((co,), 0.05))
        d.update(bn(co))
        enc.append(d)
    dec = []
    for (ci, co, k, s, p, op) in dec_cfg:
        # PyTorch ConvTranspose1d weight layout: (C_in, C_out, K)
        d = dict(w=nrm((ci, co, k), 0.5 / (ci * k) ** 0.5), b=nrm((co,), 0.05))
        d.update(bn(co))
        dec.append(d)
    enc_lin = dict(w=nrm((latent, lin_input), 0.5 / lin_input ** 0.5),
                   b=nrm((latent,), 0.05), **bn(latent))
    dec_lin = dict(w=nrm((lin_input, latent), 0.5 / latent ** 0.5),
                   b=nrm((lin_input,), 0.05), **bn(lin_input))
    return dict(enc=enc, dec=dec, enc_lin=enc_lin, dec_lin=dec_lin)


# ----------------------------------------------------------------------------
# Pure-JAX reference (lax convs, eval-mode BN) for the correctness cross-check
# ----------------------------------------------------------------------------
def _ref_bn(y, p):
    return ((y - p["mean"][None, :, None]) /
            jnp.sqrt(p["var"][None, :, None] + BN_EPS) *
            p["gamma"][None, :, None] + p["beta"][None, :, None])


def _ref_linear(x, p):
    z = x @ p["w"].T + p["b"]
    z = (z - p["mean"]) / jnp.sqrt(p["var"] + BN_EPS) * p["gamma"] + p["beta"]
    return jnp.maximum(z, 0.0)


def ref_forward(x, params, enc_cfg, dec_cfg, in_ch):
    B = x.shape[0]
    out = x.reshape(B, in_ch, -1)
    for p, (ci, co, k, s, pd) in zip(params["enc"], enc_cfg):
        y = jax.lax.conv_general_dilated(out, p["w"], (s,), [(pd, pd)],
                                         dimension_numbers=("NCH", "OIH", "NCH"))
        y = jnp.maximum(_ref_bn(y + p["b"][None, :, None], p), 0.0)
        L = y.shape[-1]
        out = jnp.max(y[:, :, :(L // 2) * 2].reshape(B, co, L // 2, 2), axis=-1)
    out = out.reshape(B, -1)
    lat = _ref_linear(out, params["enc_lin"])
    out = _ref_linear(lat, params["dec_lin"])
    out = out.reshape(B, 64, -1)
    for p, (ci, co, k, s, pd, op) in zip(params["dec"], dec_cfg):
        w = jnp.flip(jnp.transpose(p["w"], (1, 0, 2)), axis=-1)
        y = jax.lax.conv_general_dilated(out, w, (1,),
                                         [(k - 1 - pd, k - 1 - pd + op)],
                                         lhs_dilation=(s,),
                                         dimension_numbers=("NCH", "OIH", "NCH"))
        out = jnp.maximum(_ref_bn(y + p["b"][None, :, None], p), 0.0)
    return out.reshape(B, in_ch, -1), lat


# ----------------------------------------------------------------------------
if __name__ == "__main__":
    # Small but geometry-consistent configuration (decoder maps back to input_size)
    BATCH = 2
    IN_CH = 2
    INPUT_SIZE = 1024
    FIRST_KERNEL = 64
    LATENT = 16

    ENC_CFG = (  # (in, out, kernel, stride, pad)
        (IN_CH, 16, FIRST_KERNEL, 16, 24),
        (16, 32, 3, 1, 1),
        (32, 64, 3, 1, 1),
        (64, 64, 3, 1, 1),
        (64, 64, 3, 1, 0),
    )
    DEC_CFG = (  # (in, out, kernel, stride, pad, output_pad)
        (64, 64, 3, 2, 0, 1),
        (64, 64, 3, 2, 1, 1),
        (64, 32, 3, 2, 1, 1),
        (32, 16, 3, 2, 1, 1),
        (16, IN_CH, 64, 32, 24, 16),
    )

    # get_linear_input_size(): encoder shape math (conv + maxpool(2))
    L = INPUT_SIZE
    for (_, _, k, s, p) in ENC_CFG:
        L = ((L + 2 * p - k) // s + 1) // 2
    LIN_INPUT = 64 * L

    key = jax.random.PRNGKey(0)
    kp, kx = jax.random.split(key)
    params = init_params(kp, ENC_CFG, DEC_CFG, LIN_INPUT, LATENT)
    x = jax.random.normal(kx, (BATCH, IN_CH, INPUT_SIZE), jnp.float32)

    plan = make_plan(ENC_CFG, DEC_CFG, LATENT, BATCH, IN_CH, INPUT_SIZE)
    assert plan['lin_input'] == LIN_INPUT

    # Constants are built once and reused across forward calls.
    const_slab = jax.block_until_ready(build_const_slab(params, plan, ENC_CFG, DEC_CFG))

    fwd = jax.jit(lambda xx, cc: wdcnn_ae_forward(xx, cc, plan))
    out, latent = fwd(x, const_slab)
    out = jax.block_until_ready(out)
    latent = jax.block_until_ready(latent)

    assert out.shape == (BATCH, IN_CH, INPUT_SIZE), out.shape
    assert latent.shape == (BATCH, LATENT), latent.shape

    # cross-check against a pure-JAX (lax conv) reference; f32 end-to-end so the
    # tolerance can be tight enough to catch tap/phase/pad indexing bugs.
    ref_out, ref_lat = ref_forward(x, params, ENC_CFG, DEC_CFG, IN_CH)
    err_out = float(jnp.max(jnp.abs(out - ref_out)))
    err_lat = float(jnp.max(jnp.abs(latent - ref_lat)))
    assert err_out < 1e-3, err_out
    assert err_lat < 1e-3, err_lat
    assert bool(jnp.all(jnp.isfinite(out))) and bool(jnp.all(jnp.isfinite(latent)))

    print("KERNEL_OK")
</pallas_src>

<mosaic_0001>
module attributes {stable_mosaic.version = 11 : i64} {
  func.func @kernel(%arg0: memref<128x128xf32, #tpu.memory_space<vmem>>, %arg1: memref<1320x256xf32, #tpu.memory_space<vmem>>, %arg2: memref<64x128xf32, #tpu.memory_space<vmem>>) attributes {dimension_semantics = [], scalar_prefetch = 0 : i64, scratch_operands = 0 : i64, tpu.core_type = #tpu.core_type<tc>} {
    %c0 = arith.constant 0 : index
    %c0_0 = arith.constant 0 : index
    %0 = vector.load %arg1[%c0, %c0_0] : memref<1320x256xf32, #tpu.memory_space<vmem>>, vector<16x129xf32>
    %c0_1 = arith.constant 0 : index
    %c0_2 = arith.constant 0 : index
    %1 = vector.load %arg0[%c0_1, %c0_2] : memref<128x128xf32, #tpu.memory_space<vmem>>, vector<128x128xf32>
    %cst = arith.constant 1.000000e+00 : f32
    %2 = vector.broadcast %cst : f32 to vector<1x128xf32>
    %3 = tpu.concatenate %1, %2 in 0 : vector<128x128xf32>, vector<1x128xf32> -> vector<129x128xf32>
    %cst_3 = arith.constant dense<0.000000e+00> : vector<16x128xf32>
    %4 = tpu.matmul %0, %3, %cst_3 {dimension_numbers = #tpu.dot_dimension_numbers<[1], [0], [0], [1], [0, 0, 1, 1], [], []>} : vector<16x129xf32>, vector<129x128xf32>, vector<16x128xf32> -> vector<16x128xf32>
    %cst_4 = arith.constant 0.000000e+00 : f32
    %5 = vector.broadcast %cst_4 : f32 to vector<16x1xf32>
    %6 = vector.extract_strided_slice %4 {offsets = [0, 1], sizes = [16, 127], strides = [1, 1]} : vector<16x128xf32> to vector<16x127xf32>
    %7 = tpu.concatenate %6, %5 in 1 : vector<16x127xf32>, vector<16x1xf32> -> vector<16x128xf32>
    %8 = arith.maximumf %4, %7 : vector<16x128xf32>
    %c16 = arith.constant 16 : index
    %c0_5 = arith.constant 0 : index
    %9 = vector.load %arg1[%c16, %c0_5] : memref<1320x256xf32, #tpu.memory_space<vmem>>, vector<128x64xf32>
    %cst_6 = arith.constant dense<0.000000e+00> : vector<16x64xf32>
    %10 = tpu.matmul %8, %9, %cst_6 {dimension_numbers = #tpu.dot_dimension_numbers<[1], [0], [0], [1], [0, 0, 1, 1], [], []>} : vector<16x128xf32>, vector<128x64xf32>, vector<16x64xf32> -> vector<16x64xf32>
    %cst_7 = arith.constant 0.000000e+00 : f32
    %11 = vector.broadcast %cst_7 : f32 to vector<16x64xf32>
    %12 = arith.maximumf %10, %11 : vector<16x64xf32>
    %c144 = arith.constant 144 : index
    %c0_8 = arith.constant 0 : index
    %13 = vector.load %arg1[%c144, %c0_8] : memref<1320x256xf32, #tpu.memory_space<vmem>>, vector<32x49xf32>
    %cst_9 = arith.constant 0.000000e+00 : f32
    %14 = vector.broadcast %cst_9 : f32 to vector<16x1xf32>
    %15 = vector.extract_strided_slice %12 {offsets = [0, 0], sizes = [16, 63], strides = [1, 1]} : vector<16x64xf32> to vector<16x63xf32>
    %16 = tpu.concatenate %14, %15 in 1 : vector<16x1xf32>, vector<16x63xf32> -> vector<16x64xf32>
    %c176 = arith.constant 176 : index
    %c0_10 = arith.constant 0 : index
    %17 = vector.load %arg1[%c176, %c0_10] : memref<1320x256xf32, #tpu.memory_space<vmem>>, vector<1x64xf32>
    %18 = vector.broadcast %17 : vector<1x64xf32> to vector<16x64xf32>
    %19 = arith.mulf %16, %18 : vector<16x64xf32>
    %cst_11 = arith.constant 0.000000e+00 : f32
    %20 = vector.broadcast %cst_11 : f32 to vector<16x1xf32>
    %21 = vector.extract_strided_slice %12 {offsets = [0, 1], sizes = [16, 63], strides = [1, 1]} : vector<16x64xf32> to vector<16x63xf32>
    %22 = tpu.concatenate %21, %20 in 1 : vector<16x63xf32>, vector<16x1xf32> -> vector<16x64xf32>
    %c178 = arith.constant 178 : index
    %c0_12 = arith.constant 0 : index
    %23 = vector.load %arg1[%c178, %c0_12] : memref<1320x256xf32, #tpu.memory_space<vmem>>, vector<1x64xf32>
    %24 = vector.broadcast %23 : vector<1x64xf32> to vector<16x64xf32>
    %25 = arith.mulf %22, %24 : vector<16x64xf32>
    %cst_13 = arith.constant 1.000000e+00 : f32
    %26 = vector.broadcast %cst_13 : f32 to vector<1x64xf32>
    %27 = tpu.concatenate %19, %12, %25, %26 in 0 : vector<16x64xf32>, vector<16x64xf32>, vector<16x64xf32>, vector<1x64xf32> -> vector<49x64xf32>
    %cst_14 = arith.constant dense<0.000000e+00> : vector<32x64xf32>
    %28 = tpu.matmul %13, %27, %cst_14 {dimension_numbers = #tpu.dot_dimension_numbers<[1], [0], [0], [1], [0, 0, 1, 1], [], []>} : vector<32x49xf32>, vector<49x64xf32>, vector<32x64xf32> -> vector<32x64xf32>
    %cst_15 = arith.constant 0.000000e+00 : f32
    %29 = vector.broadcast %cst_15 : f32 to vector<32x1xf32>
    %30 = vector.extract_strided_slice %28 {offsets = [0, 1], sizes = [32, 63], strides = [1, 1]} : vector<32x64xf32> to vector<32x63xf32>
    %31 = tpu.concatenate %30, %29 in 1 : vector<32x63xf32>, vector<32x1xf32> -> vector<32x64xf32>
    %32 = arith.maximumf %28, %31 : vector<32x64xf32>
    %c184 = arith.constant 184 : index
    %c0_16 = arith.constant 0 : index
    %33 = vector.load %arg1[%c184, %c0_16] : memref<1320x256xf32, #tpu.memory_space<vmem>>, vector<64x32xf32>
    %cst_17 = arith.constant dense<0.000000e+00> : vector<32x32xf32>
    %34 = tpu.matmul %32, %33, %cst_17 {dimension_numbers = #tpu.dot_dimension_numbers<[1], [0], [0], [1], [0, 0, 1, 1], [], []>} : vector<32x64xf32>, vector<64x32xf32>, vector<32x32xf32> -> vector<32x32xf32>
    %cst_18 = arith.constant 0.000000e+00 : f32
    %35 = vector.broadcast %cst_18 : f32 to vector<32x32xf32>
    %36 = arith.maximumf %34, %35 : vector<32x32xf32>
    %c248 = arith.constant 248 : index
    %c0_19 = arith.constant 0 : index
    %37 = vector.load %arg1[%c248, %c0_19] : memref<1320x256xf32, #tpu.memory_space<vmem>>, vector<64x97xf32>
    %cst_20 = arith.constant 0.000000e+00 : f32
    %38 = vector.broadcast %cst_20 : f32 to vector<32x1xf32>
    %39 = vector.extract_strided_slice %36 {offsets = [0, 0], sizes = [32, 31], strides = [1, 1]} : vector<32x32xf32> to vector<32x31xf32>
    %40 = tpu.concatenate %38, %39 in 1 : vector<32x1xf32>, vector<32x31xf32> -> vector<32x32xf32>
    %c312 = arith.constant 312 : index
    %c0_21 = arith.constant 0 : index
    %41 = vector.load %arg1[%c312, %c0_21] : memref<1320x256xf32, #tpu.memory_space<vmem>>, vector<1x32xf32>
    %42 = vector.broadcast %41 : vector<1x32xf32> to vector<32x32xf32>
    %43 = arith.mulf %40, %42 : vector<32x32xf32>
    %cst_22 = arith.constant 0.000000e+00 : f32
    %44 = vector.broadcast %cst_22 : f32 to vector<32x1xf32>
    %45 = vector.extract_strided_slice %36 {offsets = [0, 1], sizes = [32, 31], strides = [1, 1]} : vector<32x32xf32> to vector<32x31xf32>
    %46 = tpu.concatenate %45, %44 in 1 : vector<32x31xf32>, vector<32x1xf32> -> vector<32x32xf32>
    %c314 = arith.constant 314 : index
    %c0_23 = arith.constant 0 : index
    %47 = vector.load %arg1[%c314, %c0_23] : memref<1320x256xf32, #tpu.memory_space<vmem>>, vector<1x32xf32>
    %48 = vector.broadcast %47 : vector<1x32xf32> to vector<32x32xf32>
    %49 = arith.mulf %46, %48 : vector<32x32xf32>
    %cst_24 = arith.constant 1.000000e+00 : f32
    %50 = vector.broadcast %cst_24 : f32 to vector<1x32xf32>
    %51 = tpu.concatenate %43, %36, %49, %50 in 0 : vector<32x32xf32>, vector<32x32xf32>, vector<32x32xf32>, vector<1x32xf32> -> vector<97x32xf32>
    %cst_25 = arith.constant dense<0.000000e+00> : vector<64x32xf32>
    %52 = tpu.matmul %37, %51, %cst_25 {dimension_numbers = #tpu.dot_dimension_numbers<[1], [0], [0], [1], [0, 0, 1, 1], [], []>} : vector<64x97xf32>, vector<97x32xf32>, vector<64x32xf32> -> vector<64x32xf32>
    %cst_26 = arith.constant 0.000000e+00 : f32
    %53 = vector.broadcast %cst_26 : f32 to vector<64x1xf32>
    %54 = vector.extract_strided_slice %52 {offsets = [0, 1], sizes = [64, 31], strides = [1, 1]} : vector<64x32xf32> to vector<64x31xf32>
    %55 = tpu.concatenate %54, %53 in 1 : vector<64x31xf32>, vector<64x1xf32> -> vector<64x32xf32>
    %56 = arith.maximumf %52, %55 : vector<64x32xf32>
    %c320 = arith.constant 320 : index
    %c0_27 = arith.constant 0 : index
    %57 = vector.load %arg1[%c320, %c0_27] : memref<1320x256xf32, #tpu.memory_space<vmem>>, vector<32x16xf32>
    %cst_28 = arith.constant dense<0.000000e+00> : vector<64x16xf32>
    %58 = tpu.matmul %56, %57, %cst_28 {dimension_numbers = #tpu.dot_dimension_numbers<[1], [0], [0], [1], [0, 0, 1, 1], [], []>} : vector<64x32xf32>, vector<32x16xf32>, vector<64x16xf32> -> vector<64x16xf32>
    %cst_29 = arith.constant 0.000000e+00 : f32
    %59 = vector.broadcast %cst_29 : f32 to vector<64x16xf32>
    %60 = arith.maximumf %58, %59 : vector<64x16xf32>
    %c352 = arith.constant 352 : index
    %c0_30 = arith.constant 0 : index
    %61 = vector.load %arg1[%c352, %c0_30] : memref<1320x256xf32, #tpu.memory_space<vmem>>, vector<64x193xf32>
    %cst_31 = arith.constant 0.000000e+00 : f32
    %62 = vector.broadcast %cst_31 : f32 to vector<64x1xf32>
    %63 = vector.extract_strided_slice %60 {offsets = [0, 0], sizes = [64, 15], strides = [1, 1]} : vector<64x16xf32> to vector<64x15xf32>
    %64 = tpu.concatenate %62, %63 in 1 : vector<64x1xf32>, vector<64x15xf32> -> vector<64x16xf32>
    %c416 = arith.constant 416 : index
    %c0_32 = arith.constant 0 : index
    %65 = vector.load %arg1[%c416, %c0_32] : memref<1320x256xf32, #tpu.memory_space<vmem>>, vector<1x16xf32>
    %66 = vector.broadcast %65 : vector<1x16xf32> to vector<64x16xf32>
    %67 = arith.mulf %64, %66 : vector<64x16xf32>
    %cst_33 = arith.constant 0.000000e+00 : f32
    %68 = vector.broadcast %cst_33 : f32 to vector<64x1xf32>
    %69 = vector.extract_strided_slice %60 {offsets = [0, 1], sizes = [64, 15], strides = [1, 1]} : vector<64x16xf32> to vector<64x15xf32>
    %70 = tpu.concatenate %69, %68 in 1 : vector<64x15xf32>, vector<64x1xf32> -> vector<64x16xf32>
    %c418 = arith.constant 418 : index
    %c0_34 = arith.constant 0 : index
    %71 = vector.load %arg1[%c418, %c0_34] : memref<1320x256xf32, #tpu.memory_space<vmem>>, vector<1x16xf32>
    %72 = vector.broadcast %71 : vector<1x16xf32> to vector<64x16xf32>
    %73 = arith.mulf %70, %72 : vector<64x16xf32>
    %cst_35 = arith.constant 1.000000e+00 : f32
    %74 = vector.broadcast %cst_35 : f32 to vector<1x16xf32>
    %75 = tpu.concatenate %67, %60, %73, %74 in 0 : vector<64x16xf32>, vector<64x16xf32>, vector<64x16xf32>, vector<1x16xf32> -> vector<193x16xf32>
    %cst_36 = arith.constant dense<0.000000e+00> : vector<64x16xf32>
    %76 = tpu.matmul %61, %75, %cst_36 {dimension_numbers = #tpu.dot_dimension_numbers<[1], [0], [0], [1], [0, 0, 1, 1], [], []>} : vector<64x193xf32>, vector<193x16xf32>, vector<64x16xf32> -> vector<64x16xf32>
    %cst_37 = arith.constant 0.000000e+00 : f32
    %77 = vector.broadcast %cst_37 : f32 to vector<64x1xf32>
    %78 = vector.extract_strided_slice %76 {offsets = [0, 1], sizes = [64, 15], strides = [1, 1]} : vector<64x16xf32> to vector<64x15xf32>
    %79 = tpu.concatenate %78, %77 in 1 : vector<64x15xf32>, vector<64x1xf32> -> vector<64x16xf32>
    %80 = arith.maximumf %76, %79 : vector<64x16xf32>
    %c424 = arith.constant 424 : index
    %c0_38 = arith.constant 0 : index
    %81 = vector.load %arg1[%c424, %c0_38] : memref<1320x256xf32, #tpu.memory_space<vmem>>, vector<16x8xf32>
    %cst_39 = arith.constant dense<0.000000e+00> : vector<64x8xf32>
    %82 = tpu.matmul %80, %81, %cst_39 {dimension_numbers = #tpu.dot_dimension_numbers<[1], [0], [0], [1], [0, 0, 1, 1], [], []>} : vector<64x16xf32>, vector<16x8xf32>, vector<64x8xf32> -> vector<64x8xf32>
    %cst_40 = arith.constant 0.000000e+00 : f32
    %83 = vector.broadcast %cst_40 : f32 to vector<64x8xf32>
    %84 = arith.maximumf %82, %83 : vector<64x8xf32>
    %c440 = arith.constant 440 : index
    %c0_41 = arith.constant 0 : index
    %85 = vector.load %arg1[%c440, %c0_41] : memref<1320x256xf32, #tpu.memory_space<vmem>>, vector<64x193xf32>
    %cst_42 = arith.constant 0.000000e+00 : f32
    %86 = vector.broadcast %cst_42 : f32 to vector<64x1xf32>
    %87 = vector.extract_strided_slice %84 {offsets = [0, 1], sizes = [64, 7], strides = [1, 1]} : vector<64x8xf32> to vector<64x7xf32>
    %88 = tpu.concatenate %87, %86 in 1 : vector<64x7xf32>, vector<64x1xf32> -> vector<64x8xf32>
    %c505 = arith.constant 505 : index
    %c0_43 = arith.constant 0 : index
    %89 = vector.load %arg1[%c505, %c0_43] : memref<1320x256xf32, #tpu.memory_space<vmem>>, vector<1x8xf32>
    %90 = vector.broadcast %89 : vector<1x8xf32> to vector<64x8xf32>
    %91 = arith.mulf %88, %90 : vector<64x8xf32>
    %cst_44 = arith.constant 0.000000e+00 : f32
    %92 = vector.broadcast %cst_44 : f32 to vector<64x2xf32>
    %93 = vector.extract_strided_slice %84 {offsets = [0, 2], sizes = [64, 6], strides = [1, 1]} : vector<64x8xf32> to vector<64x6xf32>
    %94 = tpu.concatenate %93, %92 in 1 : vector<64x6xf32>, vector<64x2xf32> -> vector<64x8xf32>
    %c506 = arith.constant 506 : index
    %c0_45 = arith.constant 0 : index
    %95 = vector.load %arg1[%c506, %c0_45] : memref<1320x256xf32, #tpu.memory_space<vmem>>, vector<1x8xf32>
    %96 = vector.broadcast %95 : vector<1x8xf32> to vector<64x8xf32>
    %97 = arith.mulf %94, %96 : vector<64x8xf32>
    %cst_46 = arith.constant 1.000000e+00 : f32
    %98 = vector.broadcast %cst_46 : f32 to vector<1x8xf32>
    %99 = tpu.concatenate %84, %91, %97, %98 in 0 : vector<64x8xf32>, vector<64x8xf32>, vector<64x8xf32>, vector<1x8xf32> -> vector<193x8xf32>
    %cst_47 = arith.constant dense<0.000000e+00> : vector<64x8xf32>
    %100 = tpu.matmul %85, %99, %cst_47 {dimension_numbers = #tpu.dot_dimension_numbers<[1], [0], [0], [1], [0, 0, 1, 1], [], []>} : vector<64x193xf32>, vector<193x8xf32>, vector<64x8xf32> -> vector<64x8xf32>
    %cst_48 = arith.constant 0.000000e+00 : f32
    %101 = vector.broadcast %cst_48 : f32 to vector<64x1xf32>
    %102 = vector.extract_strided_slice %100 {offsets = [0, 1], sizes = [64, 7], strides = [1, 1]} : vector<64x8xf32> to vector<64x7xf32>
    %103 = tpu.concatenate %102, %101 in 1 : vector<64x7xf32>, vector<64x1xf32> -> vector<64x8xf32>
    %104 = arith.maximumf %100, %103 : vector<64x8xf32>
    %c512 = arith.constant 512 : index
    %c0_49 = arith.constant 0 : index
    %105 = vector.load %arg1[%c512, %c0_49] : memref<1320x256xf32, #tpu.memory_space<vmem>>, vector<8x2xf32>
    %cst_50 = arith.constant dense<0.000000e+00> : vector<64x2xf32>
    %106 = tpu.matmul %104, %105, %cst_50 {dimension_numbers = #tpu.dot_dimension_numbers<[1], [0], [0], [1], [0, 0, 1, 1], [], []>} : vector<64x8xf32>, vector<8x2xf32>, vector<64x2xf32> -> vector<64x2xf32>
    %cst_51 = arith.constant 0.000000e+00 : f32
    %107 = vector.broadcast %cst_51 : f32 to vector<64x2xf32>
    %108 = arith.maximumf %106, %107 : vector<64x2xf32>
    %c520 = arith.constant 520 : index
    %c0_52 = arith.constant 0 : index
    %109 = vector.load %arg1[%c520, %c0_52] : memref<1320x256xf32, #tpu.memory_space<vmem>>, vector<16x65xf32>
    %cst_53 = arith.constant 1.000000e+00 : f32
    %110 = vector.broadcast %cst_53 : f32 to vector<1x2xf32>
    %111 = tpu.concatenate %108, %110 in 0 : vector<64x2xf32>, vector<1x2xf32> -> vector<65x2xf32>
    %cst_54 = arith.constant dense<0.000000e+00> : vector<16x2xf32>
    %112 = tpu.matmul %109, %111, %cst_54 {dimension_numbers = #tpu.dot_dimension_numbers<[1], [0], [0], [1], [0, 0, 1, 1], [], []>} : vector<16x65xf32>, vector<65x2xf32>, vector<16x2xf32> -> vector<16x2xf32>
    %cst_55 = arith.constant 0.000000e+00 : f32
    %113 = vector.broadcast %cst_55 : f32 to vector<16x2xf32>
    %114 = arith.maximumf %112, %113 : vector<16x2xf32>
    %c536 = arith.constant 536 : index
    %c0_56 = arith.constant 0 : index
    %115 = vector.load %arg1[%c536, %c0_56] : memref<1320x256xf32, #tpu.memory_space<vmem>>, vector<64x17xf32>
    %cst_57 = arith.constant 1.000000e+00 : f32
    %116 = vector.broadcast %cst_57 : f32 to vector<1x2xf32>
    %117 = tpu.concatenate %114, %116 in 0 : vector<16x2xf32>, vector<1x2xf32> -> vector<17x2xf32>
    %cst_58 = arith.constant dense<0.000000e+00> : vector<64x2xf32>
    %118 = tpu.matmul %115, %117, %cst_58 {dimension_numbers = #tpu.dot_dimension_numbers<[1], [0], [0], [1], [0, 0, 1, 1], [], []>} : vector<64x17xf32>, vector<17x2xf32>, vector<64x2xf32> -> vector<64x2xf32>
    %cst_59 = arith.constant 0.000000e+00 : f32
    %119 = vector.broadcast %cst_59 : f32 to vector<64x2xf32>
    %120 = arith.maximumf %118, %119 : vector<64x2xf32>
    %c600 = arith.constant 600 : index
    %c0_60 = arith.constant 0 : index
    %121 = vector.load %arg1[%c600, %c0_60] : memref<1320x256xf32, #tpu.memory_space<vmem>>, vector<256x65xf32>
    %cst_61 = arith.constant 1.000000e+00 : f32
    %122 = vector.broadcast %cst_61 : f32 to vector<1x2xf32>
    %123 = tpu.concatenate %120, %122 in 0 : vector<64x2xf32>, vector<1x2xf32> -> vector<65x2xf32>
    %cst_62 = arith.constant dense<0.000000e+00> : vector<256x2xf32>
    %124 = tpu.matmul %121, %123, %cst_62 {dimension_numbers = #tpu.dot_dimension_numbers<[1], [0], [0], [1], [0, 0, 1, 1], [], []>} : vector<256x65xf32>, vector<65x2xf32>, vector<256x2xf32> -> vector<256x2xf32>
    %cst_63 = arith.constant 0.000000e+00 : f32
    %125 = vector.broadcast %cst_63 : f32 to vector<256x2xf32>
    %126 = arith.maximumf %124, %125 : vector<256x2xf32>
    %c856 = arith.constant 856 : index
    %c0_64 = arith.constant 0 : index
    %127 = vector.load %arg1[%c856, %c0_64] : memref<1320x256xf32, #tpu.memory_space<vmem>>, vector<2x8xf32>
    %128 = vector.extract_strided_slice %126 {offsets = [0, 0], sizes = [64, 2], strides = [1, 1]} : vector<256x2xf32> to vector<64x2xf32>
    %cst_65 = arith.constant dense<0.000000e+00> : vector<64x8xf32>
    %129 = tpu.matmul %128, %127, %cst_65 {dimension_numbers = #tpu.dot_dimension_numbers<[1], [0], [0], [1], [0, 0, 1, 1], [], []>} : vector<64x2xf32>, vector<2x8xf32>, vector<64x8xf32> -> vector<64x8xf32>
    %c864 = arith.constant 864 : index
    %c0_66 = arith.constant 0 : index
    %130 = vector.load %arg1[%c864, %c0_66] : memref<1320x256xf32, #tpu.memory_space<vmem>>, vector<2x8xf32>
    %131 = vector.extract_strided_slice %126 {offsets = [64, 0], sizes = [64, 2], strides = [1, 1]} : vector<256x2xf32> to vector<64x2xf32>
    %cst_67 = arith.constant dense<0.000000e+00> : vector<64x8xf32>
    %132 = tpu.matmul %131, %130, %cst_67 {dimension_numbers = #tpu.dot_dimension_numbers<[1], [0], [0], [1], [0, 0, 1, 1], [], []>} : vector<64x2xf32>, vector<2x8xf32>, vector<64x8xf32> -> vector<64x8xf32>
    %133 = arith.addf %129, %132 : vector<64x8xf32>
    %c872 = arith.constant 872 : index
    %c0_68 = arith.constant 0 : index
    %134 = vector.load %arg1[%c872, %c0_68] : memref<1320x256xf32, #tpu.memory_space<vmem>>, vector<2x8xf32>
    %135 = vector.extract_strided_slice %126 {offsets = [128, 0], sizes = [64, 2], strides = [1, 1]} : vector<256x2xf32> to vector<64x2xf32>
    %cst_69 = arith.constant dense<0.000000e+00> : vector<64x8xf32>
    %136 = tpu.matmul %135, %134, %cst_69 {dimension_numbers = #tpu.dot_dimension_numbers<[1], [0], [0], [1], [0, 0, 1, 1], [], []>} : vector<64x2xf32>, vector<2x8xf32>, vector<64x8xf32> -> vector<64x8xf32>
    %137 = arith.addf %133, %136 : vector<64x8xf32>
    %c880 = arith.constant 880 : index
    %c0_70 = arith.constant 0 : index
    %138 = vector.load %arg1[%c880, %c0_70] : memref<1320x256xf32, #tpu.memory_space<vmem>>, vector<2x8xf32>
    %139 = vector.extract_strided_slice %126 {offsets = [192, 0], sizes = [64, 2], strides = [1, 1]} : vector<256x2xf32> to vector<64x2xf32>
    %cst_71 = arith.constant dense<0.000000e+00> : vector<64x8xf32>
    %140 = tpu.matmul %139, %138, %cst_71 {dimension_numbers = #tpu.dot_dimension_numbers<[1], [0], [0], [1], [0, 0, 1, 1], [], []>} : vector<64x2xf32>, vector<2x8xf32>, vector<64x8xf32> -> vector<64x8xf32>
    %141 = arith.addf %137, %140 : vector<64x8xf32>
    %c888 = arith.constant 888 : index
    %c0_72 = arith.constant 0 : index
    %142 = vector.load %arg1[%c888, %c0_72] : memref<1320x256xf32, #tpu.memory_space<vmem>>, vector<128x129xf32>
    %cst_73 = arith.constant 0.000000e+00 : f32
    %143 = vector.broadcast %cst_73 : f32 to vector<64x1xf32>
    %144 = vector.extract_strided_slice %141 {offsets = [0, 1], sizes = [64, 7], strides = [1, 1]} : vector<64x8xf32> to vector<64x7xf32>
    %145 = tpu.concatenate %144, %143 in 1 : vector<64x7xf32>, vector<64x1xf32> -> vector<64x8xf32>
    %c1017 = arith.constant 1017 : index
    %c0_74 = arith.constant 0 : index
    %146 = vector.load %arg1[%c1017, %c0_74] : memref<1320x256xf32, #tpu.memory_space<vmem>>, vector<1x8xf32>
    %147 = vector.broadcast %146 : vector<1x8xf32> to vector<64x8xf32>
    %148 = arith.mulf %145, %147 : vector<64x8xf32>
    %cst_75 = arith.constant 1.000000e+00 : f32
    %149 = vector.broadcast %cst_75 : f32 to vector<1x8xf32>
    %150 = tpu.concatenate %141, %148, %149 in 0 : vector<64x8xf32>, vector<64x8xf32>, vector<1x8xf32> -> vector<129x8xf32>
    %cst_76 = arith.constant dense<0.000000e+00> : vector<128x8xf32>
    %151 = tpu.matmul %142, %150, %cst_76 {dimension_numbers = #tpu.dot_dimension_numbers<[1], [0], [0], [1], [0, 0, 1, 1], [], []>} : vector<128x129xf32>, vector<129x8xf32>, vector<128x8xf32> -> vector<128x8xf32>
    %cst_77 = arith.constant 0.000000e+00 : f32
    %152 = vector.broadcast %cst_77 : f32 to vector<128x8xf32>
    %153 = arith.maximumf %151, %152 : vector<128x8xf32>
    %c1024 = arith.constant 1024 : index
    %c0_78 = arith.constant 0 : index
    %154 = vector.load %arg1[%c1024, %c0_78] : memref<1320x256xf32, #tpu.memory_space<vmem>>, vector<8x16xf32>
    %155 = vector.extract_strided_slice %153 {offsets = [0, 0], sizes = [64, 8], strides = [1, 1]} : vector<128x8xf32> to vector<64x8xf32>
    %cst_79 = arith.constant dense<0.000000e+00> : vector<64x16xf32>
    %156 = tpu.matmul %155, %154, %cst_79 {dimension_numbers = #tpu.dot_dimension_numbers<[1], [0], [0], [1], [0, 0, 1, 1], [], []>} : vector<64x8xf32>, vector<8x16xf32>, vector<64x16xf32> -> vector<64x16xf32>
    %c1032 = arith.constant 1032 : index
    %c0_80 = arith.constant 0 : index
    %157 = vector.load %arg1[%c1032, %c0_80] : memref<1320x256xf32, #tpu.memory_space<vmem>>, vector<8x16xf32>
    %158 = vector.extract_strided_slice %153 {offsets = [64, 0], sizes = [64, 8], strides = [1, 1]} : vector<128x8xf32> to vector<64x8xf32>
    %cst_81 = arith.constant dense<0.000000e+00> : vector<64x16xf32>
    %159 = tpu.matmul %158, %157, %cst_81 {dimension_numbers = #tpu.dot_dimension_numbers<[1], [0], [0], [1], [0, 0, 1, 1], [], []>} : vector<64x8xf32>, vector<8x16xf32>, vector<64x16xf32> -> vector<64x16xf32>
    %160 = arith.addf %156, %159 : vector<64x16xf32>
    %c1040 = arith.constant 1040 : index
    %c0_82 = arith.constant 0 : index
    %161 = vector.load %arg1[%c1040, %c0_82] : memref<1320x256xf32, #tpu.memory_space<vmem>>, vector<64x129xf32>
    %cst_83 = arith.constant 0.000000e+00 : f32
    %162 = vector.broadcast %cst_83 : f32 to vector<64x1xf32>
    %163 = vector.extract_strided_slice %160 {offsets = [0, 1], sizes = [64, 15], strides = [1, 1]} : vector<64x16xf32> to vector<64x15xf32>
    %164 = tpu.concatenate %163, %162 in 1 : vector<64x15xf32>, vector<64x1xf32> -> vector<64x16xf32>
    %c1105 = arith.constant 1105 : index
    %c0_84 = arith.constant 0 : index
    %165 = vector.load %arg1[%c1105, %c0_84] : memref<1320x256xf32, #tpu.memory_space<vmem>>, vector<1x16xf32>
    %166 = vector.broadcast %165 : vector<1x16xf32> to vector<64x16xf32>
    %167 = arith.mulf %164, %166 : vector<64x16xf32>
    %cst_85 = arith.constant 1.000000e+00 : f32
    %168 = vector.broadcast %cst_85 : f32 to vector<1x16xf32>
    %169 = tpu.concatenate %160, %167, %168 in 0 : vector<64x16xf32>, vector<64x16xf32>, vector<1x16xf32> -> vector<129x16xf32>
    %cst_86 = arith.constant dense<0.000000e+00> : vector<64x16xf32>
    %170 = tpu.matmul %161, %169, %cst_86 {dimension_numbers = #tpu.dot_dimension_numbers<[1], [0], [0], [1], [0, 0, 1, 1], [], []>} : vector<64x129xf32>, vector<129x16xf32>, vector<64x16xf32> -> vector<64x16xf32>
    %cst_87 = arith.constant 0.000000e+00 : f32
    %171 = vector.broadcast %cst_87 : f32 to vector<64x16xf32>
    %172 = arith.maximumf %170, %171 : vector<64x16xf32>
    %c1112 = arith.constant 1112 : index
    %c0_88 = arith.constant 0 : index
    %173 = vector.load %arg1[%c1112, %c0_88] : memref<1320x256xf32, #tpu.memory_space<vmem>>, vector<16x32xf32>
    %174 = vector.extract_strided_slice %172 {offsets = [0, 0], sizes = [32, 16], strides = [1, 1]} : vector<64x16xf32> to vector<32x16xf32>
    %cst_89 = arith.constant dense<0.000000e+00> : vector<32x32xf32>
    %175 = tpu.matmul %174, %173, %cst_89 {dimension_numbers = #tpu.dot_dimension_numbers<[1], [0], [0], [1], [0, 0, 1, 1], [], []>} : vector<32x16xf32>, vector<16x32xf32>, vector<32x32xf32> -> vector<32x32xf32>
    %c1128 = arith.constant 1128 : index
    %c0_90 = arith.constant 0 : index
    %176 = vector.load %arg1[%c1128, %c0_90] : memref<1320x256xf32, #tpu.memory_space<vmem>>, vector<16x32xf32>
    %177 = vector.extract_strided_slice %172 {offsets = [32, 0], sizes = [32, 16], strides = [1, 1]} : vector<64x16xf32> to vector<32x16xf32>
    %cst_91 = arith.constant dense<0.000000e+00> : vector<32x32xf32>
    %178 = tpu.matmul %177, %176, %cst_91 {dimension_numbers = #tpu.dot_dimension_numbers<[1], [0], [0], [1], [0, 0, 1, 1], [], []>} : vector<32x16xf32>, vector<16x32xf32>, vector<32x32xf32> -> vector<32x32xf32>
    %179 = arith.addf %175, %178 : vector<32x32xf32>
    %c1144 = arith.constant 1144 : index
    %c0_92 = arith.constant 0 : index
    %180 = vector.load %arg1[%c1144, %c0_92] : memref<1320x256xf32, #tpu.memory_space<vmem>>, vector<32x65xf32>
    %cst_93 = arith.constant 0.000000e+00 : f32
    %181 = vector.broadcast %cst_93 : f32 to vector<32x1xf32>
    %182 = vector.extract_strided_slice %179 {offsets = [0, 1], sizes = [32, 31], strides = [1, 1]} : vector<32x32xf32> to vector<32x31xf32>
    %183 = tpu.concatenate %182, %181 in 1 : vector<32x31xf32>, vector<32x1xf32> -> vector<32x32xf32>
    %c1177 = arith.constant 1177 : index
    %c0_94 = arith.constant 0 : index
    %184 = vector.load %arg1[%c1177, %c0_94] : memref<1320x256xf32, #tpu.memory_space<vmem>>, vector<1x32xf32>
    %185 = vector.broadcast %184 : vector<1x32xf32> to vector<32x32xf32>
    %186 = arith.mulf %183, %185 : vector<32x32xf32>
    %cst_95 = arith.constant 1.000000e+00 : f32
    %187 = vector.broadcast %cst_95 : f32 to vector<1x32xf32>
    %188 = tpu.concatenate %179, %186, %187 in 0 : vector<32x32xf32>, vector<32x32xf32>, vector<1x32xf32> -> vector<65x32xf32>
    %cst_96 = arith.constant dense<0.000000e+00> : vector<32x32xf32>
    %189 = tpu.matmul %180, %188, %cst_96 {dimension_numbers = #tpu.dot_dimension_numbers<[1], [0], [0], [1], [0, 0, 1, 1], [], []>} : vector<32x65xf32>, vector<65x32xf32>, vector<32x32xf32> -> vector<32x32xf32>
    %cst_97 = arith.constant 0.000000e+00 : f32
    %190 = vector.broadcast %cst_97 : f32 to vector<32x32xf32>
    %191 = arith.maximumf %189, %190 : vector<32x32xf32>
    %c1184 = arith.constant 1184 : index
    %c0_98 = arith.constant 0 : index
    %192 = vector.load %arg1[%c1184, %c0_98] : memref<1320x256xf32, #tpu.memory_space<vmem>>, vector<32x64xf32>
    %193 = vector.extract_strided_slice %191 {offsets = [0, 0], sizes = [16, 32], strides = [1, 1]} : vector<32x32xf32> to vector<16x32xf32>
    %cst_99 = arith.constant dense<0.000000e+00> : vector<16x64xf32>
    %194 = tpu.matmul %193, %192, %cst_99 {dimension_numbers = #tpu.dot_dimension_numbers<[1], [0], [0], [1], [0, 0, 1, 1], [], []>} : vector<16x32xf32>, vector<32x64xf32>, vector<16x64xf32> -> vector<16x64xf32>
    %c1216 = arith.constant 1216 : index
    %c0_100 = arith.constant 0 : index
    %195 = vector.load %arg1[%c1216, %c0_100] : memref<1320x256xf32, #tpu.memory_space<vmem>>, vector<32x64xf32>
    %196 = vector.extract_strided_slice %191 {offsets = [16, 0], sizes = [16, 32], strides = [1, 1]} : vector<32x32xf32> to vector<16x32xf32>
    %cst_101 = arith.constant dense<0.000000e+00> : vector<16x64xf32>
    %197 = tpu.matmul %196, %195, %cst_101 {dimension_numbers = #tpu.dot_dimension_numbers<[1], [0], [0], [1], [0, 0, 1, 1], [], []>} : vector<16x32xf32>, vector<32x64xf32>, vector<16x64xf32> -> vector<16x64xf32>
    %198 = arith.addf %194, %197 : vector<16x64xf32>
    %c1248 = arith.constant 1248 : index
    %c0_102 = arith.constant 0 : index
    %199 = vector.load %arg1[%c1248, %c0_102] : memref<1320x256xf32, #tpu.memory_space<vmem>>, vector<64x49xf32>
    %cst_103 = arith.constant 0.000000e+00 : f32
    %200 = vector.broadcast %cst_103 : f32 to vector<16x1xf32>
    %201 = vector.extract_strided_slice %198 {offsets = [0, 0], sizes = [16, 63], strides = [1, 1]} : vector<16x64xf32> to vector<16x63xf32>
    %202 = tpu.concatenate %200, %201 in 1 : vector<16x1xf32>, vector<16x63xf32> -> vector<16x64xf32>
    %c1312 = arith.constant 1312 : index
    %c0_104 = arith.constant 0 : index
    %203 = vector.load %arg1[%c1312, %c0_104] : memref<1320x256xf32, #tpu.memory_space<vmem>>, vector<1x64xf32>
    %204 = vector.broadcast %203 : vector<1x64xf32> to vector<16x64xf32>
    %205 = arith.mulf %202, %204 : vector<16x64xf32>
    %cst_105 = arith.constant 0.000000e+00 : f32
    %206 = vector.broadcast %cst_105 : f32 to vector<16x1xf32>
    %207 = vector.extract_strided_slice %198 {offsets = [0, 1], sizes = [16, 63], strides = [1, 1]} : vector<16x64xf32> to vector<16x63xf32>
    %208 = tpu.concatenate %207, %206 in 1 : vector<16x63xf32>, vector<16x1xf32> -> vector<16x64xf32>
    %c1314 = arith.constant 1314 : index
    %c0_106 = arith.constant 0 : index
    %209 = vector.load %arg1[%c1314, %c0_106] : memref<1320x256xf32, #tpu.memory_space<vmem>>, vector<1x64xf32>
    %210 = vector.broadcast %209 : vector<1x64xf32> to vector<16x64xf32>
    %211 = arith.mulf %208, %210 : vector<16x64xf32>
    %cst_107 = arith.constant 1.000000e+00 : f32
    %212 = vector.broadcast %cst_107 : f32 to vector<1x64xf32>
    %213 = tpu.concatenate %205, %198, %211, %212 in 0 : vector<16x64xf32>, vector<16x64xf32>, vector<16x64xf32>, vector<1x64xf32> -> vector<49x64xf32>
    %cst_108 = arith.constant dense<0.000000e+00> : vector<64x64xf32>
    %214 = tpu.matmul %199, %213, %cst_108 {dimension_numbers = #tpu.dot_dimension_numbers<[1], [0], [0], [1], [0, 0, 1, 1], [], []>} : vector<64x49xf32>, vector<49x64xf32>, vector<64x64xf32> -> vector<64x64xf32>
    %cst_109 = arith.constant 0.000000e+00 : f32
    %215 = vector.broadcast %cst_109 : f32 to vector<64x64xf32>
    %216 = arith.maximumf %214, %215 : vector<64x64xf32>
    %cst_110 = arith.constant 0.000000e+00 : f32
    %217 = vector.broadcast %cst_110 : f32 to vector<16x62xf32>
    %218 = tpu.concatenate %114, %217 in 1 : vector<16x2xf32>, vector<16x62xf32> -> vector<16x64xf32>
    %cst_111 = arith.constant 0.000000e+00 : f32
    %219 = vector.broadcast %cst_111 : f32 to vector<48x64xf32>
    %220 = tpu.concatenate %218, %219 in 0 : vector<16x64xf32>, vector<48x64xf32> -> vector<64x64xf32>
    %221 = tpu.concatenate %216, %220 in 1 : vector<64x64xf32>, vector<64x64xf32> -> vector<64x128xf32>
    %c0_112 = arith.constant 0 : index
    %c0_113 = arith.constant 0 : index
    %222 = vector.load %arg2[%c0_112, %c0_113] : memref<64x128xf32, #tpu.memory_space<vmem>>, vector<64x128xf32>
    tpu.vector_store %arg2[%c0_112, %c0_113], %221 {strides = array<i32>} : memref<64x128xf32, #tpu.memory_space<vmem>>, vector<64x128xf32>,
    return
  }
}

</mosaic_0001>

<llo_original>
// kernel: _lambda_.1
$region0: #{_lambda_.1}
  #allocation0 [shape = 'u32[]', space=smem, size = 0x4, offset = 0x4, fixed_abs, tag = 'smem constant byte address 0x4 - core index']
  #allocation1 [shape = 'u32[144,128]{1,0:T(1,128)}', space=vmem, size = 0x12000, scoped, tag = 'internal scratch']
  %s0 = inlined_call_operand.vmem [shape: f32[128,128], index: 0, kind: input, shape index: {}]
  %s1 = inlined_call_operand.vmem [shape: f32[1320,256], index: 1, kind: input, shape index: {}]
  %s2 = inlined_call_operand.vmem [shape: f32[64,128], index: 2, kind: output, shape index: {}]
  %s3 = sld [smem:[#allocation0]]
  $region18: #{_lambda_.1} parent=0
    _
  %s5 = ssub.s32 1, %s3
  %s6 = scalar_select 0, %s5, %s3
  // Predicated region
  $region2: #{_lambda_.1} parent=0 // pred_check
    _
  $region3: #{_lambda_.1} parent=0 // pred_check_branch
    %8 = sbr.rel (0) target = $region5
  $region4: #{_lambda_.1} parent=0 // pred_region
    _
  $region5: #{_lambda_.1} parent=0 // pred_fallthru
    _
  // Predicated region
  $region6: #{_lambda_.1} parent=0 // pred_check
    _
  $region7: #{_lambda_.1} parent=0 // pred_check_branch
    %10 = sbr.rel (0) target = $region9
  $region8: #{_lambda_.1} parent=0 // pred_region
    _
  $region9: #{_lambda_.1} parent=0 // pred_fallthru
    _
  %v11 = vld [vmem:[%s1] sm:$0xff]
  %v12 = vld [vmem:[%s1 + $0x8] sm:$0xff]
  %v13 = vld [vmem:[%s1 + $0x10] sm:$0xff]
  %v14 = vld [vmem:[%s1 + $0x18] sm:$0xff]
  %v15 = vld [vmem:[%s0] sm:$0xff]
  %v16 = vld [vmem:[%s0 + $0x8] sm:$0xff]
  %v17 = vld [vmem:[%s0 + $0x10] sm:$0xff]
  %v18 = vld [vmem:[%s0 + $0x18] sm:$0xff]
  %v19 = vld [vmem:[%s0 + $0x20] sm:$0xff]
  %v20 = vld [vmem:[%s0 + $0x28] sm:$0xff]
  %v21 = vld [vmem:[%s0 + $0x30] sm:$0xff]
  %v22 = vld [vmem:[%s0 + $0x38] sm:$0xff]
  %v23 = vld [vmem:[%s0 + $0x40] sm:$0xff]
  %v24 = vld [vmem:[%s0 + $0x48] sm:$0xff]
  %v25 = vld [vmem:[%s0 + $0x50] sm:$0xff]
  %v26 = vld [vmem:[%s0 + $0x58] sm:$0xff]
  %v27 = vld [vmem:[%s0 + $0x60] sm:$0xff]
  %v28 = vld [vmem:[%s0 + $0x68] sm:$0xff]
  %v29 = vld [vmem:[%s0 + $0x70] sm:$0xff]
  %v30 = vld [vmem:[%s0 + $0x78] sm:$0xff]
  %vm31 = vcmask 7168
  %v33 = vsel %vm31, %v12, 0
  %v36 = vsel %vm31, %v14, 0
  %vm38 = vcmask 1040384
  %v40 = vsel %vm38, 1.0, 0
  %42 = vmatprep.subr.mxu0 0.0
  %43 = vmatpush1.msra.mxu0 %v30
  %44 = vmatprep.subr.mxu0 0.0
  %45 = vmatpush1.msra.mxu0 %v29
  %46 = vmatprep.subr.mxu0 0.0
  %47 = vmatpush1.msra.mxu0 %v28
  %48 = vmatprep.subr.mxu0 0.0
  %49 = vmatpush1.msra.mxu0 %v27
  %50 = vmatprep.subr.mxu0 0.0
  %51 = vmatpush1.msra.mxu0 %v26
  %52 = vmatprep.subr.mxu0 0.0
  %53 = vmatpush1.msra.mxu0 %v25
  %54 = vmatprep.subr.mxu0 0.0
  %55 = vmatpush1.msra.mxu0 %v24
  %56 = vmatprep.subr.mxu0 0.0
  %57 = vmatpush1.msra.mxu0 %v23
  %58 = vmatprep.subr.mxu0 0.0
  %59 = vmatpush1.msra.mxu0 %v22
  %60 = vmatprep.subr.mxu0 0.0
  %61 = vmatpush1.msra.mxu0 %v21
  %62 = vmatprep.subr.mxu0 0.0
  %63 = vmatpush1.msra.mxu0 %v20
  %64 = vmatprep.subr.mxu0 0.0
  %65 = vmatpush1.msra.mxu0 %v19
  %66 = vmatprep.subr.mxu0 0.0
  %67 = vmatpush1.msra.mxu0 %v18
  %68 = vmatprep.subr.mxu0 0.0
  %69 = vmatpush1.msra.mxu0 %v17
  %70 = vmatprep.subr.mxu0 0.0
  %71 = vmatpush1.msra.mxu0 %v16
  %72 = vmatprep.subr.mxu0 0.0
  %73 = vmatpush1.msra.mxu0 %v15
  %74 = vmatprep.subr.mxu0 0.0
  %75 = vmatpush2.msra.mxu0 0.0
  %76 = vmatprep.subr.mxu0 0.0
  %77 = vmatpush2.msra.mxu0 0.0
  %78 = vmatprep.subr.mxu0 0.0
  %79 = vmatpush2.msra.mxu0 0.0
  %80 = vmatprep.subr.mxu0 0.0
  %81 = vmatpush2.msra.mxu0 0.0
  %82 = vmatprep.subr.mxu0 0.0
  %83 = vmatpush2.msra.mxu0 0.0
  %84 = vmatprep.subr.mxu0 0.0
  %85 = vmatpush2.msra.mxu0 0.0
  %86 = vmatprep.subr.mxu0 0.0
  %87 = vmatpush2.msra.mxu0 0.0
  %88 = vmatprep.subr.mxu0 0.0
  %89 = vmatpush2.msra.mxu0 0.0
  %90 = vmatprep.subr.mxu0 0.0
  %91 = vmatpush2.msra.mxu0 0.0
  %92 = vmatprep.subr.mxu0 0.0
  %93 = vmatpush2.msra.mxu0 0.0
  %94 = vmatprep.subr.mxu0 0.0
  %95 = vmatpush2.msra.mxu0 0.0
  %96 = vmatprep.subr.mxu0 0.0
  %97 = vmatpush2.msra.mxu0 0.0
  %98 = vmatprep.subr.mxu0 0.0
  %99 = vmatpush2.msra.mxu0 0.0
  %100 = vmatprep.subr.mxu0 0.0
  %101 = vmatpush2.msra.mxu0 0.0
  %102 = vmatprep.subr.mxu0 0.0
  %103 = vmatpush2.msra.mxu0 0.0
  %104 = vmatprep.subr.mxu0 0.0
  %105 = vmatpush2.msra.mxu0 %v40
  %106 = vmatprep.mubr.f32.mxu0 %v33
  %107 = vmatmul.mubr.f32.gmra.mxu0 %v11
  %v108 = vpop.f32.mrf.mxu0
  %v109 = vadd.f32 0.0, %v108
  %v110 = vpop.f32.mrf.mxu0
  %111 = vmatprep.mubr.f32.mxu0 %v36
  %112 = vmatmul.mubr.f32.gmra.mxu0 %v13
  %v113 = vpop.f32.mrf.mxu0
  %v114 = vadd.f32 0.0, %v113
  %v115 = vpop.f32.mrf.mxu0
  %116 = vdwg.mxu0
  %119 = vrot.lane.b32.xlu0 %v109, 127
  %v120 = vpop.permute.xlu0 %119
  %121 = vrot.lane.b32.xlu0 %v114, 127
  %v122 = vpop.permute.xlu0 %121
  %vm125 = vcmask 1039360
  %v126 = vsel %vm125, %v120, 0.0
  %v127 = vsel %vm125, %v122, 0.0
  %v128 = vmax.f32 %v109, %v126
  %v129 = vmax.f32 %v114, %v127
  %v130 = vld [vmem:[%s1 + $0x20] sm:$0xff]
  %v131 = vld [vmem:[%s1 + $0x30] sm:$0xff]
  %v132 = vld [vmem:[%s1 + $0x40] sm:$0xff]
  %v133 = vld [vmem:[%s1 + $0x50] sm:$0xff]
  %v134 = vld [vmem:[%s1 + $0x60] sm:$0xff]
  %v135 = vld [vmem:[%s1 + $0x70] sm:$0xff]
  %v136 = vld [vmem:[%s1 + $0x80] sm:$0xff]
  %v137 = vld [vmem:[%s1 + $0x90] sm:$0xff]
  %v138 = vld [vmem:[%s1 + $0xa0] sm:$0xff]
  %v139 = vld [vmem:[%s1 + $0xb0] sm:$0xff]
  %v140 = vld [vmem:[%s1 + $0xc0] sm:$0xff]
  %v141 = vld [vmem:[%s1 + $0xd0] sm:$0xff]
  %v142 = vld [vmem:[%s1 + $0xe0] sm:$0xff]
  %v143 = vld [vmem:[%s1 + $0xf0] sm:$0xff]
  %v144 = vld [vmem:[%s1 + $0x100] sm:$0xff]
  %v145 = vld [vmem:[%s1 + $0x110] sm:$0xff]
  %146 = vmatprep.subr.mxu0 0.0
  %147 = vmatpush1.msra.mxu0 %v145
  %148 = vmatprep.subr.mxu0 0.0
  %149 = vmatpush1.msra.mxu0 %v144
  %150 = vmatprep.subr.mxu0 0.0
  %151 = vmatpush1.msra.mxu0 %v143
  %152 = vmatprep.subr.mxu0 0.0
  %153 = vmatpush1.msra.mxu0 %v142
  %154 = vmatprep.subr.mxu0 0.0
  %155 = vmatpush1.msra.mxu0 %v141
  %156 = vmatprep.subr.mxu0 0.0
  %157 = vmatpush1.msra.mxu0 %v140
  %158 = vmatprep.subr.mxu0 0.0
  %159 = vmatpush1.msra.mxu0 %v139
  %160 = vmatprep.subr.mxu0 0.0
  %161 = vmatpush1.msra.mxu0 %v138
  %162 = vmatprep.subr.mxu0 0.0
  %163 = vmatpush1.msra.mxu0 %v137
  %164 = vmatprep.subr.mxu0 0.0
  %165 = vmatpush1.msra.mxu0 %v136
  %166 = vmatprep.subr.mxu0 0.0
  %167 = vmatpush1.msra.mxu0 %v135
  %168 = vmatprep.subr.mxu0 0.0
  %169 = vmatpush1.msra.mxu0 %v134
  %170 = vmatprep.subr.mxu0 0.0
  %171 = vmatpush1.msra.mxu0 %v133
  %172 = vmatprep.subr.mxu0 0.0
  %173 = vmatpush1.msra.mxu0 %v132
  %174 = vmatprep.subr.mxu0 0.0
  %175 = vmatpush1.msra.mxu0 %v131
  %176 = vmatprep.subr.mxu0 0.0
  %177 = vmatpush1.msra.mxu0 %v130
  %178 = vmatprep.subr.mxu0 0.0
  %179 = vmatpush2.msra.mxu0 0.0
  %180 = vmatprep.subr.mxu0 0.0
  %181 = vmatpush2.msra.mxu0 0.0
  %182 = vmatprep.subr.mxu0 0.0
  %183 = vmatpush2.msra.mxu0 0.0
  %184 = vmatprep.subr.mxu0 0.0
  %185 = vmatpush2.msra.mxu0 0.0
  %186 = vmatprep.subr.mxu0 0.0
  %187 = vmatpush2.msra.mxu0 0.0
  %188 = vmatprep.subr.mxu0 0.0
  %189 = vmatpush2.msra.mxu0 0.0
  %190 = vmatprep.subr.mxu0 0.0
  %191 = vmatpush2.msra.mxu0 0.0
  %192 = vmatprep.subr.mxu0 0.0
  %193 = vmatpush2.msra.mxu0 0.0
  %194 = vmatprep.subr.mxu0 0.0
  %195 = vmatpush2.msra.mxu0 0.0
  %196 = vmatprep.subr.mxu0 0.0
  %197 = vmatpush2.msra.mxu0 0.0
  %198 = vmatprep.subr.mxu0 0.0
  %199 = vmatpush2.msra.mxu0 0.0
  %200 = vmatprep.subr.mxu0 0.0
  %201 = vmatpush2.msra.mxu0 0.0
  %202 = vmatprep.subr.mxu0 0.0
  %203 = vmatpush2.msra.mxu0 0.0
  %204 = vmatprep.subr.mxu0 0.0
  %205 = vmatpush2.msra.mxu0 0.0
  %206 = vmatprep.subr.mxu0 0.0
  %207 = vmatpush2.msra.mxu0 0.0
  %208 = vmatprep.subr.mxu0 0.0
  %209 = vmatpush2.msra.mxu0 0.0
  %210 = vmatprep.mubr.f32.mxu0 0.0
  %211 = vmatmul.mubr.f32.gmra.mxu0 %v128
  %v212 = vpop.f32.mrf.mxu0
  %v213 = vadd.f32 0.0, %v212
  %v214 = vpop.f32.mrf.mxu0
  %215 = vmatprep.mubr.f32.mxu0 0.0
  %216 = vmatmul.mubr.f32.gmra.mxu0 %v129
  %v217 = vpop.f32.mrf.mxu0
  %v218 = vadd.f32 0.0, %v217
  %v219 = vpop.f32.mrf.mxu0
  %220 = vdwg.mxu0
  %v221 = vmax.f32 %v213, 0.0
  %v222 = vmax.f32 %v218, 0.0
  %v223 = vld [vmem:[%s1 + $0x120] sm:$0xff]
  %v224 = vld [vmem:[%s1 + $0x130] sm:$0xff]
  %v225 = vld [vmem:[%s1 + $0x140] sm:$0xff]
  %v226 = vld [vmem:[%s1 + $0x150] sm:$0xff]
  %229 = vrot.lane.b32.xlu0 %v221, 1
  %v230 = vpop.permute.xlu0 %229
  %231 = vrot.lane.b32.xlu0 %v222, 1
  %v232 = vpop.permute.xlu0 %231
  %v235 = vsel %vm31, 0.0, %v230
  %v236 = vsel %vm31, 0.0, %v232
  %v237 = vld [vmem:[%s1 + $0x160] ss:$0 sm:$0xff]
  %v238 = vmul.f32 %v235, %v237
  %v239 = vmul.f32 %v236, %v237
  %240 = vrot.lane.b32.xlu0 %v221, 127
  %v241 = vpop.permute.xlu0 %240
  %242 = vrot.lane.b32.xlu0 %v222, 127
  %v243 = vpop.permute.xlu0 %242
  %vm246 = vcmask 515072
  %v247 = vsel %vm246, %v241, 0.0
  %v248 = vsel %vm246, %v243, 0.0
  %v249 = vld [vmem:[%s1 + $0x162] ss:$0 sm:$0xff]
  %v250 = vmul.f32 %v247, %v249
  %v251 = vmul.f32 %v248, %v249
  %vm252 = vcmask 400384
  %v254 = vsel %vm252, %v223, 0
  %v257 = vsel %vm252, %v224, 0
  %v260 = vsel %vm252, %v225, 0
  %v263 = vsel %vm252, %v226, 0
  %265 = vmatprep.subr.mxu0 0.0
  %266 = vmatpush1.msra.mxu0 0.0
  %267 = vmatprep.subr.mxu0 0.0
  %268 = vmatpush1.msra.mxu0 0.0
  %269 = vmatprep.subr.mxu0 0.0
  %270 = vmatpush1.msra.mxu0 0.0
  %271 = vmatprep.subr.mxu0 0.0
  %272 = vmatpush1.msra.mxu0 0.0
  %273 = vmatprep.subr.mxu0 0.0
  %274 = vmatpush1.msra.mxu0 0.0
  %275 = vmatprep.subr.mxu0 0.0
  %276 = vmatpush1.msra.mxu0 0.0
  %277 = vmatprep.subr.mxu0 0.0
  %278 = vmatpush1.msra.mxu0 0.0
  %279 = vmatprep.subr.mxu0 0.0
  %280 = vmatpush1.msra.mxu0 0.0
  %281 = vmatprep.subr.mxu0 0.0
  %282 = vmatpush1.msra.mxu0 0.0
  %283 = vmatprep.subr.mxu0 0.0
  %284 = vmatpush1.msra.mxu0 %v40
  %285 = vmatprep.subr.mxu0 0.0
  %286 = vmatpush1.msra.mxu0 %v251
  %287 = vmatprep.subr.mxu0 0.0
  %288 = vmatpush1.msra.mxu0 %v250
  %289 = vmatprep.subr.mxu0 0.0
  %290 = vmatpush1.msra.mxu0 %v222
  %291 = vmatprep.subr.mxu0 0.0
  %292 = vmatpush1.msra.mxu0 %v221
  %293 = vmatprep.subr.mxu0 0.0
  %294 = vmatpush1.msra.mxu0 %v239
  %295 = vmatprep.subr.mxu0 0.0
  %296 = vmatpush1.msra.mxu0 %v238
  %297 = vmatprep.subr.mxu0 0.0
  %298 = vmatpush2.msra.mxu0 0.0
  %299 = vmatprep.subr.mxu0 0.0
  %300 = vmatpush2.msra.mxu0 0.0
  %301 = vmatprep.subr.mxu0 0.0
  %302 = vmatpush2.msra.mxu0 0.0
  %303 = vmatprep.subr.mxu0 0.0
  %304 = vmatpush2.msra.mxu0 0.0
  %305 = vmatprep.subr.mxu0 0.0
  %306 = vmatpush2.msra.mxu0 0.0
  %307 = vmatprep.subr.mxu0 0.0
  %308 = vmatpush2.msra.mxu0 0.0
  %309 = vmatprep.subr.mxu0 0.0
  %310 = vmatpush2.msra.mxu0 0.0
  %311 = vmatprep.subr.mxu0 0.0
  %312 = vmatpush2.msra.mxu0 0.0
  %313 = vmatprep.subr.mxu0 0.0
  %314 = vmatpush2.msra.mxu0 0.0
  %315 = vmatprep.subr.mxu0 0.0
  %316 = vmatpush2.msra.mxu0 0.0
  %317 = vmatprep.subr.mxu0 0.0
  %318 = vmatpush2.msra.mxu0 0.0
  %319 = vmatprep.subr.mxu0 0.0
  %320 = vmatpush2.msra.mxu0 0.0
  %321 = vmatprep.subr.mxu0 0.0
  %322 = vmatpush2.msra.mxu0 0.0
  %323 = vmatprep.subr.mxu0 0.0
  %324 = vmatpush2.msra.mxu0 0.0
  %325 = vmatprep.subr.mxu0 0.0
  %326 = vmatpush2.msra.mxu0 0.0
  %327 = vmatprep.subr.mxu0 0.0
  %328 = vmatpush2.msra.mxu0 0.0
  %329 = vmatprep.mubr.f32.mxu0 0.0
  %330 = vmatmul.mubr.f32.gmra.mxu0 %v254
  %v331 = vpop.f32.mrf.mxu0
  %v332 = vadd.f32 0.0, %v331
  %v333 = vpop.f32.mrf.mxu0
  %334 = vmatprep.mubr.f32.mxu0 0.0
  %335 = vmatmul.mubr.f32.gmra.mxu0 %v257
  %v336 = vpop.f32.mrf.mxu0
  %v337 = vadd.f32 0.0, %v336
  %v338 = vpop.f32.mrf.mxu0
  %339 = vmatprep.mubr.f32.mxu0 0.0
  %340 = vmatmul.mubr.f32.gmra.mxu0 %v260
  %v341 = vpop.f32.mrf.mxu0
  %v342 = vadd.f32 0.0, %v341
  %v343 = vpop.f32.mrf.mxu0
  %344 = vmatprep.mubr.f32.mxu0 0.0
  %345 = vmatmul.mubr.f32.gmra.mxu0 %v263
  %v346 = vpop.f32.mrf.mxu0
  %v347 = vadd.f32 0.0, %v346
  %v348 = vpop.f32.mrf.mxu0
  %349 = vdwg.mxu0
  %354 = vrot.lane.b32.xlu0 %v332, 127
  %v355 = vpop.permute.xlu0 %354
  %356 = vrot.lane.b32.xlu0 %v337, 127
  %v357 = vpop.permute.xlu0 %356
  %358 = vrot.lane.b32.xlu0 %v342, 127
  %v359 = vpop.permute.xlu0 %358
  %360 = vrot.lane.b32.xlu0 %v347, 127
  %v361 = vpop.permute.xlu0 %360
  %v366 = vsel %vm246, %v355, 0.0
  %v367 = vsel %vm246, %v357, 0.0
  %v368 = vsel %vm246, %v359, 0.0
  %v369 = vsel %vm246, %v361, 0.0
  %v370 = vmax.f32 %v332, %v366
  %v371 = vmax.f32 %v337, %v367
  %v372 = vmax.f32 %v342, %v368
  %v373 = vmax.f32 %v347, %v369
  %v374 = vld [vmem:[%s1 + $0x170] sm:$0xff]
  %v375 = vld [vmem:[%s1 + $0x180] sm:$0xff]
  %v376 = vld [vmem:[%s1 + $0x190] sm:$0xff]
  %v377 = vld [vmem:[%s1 + $0x1a0] sm:$0xff]
  %v378 = vld [vmem:[%s1 + $0x1b0] sm:$0xff]
  %v379 = vld [vmem:[%s1 + $0x1c0] sm:$0xff]
  %v380 = vld [vmem:[%s1 + $0x1d0] sm:$0xff]
  %v381 = vld [vmem:[%s1 + $0x1e0] sm:$0xff]
  %vm382 = vcmask 523264
  %v384 = vsel %vm382, %v370, 0
  %v387 = vsel %vm382, %v371, 0
  %v390 = vsel %vm382, %v372, 0
  %v393 = vsel %vm382, %v373, 0
  %395 = vmatprep.subr.mxu0 0.0
  %396 = vmatpush1.msra.mxu0 0.0
  %397 = vmatprep.subr.mxu0 0.0
  %398 = vmatpush1.msra.mxu0 0.0
  %399 = vmatprep.subr.mxu0 0.0
  %400 = vmatpush1.msra.mxu0 0.0
  %401 = vmatprep.subr.mxu0 0.0
  %402 = vmatpush1.msra.mxu0 0.0
  %403 = vmatprep.subr.mxu0 0.0
  %404 = vmatpush1.msra.mxu0 0.0
  %405 = vmatprep.subr.mxu0 0.0
  %406 = vmatpush1.msra.mxu0 0.0
  %407 = vmatprep.subr.mxu0 0.0
  %408 = vmatpush1.msra.mxu0 0.0
  %409 = vmatprep.subr.mxu0 0.0
  %410 = vmatpush1.msra.mxu0 0.0
  %411 = vmatprep.subr.mxu0 0.0
  %412 = vmatpush1.msra.mxu0 %v381
  %413 = vmatprep.subr.mxu0 0.0
  %414 = vmatpush1.msra.mxu0 %v380
  %415 = vmatprep.subr.mxu0 0.0
  %416 = vmatpush1.msra.mxu0 %v379
  %417 = vmatprep.subr.mxu0 0.0
  %418 = vmatpush1.msra.mxu0 %v378
  %419 = vmatprep.subr.mxu0 0.0
  %420 = vmatpush1.msra.mxu0 %v377
  %421 = vmatprep.subr.mxu0 0.0
  %422 = vmatpush1.msra.mxu0 %v376
  %423 = vmatprep.subr.mxu0 0.0
  %424 = vmatpush1.msra.mxu0 %v375
  %425 = vmatprep.subr.mxu0 0.0
  %426 = vmatpush1.msra.mxu0 %v374
  %427 = vmatprep.subr.mxu0 0.0
  %428 = vmatpush2.msra.mxu0 0.0
  %429 = vmatprep.subr.mxu0 0.0
  %430 = vmatpush2.msra.mxu0 0.0
  %431 = vmatprep.subr.mxu0 0.0
  %432 = vmatpush2.msra.mxu0 0.0
  %433 = vmatprep.subr.mxu0 0.0
  %434 = vmatpush2.msra.mxu0 0.0
  %435 = vmatprep.subr.mxu0 0.0
  %436 = vmatpush2.msra.mxu0 0.0
  %437 = vmatprep.subr.mxu0 0.0
  %438 = vmatpush2.msra.mxu0 0.0
  %439 = vmatprep.subr.mxu0 0.0
  %440 = vmatpush2.msra.mxu0 0.0
  %441 = vmatprep.subr.mxu0 0.0
  %442 = vmatpush2.msra.mxu0 0.0
  %443 = vmatprep.subr.mxu0 0.0
  %444 = vmatpush2.msra.mxu0 0.0
  %445 = vmatprep.subr.mxu0 0.0
  %446 = vmatpush2.msra.mxu0 0.0
  %447 = vmatprep.subr.mxu0 0.0
  %448 = vmatpush2.msra.mxu0 0.0
  %449 = vmatprep.subr.mxu0 0.0
  %450 = vmatpush2.msra.mxu0 0.0
  %451 = vmatprep.subr.mxu0 0.0
  %452 = vmatpush2.msra.mxu0 0.0
  %453 = vmatprep.subr.mxu0 0.0
  %454 = vmatpush2.msra.mxu0 0.0
  %455 = vmatprep.subr.mxu0 0.0
  %456 = vmatpush2.msra.mxu0 0.0
  %457 = vmatprep.subr.mxu0 0.0
  %458 = vmatpush2.msra.mxu0 0.0
  %459 = vmatprep.mubr.f32.mxu0 0.0
  %460 = vmatmul.mubr.f32.gmra.mxu0 %v384
  %v461 = vpop.f32.mrf.mxu0
  %v462 = vadd.f32 0.0, %v461
  %v463 = vpop.f32.mrf.mxu0
  %464 = vmatprep.mubr.f32.mxu0 0.0
  %465 = vmatmul.mubr.f32.gmra.mxu0 %v387
  %v466 = vpop.f32.mrf.mxu0
  %v467 = vadd.f32 0.0, %v466
  %v468 = vpop.f32.mrf.mxu0
  %469 = vmatprep.mubr.f32.mxu0 0.0
  %470 = vmatmul.mubr.f32.gmra.mxu0 %v390
  %v471 = vpop.f32.mrf.mxu0
  %v472 = vadd.f32 0.0, %v471
  %v473 = vpop.f32.mrf.mxu0
  %474 = vmatprep.mubr.f32.mxu0 0.0
  %475 = vmatmul.mubr.f32.gmra.mxu0 %v393
  %v476 = vpop.f32.mrf.mxu0
  %v477 = vadd.f32 0.0, %v476
  %v478 = vpop.f32.mrf.mxu0
  %479 = vdwg.mxu0
  %v480 = vmax.f32 %v462, 0.0
  %v481 = vmax.f32 %v467, 0.0
  %v482 = vmax.f32 %v472, 0.0
  %v483 = vmax.f32 %v477, 0.0
  %v484 = vld [vmem:[%s1 + $0x1f0] sm:$0xff]
  %v485 = vld [vmem:[%s1 + $0x200] sm:$0xff]
  %v486 = vld [vmem:[%s1 + $0x210] sm:$0xff]
  %v487 = vld [vmem:[%s1 + $0x220] sm:$0xff]
  %v488 = vld [vmem:[%s1 + $0x230] sm:$0xff]
  %v489 = vld [vmem:[%s1 + $0x240] sm:$0xff]
  %v490 = vld [vmem:[%s1 + $0x250] sm:$0xff]
  %v491 = vld [vmem:[%s1 + $0x260] sm:$0xff]
  %496 = vrot.lane.b32.xlu0 %v480, 1
  %v497 = vpop.permute.xlu0 %496
  %498 = vrot.lane.b32.xlu0 %v481, 1
  %v499 = vpop.permute.xlu0 %498
  %500 = vrot.lane.b32.xlu0 %v482, 1
  %v501 = vpop.permute.xlu0 %500
  %502 = vrot.lane.b32.xlu0 %v483, 1
  %v503 = vpop.permute.xlu0 %502
  %v508 = vsel %vm31, 0.0, %v497
  %v509 = vsel %vm31, 0.0, %v499
  %v510 = vsel %vm31, 0.0, %v501
  %v511 = vsel %vm31, 0.0, %v503
  %v512 = vld [vmem:[%s1 + $0x270] ss:$0 sm:$0xff]
  %v513 = vmul.f32 %v508, %v512
  %v514 = vmul.f32 %v509, %v512
  %v515 = vmul.f32 %v510, %v512
  %v516 = vmul.f32 %v511, %v512
  %517 = vrot.lane.b32.xlu0 %v480, 127
  %v518 = vpop.permute.xlu0 %517
  %519 = vrot.lane.b32.xlu0 %v481, 127
  %v520 = vpop.permute.xlu0 %519
  %521 = vrot.lane.b32.xlu0 %v482, 127
  %v522 = vpop.permute.xlu0 %521
  %523 = vrot.lane.b32.xlu0 %v483, 127
  %v524 = vpop.permute.xlu0 %523
  %vm529 = vcmask 252928
  %v530 = vsel %vm529, %v518, 0.0
  %v531 = vsel %vm529, %v520, 0.0
  %v532 = vsel %vm529, %v522, 0.0
  %v533 = vsel %vm529, %v524, 0.0
  %v534 = vld [vmem:[%s1 + $0x272] ss:$0 sm:$0xff]
  %v535 = vmul.f32 %v530, %v534
  %v536 = vmul.f32 %v531, %v534
  %v537 = vmul.f32 %v532, %v534
  %v538 = vmul.f32 %v533, %v534
  %vm539 = vcmask 793600
  %v541 = vsel %vm539, %v484, 0
  %v544 = vsel %vm539, %v485, 0
  %v547 = vsel %vm539, %v486, 0
  %v550 = vsel %vm539, %v487, 0
  %v553 = vsel %vm539, %v488, 0
  %v556 = vsel %vm539, %v489, 0
  %v559 = vsel %vm539, %v490, 0
  %v562 = vsel %vm539, %v491, 0
  %564 = vmatprep.subr.mxu0 0.0
  %565 = vmatpush1.msra.mxu0 0.0
  %566 = vmatprep.subr.mxu0 0.0
  %567 = vmatpush1.msra.mxu0 0.0
  %568 = vmatprep.subr.mxu0 0.0
  %569 = vmatpush1.msra.mxu0 0.0
  %570 = vmatprep.subr.mxu0 0.0
  %571 = vmatpush1.msra.mxu0 %v40
  %572 = vmatprep.subr.mxu0 0.0
  %573 = vmatpush1.msra.mxu0 %v538
  %574 = vmatprep.subr.mxu0 0.0
  %575 = vmatpush1.msra.mxu0 %v537
  %576 = vmatprep.subr.mxu0 0.0
  %577 = vmatpush1.msra.mxu0 %v536
  %578 = vmatprep.subr.mxu0 0.0
  %579 = vmatpush1.msra.mxu0 %v535
  %580 = vmatprep.subr.mxu0 0.0
  %581 = vmatpush1.msra.mxu0 %v483
  %582 = vmatprep.subr.mxu0 0.0
  %583 = vmatpush1.msra.mxu0 %v482
  %584 = vmatprep.subr.mxu0 0.0
  %585 = vmatpush1.msra.mxu0 %v481
  %586 = vmatprep.subr.mxu0 0.0
  %587 = vmatpush1.msra.mxu0 %v480
  %588 = vmatprep.subr.mxu0 0.0
  %589 = vmatpush1.msra.mxu0 %v516
  %590 = vmatprep.subr.mxu0 0.0
  %591 = vmatpush1.msra.mxu0 %v515
  %592 = vmatprep.subr.mxu0 0.0
  %593 = vmatpush1.msra.mxu0 %v514
  %594 = vmatprep.subr.mxu0 0.0
  %595 = vmatpush1.msra.mxu0 %v513
  %596 = vmatprep.subr.mxu0 0.0
  %597 = vmatpush2.msra.mxu0 0.0
  %598 = vmatprep.subr.mxu0 0.0
  %599 = vmatpush2.msra.mxu0 0.0
  %600 = vmatprep.subr.mxu0 0.0
  %601 = vmatpush2.msra.mxu0 0.0
  %602 = vmatprep.subr.mxu0 0.0
  %603 = vmatpush2.msra.mxu0 0.0
  %604 = vmatprep.subr.mxu0 0.0
  %605 = vmatpush2.msra.mxu0 0.0
  %606 = vmatprep.subr.mxu0 0.0
  %607 = vmatpush2.msra.mxu0 0.0
  %608 = vmatprep.subr.mxu0 0.0
  %609 = vmatpush2.msra.mxu0 0.0
  %610 = vmatprep.subr.mxu0 0.0
  %611 = vmatpush2.msra.mxu0 0.0
  %612 = vmatprep.subr.mxu0 0.0
  %613 = vmatpush2.msra.mxu0 0.0
  %614 = vmatprep.subr.mxu0 0.0
  %615 = vmatpush2.msra.mxu0 0.0
  %616 = vmatprep.subr.mxu0 0.0
  %617 = vmatpush2.msra.mxu0 0.0
  %618 = vmatprep.subr.mxu0 0.0
  %619 = vmatpush2.msra.mxu0 0.0
  %620 = vmatprep.subr.mxu0 0.0
  %621 = vmatpush2.msra.mxu0 0.0
  %622 = vmatprep.subr.mxu0 0.0
  %623 = vmatpush2.msra.mxu0 0.0
  %624 = vmatprep.subr.mxu0 0.0
  %625 = vmatpush2.msra.mxu0 0.0
  %626 = vmatprep.subr.mxu0 0.0
  %627 = vmatpush2.msra.mxu0 0.0
  %628 = vmatprep.mubr.f32.mxu0 0.0
  %629 = vmatmul.mubr.f32.gmra.mxu0 %v541
  %v630 = vpop.f32.mrf.mxu0
  %v631 = vadd.f32 0.0, %v630
  %v632 = vpop.f32.mrf.mxu0
  %633 = vmatprep.mubr.f32.mxu0 0.0
  %634 = vmatmul.mubr.f32.gmra.mxu0 %v544
  %v635 = vpop.f32.mrf.mxu0
  %v636 = vadd.f32 0.0, %v635
  %v637 = vpop.f32.mrf.mxu0
  %638 = vmatprep.mubr.f32.mxu0 0.0
  %639 = vmatmul.mubr.f32.gmra.mxu0 %v547
  %v640 = vpop.f32.mrf.mxu0
  %v641 = vadd.f32 0.0, %v640
  %v642 = vpop.f32.mrf.mxu0
  %643 = vmatprep.mubr.f32.mxu0 0.0
  %644 = vmatmul.mubr.f32.gmra.mxu0 %v550
  %v645 = vpop.f32.mrf.mxu0
  %v646 = vadd.f32 0.0, %v645
  %v647 = vpop.f32.mrf.mxu0
  %648 = vmatprep.mubr.f32.mxu0 0.0
  %649 = vmatmul.mubr.f32.gmra.mxu0 %v553
  %v650 = vpop.f32.mrf.mxu0
  %v651 = vadd.f32 0.0, %v650
  %v652 = vpop.f32.mrf.mxu0
  %653 = vmatprep.mubr.f32.mxu0 0.0
  %654 = vmatmul.mubr.f32.gmra.mxu0 %v556
  %v655 = vpop.f32.mrf.mxu0
  %v656 = vadd.f32 0.0, %v655
  %v657 = vpop.f32.mrf.mxu0
  %658 = vmatprep.mubr.f32.mxu0 0.0
  %659 = vmatmul.mubr.f32.gmra.mxu0 %v559
  %v660 = vpop.f32.mrf.mxu0
  %v661 = vadd.f32 0.0, %v660
  %v662 = vpop.f32.mrf.mxu0
  %663 = vmatprep.mubr.f32.mxu0 0.0
  %664 = vmatmul.mubr.f32.gmra.mxu0 %v562
  %v665 = vpop.f32.mrf.mxu0
  %v666 = vadd.f32 0.0, %v665
  %v667 = vpop.f32.mrf.mxu0
  %668 = vdwg.mxu0
  %677 = vrot.lane.b32.xlu0 %v631, 127
  %v678 = vpop.permute.xlu0 %677
  %679 = vrot.lane.b32.xlu0 %v636, 127
  %v680 = vpop.permute.xlu0 %679
  %681 = vrot.lane.b32.xlu0 %v641, 127
  %v682 = vpop.permute.xlu0 %681
  %683 = vrot.lane.b32.xlu0 %v646, 127
  %v684 = vpop.permute.xlu0 %683
  %685 = vrot.lane.b32.xlu0 %v651, 127
  %v686 = vpop.permute.xlu0 %685
  %687 = vrot.lane.b32.xlu0 %v656, 127
  %v688 = vpop.permute.xlu0 %687
  %689 = vrot.lane.b32.xlu0 %v661, 127
  %v690 = vpop.permute.xlu0 %689
  %691 = vrot.lane.b32.xlu0 %v666, 127
  %v692 = vpop.permute.xlu0 %691
  %v701 = vsel %vm529, %v678, 0.0
  %v702 = vsel %vm529, %v680, 0.0
  %v703 = vsel %vm529, %v682, 0.0
  %v704 = vsel %vm529, %v684, 0.0
  %v705 = vsel %vm529, %v686, 0.0
  %v706 = vsel %vm529, %v688, 0.0
  %v707 = vsel %vm529, %v690, 0.0
  %v708 = vsel %vm529, %v692, 0.0
  %v709 = vmax.f32 %v631, %v701
  %v710 = vmax.f32 %v636, %v702
  %v711 = vmax.f32 %v641, %v703
  %v712 = vmax.f32 %v646, %v704
  %v713 = vmax.f32 %v651, %v705
  %v714 = vmax.f32 %v656, %v706
  %v715 = vmax.f32 %v661, %v707
  %v716 = vmax.f32 %v666, %v708
  %v717 = vld [vmem:[%s1 + $0x280] sm:$0xff]
  %v718 = vld [vmem:[%s1 + $0x290] sm:$0xff]
  %v719 = vld [vmem:[%s1 + $0x2a0] sm:$0xff]
  %v720 = vld [vmem:[%s1 + $0x2b0] sm:$0xff]
  %vm721 = vcmask 261120
  %v723 = vsel %vm721, %v709, 0
  %v726 = vsel %vm721, %v710, 0
  %v729 = vsel %vm721, %v711, 0
  %v732 = vsel %vm721, %v712, 0
  %v735 = vsel %vm721, %v713, 0
  %v738 = vsel %vm721, %v714, 0
  %v741 = vsel %vm721, %v715, 0
  %v744 = vsel %vm721, %v716, 0
  %746 = vmatprep.subr.mxu0 0.0
  %747 = vmatpush1.msra.mxu0 0.0
  %748 = vmatprep.subr.mxu0 0.0
  %749 = vmatpush1.msra.mxu0 0.0
  %750 = vmatprep.subr.mxu0 0.0
  %751 = vmatpush1.msra.mxu0 0.0
  %752 = vmatprep.subr.mxu0 0.0
  %753 = vmatpush1.msra.mxu0 0.0
  %754 = vmatprep.subr.mxu0 0.0
  %755 = vmatpush1.msra.mxu0 0.0
  %756 = vmatprep.subr.mxu0 0.0
  %757 = vmatpush1.msra.mxu0 0.0
  %758 = vmatprep.subr.mxu0 0.0
  %759 = vmatpush1.msra.mxu0 0.0
  %760 = vmatprep.subr.mxu0 0.0
  %761 = vmatpush1.msra.mxu0 0.0
  %762 = vmatprep.subr.mxu0 0.0
  %763 = vmatpush1.msra.mxu0 0.0
  %764 = vmatprep.subr.mxu0 0.0
  %765 = vmatpush1.msra.mxu0 0.0
  %766 = vmatprep.subr.mxu0 0.0
  %767 = vmatpush1.msra.mxu0 0.0
  %768 = vmatprep.subr.mxu0 0.0
  %769 = vmatpush1.msra.mxu0 0.0
  %770 = vmatprep.subr.mxu0 0.0
  %771 = vmatpush1.msra.mxu0 %v720
  %772 = vmatprep.subr.mxu0 0.0
  %773 = vmatpush1.msra.mxu0 %v719
  %774 = vmatprep.subr.mxu0 0.0
  %775 = vmatpush1.msra.mxu0 %v718
  %776 = vmatprep.subr.mxu0 0.0
  %777 = vmatpush1.msra.mxu0 %v717
  %778 = vmatprep.subr.mxu0 0.0
  %779 = vmatpush2.msra.mxu0 0.0
  %780 = vmatprep.subr.mxu0 0.0
  %781 = vmatpush2.msra.mxu0 0.0
  %782 = vmatprep.subr.mxu0 0.0
  %783 = vmatpush2.msra.mxu0 0.0
  %784 = vmatprep.subr.mxu0 0.0
  %785 = vmatpush2.msra.mxu0 0.0
  %786 = vmatprep.subr.mxu0 0.0
  %787 = vmatpush2.msra.mxu0 0.0
  %788 = vmatprep.subr.mxu0 0.0
  %789 = vmatpush2.msra.mxu0 0.0
  %790 = vmatprep.subr.mxu0 0.0
  %791 = vmatpush2.msra.mxu0 0.0
  %792 = vmatprep.subr.mxu0 0.0
  %793 = vmatpush2.msra.mxu0 0.0
  %794 = vmatprep.subr.mxu0 0.0
  %795 = vmatpush2.msra.mxu0 0.0
  %796 = vmatprep.subr.mxu0 0.0
  %797 = vmatpush2.msra.mxu0 0.0
  %798 = vmatprep.subr.mxu0 0.0
  %799 = vmatpush2.msra.mxu0 0.0
  %800 = vmatprep.subr.mxu0 0.0
  %801 = vmatpush2.msra.mxu0 0.0
  %802 = vmatprep.subr.mxu0 0.0
  %803 = vmatpush2.msra.mxu0 0.0
  %804 = vmatprep.subr.mxu0 0.0
  %805 = vmatpush2.msra.mxu0 0.0
  %806 = vmatprep.subr.mxu0 0.0
  %807 = vmatpush2.msra.mxu0 0.0
  %808 = vmatprep.subr.mxu0 0.0
  %809 = vmatpush2.msra.mxu0 0.0
  %810 = vmatprep.mubr.f32.mxu0 0.0
  %811 = vmatmul.mubr.f32.gmra.mxu0 %v723
  %v812 = vpop.f32.mrf.mxu0
  %v813 = vadd.f32 0.0, %v812
  %v814 = vpop.f32.mrf.mxu0
  %815 = vmatprep.mubr.f32.mxu0 0.0
  %816 = vmatmul.mubr.f32.gmra.mxu0 %v726
  %v817 = vpop.f32.mrf.mxu0
  %v818 = vadd.f32 0.0, %v817
  %v819 = vpop.f32.mrf.mxu0
  %820 = vmatprep.mubr.f32.mxu0 0.0
  %821 = vmatmul.mubr.f32.gmra.mxu0 %v729
  %v822 = vpop.f32.mrf.mxu0
  %v823 = vadd.f32 0.0, %v822
  %v824 = vpop.f32.mrf.mxu0
  %825 = vmatprep.mubr.f32.mxu0 0.0
  %826 = vmatmul.mubr.f32.gmra.mxu0 %v732
  %v827 = vpop.f32.mrf.mxu0
  %v828 = vadd.f32 0.0, %v827
  %v829 = vpop.f32.mrf.mxu0
  %830 = vmatprep.mubr.f32.mxu0 0.0
  %831 = vmatmul.mubr.f32.gmra.mxu0 %v735
  %v832 = vpop.f32.mrf.mxu0
  %v833 = vadd.f32 0.0, %v832
  %v834 = vpop.f32.mrf.mxu0
  %835 = vmatprep.mubr.f32.mxu0 0.0
  %836 = vmatmul.mubr.f32.gmra.mxu0 %v738
  %v837 = vpop.f32.mrf.mxu0
  %v838 = vadd.f32 0.0, %v837
  %v839 = vpop.f32.mrf.mxu0
  %840 = vmatprep.mubr.f32.mxu0 0.0
  %841 = vmatmul.mubr.f32.gmra.mxu0 %v741
  %v842 = vpop.f32.mrf.mxu0
  %v843 = vadd.f32 0.0, %v842
  %v844 = vpop.f32.mrf.mxu0
  %845 = vmatprep.mubr.f32.mxu0 0.0
  %846 = vmatmul.mubr.f32.gmra.mxu0 %v744
  %v847 = vpop.f32.mrf.mxu0
  %v848 = vadd.f32 0.0, %v847
  %v849 = vpop.f32.mrf.mxu0
  %850 = vdwg.mxu0
  %v851 = vmax.f32 %v813, 0.0
  %v852 = vmax.f32 %v818, 0.0
  %v853 = vmax.f32 %v823, 0.0
  %v854 = vmax.f32 %v828, 0.0
  %v855 = vmax.f32 %v833, 0.0
  %v856 = vmax.f32 %v838, 0.0
  %v857 = vmax.f32 %v843, 0.0
  %v858 = vmax.f32 %v848, 0.0
  %v859 = vld [vmem:[%s1 + $0x2c0] sm:$0xff]
  %v860 = vld [vmem:[%s1 + $0x2c8] sm:$0xff]
  %v861 = vld [vmem:[%s1 + $0x2d0] sm:$0xff]
  %v862 = vld [vmem:[%s1 + $0x2d8] sm:$0xff]
  %v863 = vld [vmem:[%s1 + $0x2e0] sm:$0xff]
  %v864 = vld [vmem:[%s1 + $0x2e8] sm:$0xff]
  %v865 = vld [vmem:[%s1 + $0x2f0] sm:$0xff]
  %v866 = vld [vmem:[%s1 + $0x2f8] sm:$0xff]
  %v867 = vld [vmem:[%s1 + $0x300] sm:$0xff]
  %v868 = vld [vmem:[%s1 + $0x308] sm:$0xff]
  %v869 = vld [vmem:[%s1 + $0x310] sm:$0xff]
  %v870 = vld [vmem:[%s1 + $0x318] sm:$0xff]
  %v871 = vld [vmem:[%s1 + $0x320] sm:$0xff]
  %v872 = vld [vmem:[%s1 + $0x328] sm:$0xff]
  %v873 = vld [vmem:[%s1 + $0x330] sm:$0xff]
  %v874 = vld [vmem:[%s1 + $0x338] sm:$0xff]
  %883 = vrot.lane.b32.xlu0 %v851, 1
  %v884 = vpop.permute.xlu0 %883
  %885 = vrot.lane.b32.xlu0 %v852, 1
  %v886 = vpop.permute.xlu0 %885
  %887 = vrot.lane.b32.xlu0 %v853, 1
  %v888 = vpop.permute.xlu0 %887
  %889 = vrot.lane.b32.xlu0 %v854, 1
  %v890 = vpop.permute.xlu0 %889
  %891 = vrot.lane.b32.xlu0 %v855, 1
  %v892 = vpop.permute.xlu0 %891
  %893 = vrot.lane.b32.xlu0 %v856, 1
  %v894 = vpop.permute.xlu0 %893
  %895 = vrot.lane.b32.xlu0 %v857, 1
  %v896 = vpop.permute.xlu0 %895
  %897 = vrot.lane.b32.xlu0 %v858, 1
  %v898 = vpop.permute.xlu0 %897
  %v907 = vsel %vm31, 0.0, %v884
  %v908 = vsel %vm31, 0.0, %v886
  %v909 = vsel %vm31, 0.0, %v888
  %v910 = vsel %vm31, 0.0, %v890
  %v911 = vsel %vm31, 0.0, %v892
  %v912 = vsel %vm31, 0.0, %v894
  %v913 = vsel %vm31, 0.0, %v896
  %v914 = vsel %vm31, 0.0, %v898
  %v915 = vld [vmem:[%s1 + $0x340] ss:$0 sm:$0xff]
  %v916 = vmul.f32 %v907, %v915
  %v917 = vmul.f32 %v908, %v915
  %v918 = vmul.f32 %v909, %v915
  %v919 = vmul.f32 %v910, %v915
  %v920 = vmul.f32 %v911, %v915
  %v921 = vmul.f32 %v912, %v915
  %v922 = vmul.f32 %v913, %v915
  %v923 = vmul.f32 %v914, %v915
  %924 = vrot.lane.b32.xlu0 %v851, 127
  %v925 = vpop.permute.xlu0 %924
  %926 = vrot.lane.b32.xlu0 %v852, 127
  %v927 = vpop.permute.xlu0 %926
  %928 = vrot.lane.b32.xlu0 %v853, 127
  %v929 = vpop.permute.xlu0 %928
  %930 = vrot.lane.b32.xlu0 %v854, 127
  %v931 = vpop.permute.xlu0 %930
  %932 = vrot.lane.b32.xlu0 %v855, 127
  %v933 = vpop.permute.xlu0 %932
  %934 = vrot.lane.b32.xlu0 %v856, 127
  %v935 = vpop.permute.xlu0 %934
  %936 = vrot.lane.b32.xlu0 %v857, 127
  %v937 = vpop.permute.xlu0 %936
  %938 = vrot.lane.b32.xlu0 %v858, 127
  %v939 = vpop.permute.xlu0 %938
  %vm948 = vcmask 121856
  %v949 = vsel %vm948, %v925, 0.0
  %v950 = vsel %vm948, %v927, 0.0
  %v951 = vsel %vm948, %v929, 0.0
  %v952 = vsel %vm948, %v931, 0.0
  %v953 = vsel %vm948, %v933, 0.0
  %v954 = vsel %vm948, %v935, 0.0
  %v955 = vsel %vm948, %v937, 0.0
  %v956 = vsel %vm948, %v939, 0.0
  %v957 = vld [vmem:[%s1 + $0x342] ss:$0 sm:$0xff]
  %v958 = vmul.f32 %v949, %v957
  %v959 = vmul.f32 %v950, %v957
  %v960 = vmul.f32 %v951, %v957
  %v961 = vmul.f32 %v952, %v957
  %v962 = vmul.f32 %v953, %v957
  %v963 = vmul.f32 %v954, %v957
  %v964 = vmul.f32 %v955, %v957
  %v965 = vmul.f32 %v956, %v957
  %vm966 = vcmask 531456
  %v968 = vsel %vm966, %v860, 0
  %v971 = vsel %vm966, %v862, 0
  %v974 = vsel %vm966, %v864, 0
  %v977 = vsel %vm966, %v866, 0
  %v980 = vsel %vm966, %v868, 0
  %v983 = vsel %vm966, %v870, 0
  %v986 = vsel %vm966, %v872, 0
  %v989 = vsel %vm966, %v874, 0
  %991 = vmatprep.subr.mxu0 0.0
  %992 = vmatpush1.msra.mxu0 %v858
  %993 = vmatprep.subr.mxu0 0.0
  %994 = vmatpush1.msra.mxu0 %v857
  %995 = vmatprep.subr.mxu0 0.0
  %996 = vmatpush1.msra.mxu0 %v856
  %997 = vmatprep.subr.mxu0 0.0
  %998 = vmatpush1.msra.mxu0 %v855
  %999 = vmatprep.subr.mxu0 0.0
  %1000 = vmatpush1.msra.mxu0 %v854
  %1001 = vmatprep.subr.mxu0 0.0
  %1002 = vmatpush1.msra.mxu0 %v853
  %1003 = vmatprep.subr.mxu0 0.0
  %1004 = vmatpush1.msra.mxu0 %v852
  %1005 = vmatprep.subr.mxu0 0.0
  %1006 = vmatpush1.msra.mxu0 %v851
  %1007 = vmatprep.subr.mxu0 0.0
  %1008 = vmatpush1.msra.mxu0 %v923
  %1009 = vmatprep.subr.mxu0 0.0
  %1010 = vmatpush1.msra.mxu0 %v922
  %1011 = vmatprep.subr.mxu0 0.0
  %1012 = vmatpush1.msra.mxu0 %v921
  %1013 = vmatprep.subr.mxu0 0.0
  %1014 = vmatpush1.msra.mxu0 %v920
  %1015 = vmatprep.subr.mxu0 0.0
  %1016 = vmatpush1.msra.mxu0 %v919
  %1017 = vmatprep.subr.mxu0 0.0
  %1018 = vmatpush1.msra.mxu0 %v918
  %1019 = vmatprep.subr.mxu0 0.0
  %1020 = vmatpush1.msra.mxu0 %v917
  %1021 = vmatprep.subr.mxu0 0.0
  %1022 = vmatpush1.msra.mxu0 %v916
  %1023 = vmatprep.subr.mxu0 0.0
  %1024 = vmatpush2.msra.mxu0 0.0
  %1025 = vmatprep.subr.mxu0 0.0
  %1026 = vmatpush2.msra.mxu0 0.0
  %1027 = vmatprep.subr.mxu0 0.0
  %1028 = vmatpush2.msra.mxu0 0.0
  %1029 = vmatprep.subr.mxu0 0.0
  %1030 = vmatpush2.msra.mxu0 0.0
  %1031 = vmatprep.subr.mxu0 0.0
  %1032 = vmatpush2.msra.mxu0 0.0
  %1033 = vmatprep.subr.mxu0 0.0
  %1034 = vmatpush2.msra.mxu0 0.0
  %1035 = vmatprep.subr.mxu0 0.0
  %1036 = vmatpush2.msra.mxu0 0.0
  %1037 = vmatprep.subr.mxu0 0.0
  %1038 = vmatpush2.msra.mxu0 %v40
  %1039 = vmatprep.subr.mxu0 0.0
  %1040 = vmatpush2.msra.mxu0 %v965
  %1041 = vmatprep.subr.mxu0 0.0
  %1042 = vmatpush2.msra.mxu0 %v964
  %1043 = vmatprep.subr.mxu0 0.0
  %1044 = vmatpush2.msra.mxu0 %v963
  %1045 = vmatprep.subr.mxu0 0.0
  %1046 = vmatpush2.msra.mxu0 %v962
  %1047 = vmatprep.subr.mxu0 0.0
  %1048 = vmatpush2.msra.mxu0 %v961
  %1049 = vmatprep.subr.mxu0 0.0
  %1050 = vmatpush2.msra.mxu0 %v960
  %1051 = vmatprep.subr.mxu0 0.0
  %1052 = vmatpush2.msra.mxu0 %v959
  %1053 = vmatprep.subr.mxu0 0.0
  %1054 = vmatpush2.msra.mxu0 %v958
  %1055 = vmatprep.mubr.f32.mxu0 %v968
  %1056 = vmatmul.mubr.f32.gmra.mxu0 %v859
  %v1057 = vpop.f32.mrf.mxu0
  %v1058 = vadd.f32 0.0, %v1057
  %v1059 = vpop.f32.mrf.mxu0
  %1060 = vmatprep.mubr.f32.mxu0 %v971
  %1061 = vmatmul.mubr.f32.gmra.mxu0 %v861
  %v1062 = vpop.f32.mrf.mxu0
  %v1063 = vadd.f32 0.0, %v1062
  %v1064 = vpop.f32.mrf.mxu0
  %1065 = vmatprep.mubr.f32.mxu0 %v974
  %1066 = vmatmul.mubr.f32.gmra.mxu0 %v863
  %v1067 = vpop.f32.mrf.mxu0
  %v1068 = vadd.f32 0.0, %v1067
  %v1069 = vpop.f32.mrf.mxu0
  %1070 = vmatprep.mubr.f32.mxu0 %v977
  %1071 = vmatmul.mubr.f32.gmra.mxu0 %v865
  %v1072 = vpop.f32.mrf.mxu0
  %v1073 = vadd.f32 0.0, %v1072
  %v1074 = vpop.f32.mrf.mxu0
  %1075 = vmatprep.mubr.f32.mxu0 %v980
  %1076 = vmatmul.mubr.f32.gmra.mxu0 %v867
  %v1077 = vpop.f32.mrf.mxu0
  %v1078 = vadd.f32 0.0, %v1077
  %v1079 = vpop.f32.mrf.mxu0
  %1080 = vmatprep.mubr.f32.mxu0 %v983
  %1081 = vmatmul.mubr.f32.gmra.mxu0 %v869
  %v1082 = vpop.f32.mrf.mxu0
  %v1083 = vadd.f32 0.0, %v1082
  %v1084 = vpop.f32.mrf.mxu0
  %1085 = vmatprep.mubr.f32.mxu0 %v986
  %1086 = vmatmul.mubr.f32.gmra.mxu0 %v871
  %v1087 = vpop.f32.mrf.mxu0
  %v1088 = vadd.f32 0.0, %v1087
  %v1089 = vpop.f32.mrf.mxu0
  %1090 = vmatprep.mubr.f32.mxu0 %v989
  %1091 = vmatmul.mubr.f32.gmra.mxu0 %v873
  %v1092 = vpop.f32.mrf.mxu0
  %v1093 = vadd.f32 0.0, %v1092
  %v1094 = vpop.f32.mrf.mxu0
  %1095 = vdwg.mxu0
  %1104 = vrot.lane.b32.xlu0 %v1058, 127
  %v1105 = vpop.permute.xlu0 %1104
  %1106 = vrot.lane.b32.xlu0 %v1063, 127
  %v1107 = vpop.permute.xlu0 %1106
  %1108 = vrot.lane.b32.xlu0 %v1068, 127
  %v1109 = vpop.permute.xlu0 %1108
  %1110 = vrot.lane.b32.xlu0 %v1073, 127
  %v1111 = vpop.permute.xlu0 %1110
  %1112 = vrot.lane.b32.xlu0 %v1078, 127
  %v1113 = vpop.permute.xlu0 %1112
  %1114 = vrot.lane.b32.xlu0 %v1083, 127
  %v1115 = vpop.permute.xlu0 %1114
  %1116 = vrot.lane.b32.xlu0 %v1088, 127
  %v1117 = vpop.permute.xlu0 %1116
  %1118 = vrot.lane.b32.xlu0 %v1093, 127
  %v1119 = vpop.permute.xlu0 %1118
  %v1128 = vsel %vm948, %v1105, 0.0
  %v1129 = vsel %vm948, %v1107, 0.0
  %v1130 = vsel %vm948, %v1109, 0.0
  %v1131 = vsel %vm948, %v1111, 0.0
  %v1132 = vsel %vm948, %v1113, 0.0
  %v1133 = vsel %vm948, %v1115, 0.0
  %v1134 = vsel %vm948, %v1117, 0.0
  %v1135 = vsel %vm948, %v1119, 0.0
  %v1136 = vmax.f32 %v1058, %v1128
  %v1137 = vmax.f32 %v1063, %v1129
  %v1138 = vmax.f32 %v1068, %v1130
  %v1139 = vmax.f32 %v1073, %v1131
  %v1140 = vmax.f32 %v1078, %v1132
  %v1141 = vmax.f32 %v1083, %v1133
  %v1142 = vmax.f32 %v1088, %v1134
  %v1143 = vmax.f32 %v1093, %v1135
  %v1144 = vld [vmem:[%s1 + $0x350] sm:$0xff]
  %v1145 = vld [vmem:[%s1 + $0x360] sm:$0xff]
  %vm1146 = vcmask 130048
  %v1148 = vsel %vm1146, %v1136, 0
  %v1151 = vsel %vm1146, %v1137, 0
  %v1154 = vsel %vm1146, %v1138, 0
  %v1157 = vsel %vm1146, %v1139, 0
  %v1160 = vsel %vm1146, %v1140, 0
  %v1163 = vsel %vm1146, %v1141, 0
  %v1166 = vsel %vm1146, %v1142, 0
  %v1169 = vsel %vm1146, %v1143, 0
  %1171 = vmatprep.subr.mxu0 0.0
  %1172 = vmatpush1.msra.mxu0 0.0
  %1173 = vmatprep.subr.mxu0 0.0
  %1174 = vmatpush1.msra.mxu0 0.0
  %1175 = vmatprep.subr.mxu0 0.0
  %1176 = vmatpush1.msra.mxu0 0.0
  %1177 = vmatprep.subr.mxu0 0.0
  %1178 = vmatpush1.msra.mxu0 0.0
  %1179 = vmatprep.subr.mxu0 0.0
  %1180 = vmatpush1.msra.mxu0 0.0
  %1181 = vmatprep.subr.mxu0 0.0
  %1182 = vmatpush1.msra.mxu0 0.0
  %1183 = vmatprep.subr.mxu0 0.0
  %1184 = vmatpush1.msra.mxu0 0.0
  %1185 = vmatprep.subr.mxu0 0.0
  %1186 = vmatpush1.msra.mxu0 0.0
  %1187 = vmatprep.subr.mxu0 0.0
  %1188 = vmatpush1.msra.mxu0 0.0
  %1189 = vmatprep.subr.mxu0 0.0
  %1190 = vmatpush1.msra.mxu0 0.0
  %1191 = vmatprep.subr.mxu0 0.0
  %1192 = vmatpush1.msra.mxu0 0.0
  %1193 = vmatprep.subr.mxu0 0.0
  %1194 = vmatpush1.msra.mxu0 0.0
  %1195 = vmatprep.subr.mxu0 0.0
  %1196 = vmatpush1.msra.mxu0 0.0
  %1197 = vmatprep.subr.mxu0 0.0
  %1198 = vmatpush1.msra.mxu0 0.0
  %1199 = vmatprep.subr.mxu0 0.0
  %1200 = vmatpush1.msra.mxu0 %v1145
  %1201 = vmatprep.subr.mxu0 0.0
  %1202 = vmatpush1.msra.mxu0 %v1144
  %1203 = vmatprep.subr.mxu0 0.0
  %1204 = vmatpush2.msra.mxu0 0.0
  %1205 = vmatprep.subr.mxu0 0.0
  %1206 = vmatpush2.msra.mxu0 0.0
  %1207 = vmatprep.subr.mxu0 0.0
  %1208 = vmatpush2.msra.mxu0 0.0
  %1209 = vmatprep.subr.mxu0 0.0
  %1210 = vmatpush2.msra.mxu0 0.0
  %1211 = vmatprep.subr.mxu0 0.0
  %1212 = vmatpush2.msra.mxu0 0.0
  %1213 = vmatprep.subr.mxu0 0.0
  %1214 = vmatpush2.msra.mxu0 0.0
  %1215 = vmatprep.subr.mxu0 0.0
  %1216 = vmatpush2.msra.mxu0 0.0
  %1217 = vmatprep.subr.mxu0 0.0
  %1218 = vmatpush2.msra.mxu0 0.0
  %1219 = vmatprep.subr.mxu0 0.0
  %1220 = vmatpush2.msra.mxu0 0.0
  %1221 = vmatprep.subr.mxu0 0.0
  %1222 = vmatpush2.msra.mxu0 0.0
  %1223 = vmatprep.subr.mxu0 0.0
  %1224 = vmatpush2.msra.mxu0 0.0
  %1225 = vmatprep.subr.mxu0 0.0
  %1226 = vmatpush2.msra.mxu0 0.0
  %1227 = vmatprep.subr.mxu0 0.0
  %1228 = vmatpush2.msra.mxu0 0.0
  %1229 = vmatprep.subr.mxu0 0.0
  %1230 = vmatpush2.msra.mxu0 0.0
  %1231 = vmatprep.subr.mxu0 0.0
  %1232 = vmatpush2.msra.mxu0 0.0
  %1233 = vmatprep.subr.mxu0 0.0
  %1234 = vmatpush2.msra.mxu0 0.0
  %1235 = vmatprep.mubr.f32.mxu0 0.0
  %1236 = vmatmul.mubr.f32.gmra.mxu0 %v1148
  %v1237 = vpop.f32.mrf.mxu0
  %v1238 = vadd.f32 0.0, %v1237
  %v1239 = vpop.f32.mrf.mxu0
  %1240 = vmatprep.mubr.f32.mxu0 0.0
  %1241 = vmatmul.mubr.f32.gmra.mxu0 %v1151
  %v1242 = vpop.f32.mrf.mxu0
  %v1243 = vadd.f32 0.0, %v1242
  %v1244 = vpop.f32.mrf.mxu0
  %1245 = vmatprep.mubr.f32.mxu0 0.0
  %1246 = vmatmul.mubr.f32.gmra.mxu0 %v1154
  %v1247 = vpop.f32.mrf.mxu0
  %v1248 = vadd.f32 0.0, %v1247
  %v1249 = vpop.f32.mrf.mxu0
  %1250 = vmatprep.mubr.f32.mxu0 0.0
  %1251 = vmatmul.mubr.f32.gmra.mxu0 %v1157
  %v1252 = vpop.f32.mrf.mxu0
  %v1253 = vadd.f32 0.0, %v1252
  %v1254 = vpop.f32.mrf.mxu0
  %1255 = vmatprep.mubr.f32.mxu0 0.0
  %1256 = vmatmul.mubr.f32.gmra.mxu0 %v1160
  %v1257 = vpop.f32.mrf.mxu0
  %v1258 = vadd.f32 0.0, %v1257
  %v1259 = vpop.f32.mrf.mxu0
  %1260 = vmatprep.mubr.f32.mxu0 0.0
  %1261 = vmatmul.mubr.f32.gmra.mxu0 %v1163
  %v1262 = vpop.f32.mrf.mxu0
  %v1263 = vadd.f32 0.0, %v1262
  %v1264 = vpop.f32.mrf.mxu0
  %1265 = vmatprep.mubr.f32.mxu0 0.0
  %1266 = vmatmul.mubr.f32.gmra.mxu0 %v1166
  %v1267 = vpop.f32.mrf.mxu0
  %v1268 = vadd.f32 0.0, %v1267
  %v1269 = vpop.f32.mrf.mxu0
  %1270 = vmatprep.mubr.f32.mxu0 0.0
  %1271 = vmatmul.mubr.f32.gmra.mxu0 %v1169
  %v1272 = vpop.f32.mrf.mxu0
  %v1273 = vadd.f32 0.0, %v1272
  %v1274 = vpop.f32.mrf.mxu0
  %1275 = vdwg.mxu0
  %v1276 = vmax.f32 %v1238, 0.0
  %v1277 = vmax.f32 %v1243, 0.0
  %v1278 = vmax.f32 %v1248, 0.0
  %v1279 = vmax.f32 %v1253, 0.0
  %v1280 = vmax.f32 %v1258, 0.0
  %v1281 = vmax.f32 %v1263, 0.0
  %v1282 = vmax.f32 %v1268, 0.0
  %v1283 = vmax.f32 %v1273, 0.0
  %v1284 = vld [vmem:[%s1 + $0x370] sm:$0xff]
  %v1285 = vld [vmem:[%s1 + $0x378] sm:$0xff]
  %v1286 = vld [vmem:[%s1 + $0x380] sm:$0xff]
  %v1287 = vld [vmem:[%s1 + $0x388] sm:$0xff]
  %v1288 = vld [vmem:[%s1 + $0x390] sm:$0xff]
  %v1289 = vld [vmem:[%s1 + $0x398] sm:$0xff]
  %v1290 = vld [vmem:[%s1 + $0x3a0] sm:$0xff]
  %v1291 = vld [vmem:[%s1 + $0x3a8] sm:$0xff]
  %v1292 = vld [vmem:[%s1 + $0x3b0] sm:$0xff]
  %v1293 = vld [vmem:[%s1 + $0x3b8] sm:$0xff]
  %v1294 = vld [vmem:[%s1 + $0x3c0] sm:$0xff]
  %v1295 = vld [vmem:[%s1 + $0x3c8] sm:$0xff]
  %v1296 = vld [vmem:[%s1 + $0x3d0] sm:$0xff]
  %v1297 = vld [vmem:[%s1 + $0x3d8] sm:$0xff]
  %v1298 = vld [vmem:[%s1 + $0x3e0] sm:$0xff]
  %v1299 = vld [vmem:[%s1 + $0x3e8] sm:$0xff]
  %1308 = vrot.lane.b32.xlu0 %v1276, 127
  %v1309 = vpop.permute.xlu0 %1308
  %1310 = vrot.lane.b32.xlu0 %v1277, 127
  %v1311 = vpop.permute.xlu0 %1310
  %1312 = vrot.lane.b32.xlu0 %v1278, 127
  %v1313 = vpop.permute.xlu0 %1312
  %1314 = vrot.lane.b32.xlu0 %v1279, 127
  %v1315 = vpop.permute.xlu0 %1314
  %1316 = vrot.lane.b32.xlu0 %v1280, 127
  %v1317 = vpop.permute.xlu0 %1316
  %1318 = vrot.lane.b32.xlu0 %v1281, 127
  %v1319 = vpop.permute.xlu0 %1318
  %1320 = vrot.lane.b32.xlu0 %v1282, 127
  %v1321 = vpop.permute.xlu0 %1320
  %1322 = vrot.lane.b32.xlu0 %v1283, 127
  %v1323 = vpop.permute.xlu0 %1322
  %vm1332 = vcmask 56320
  %v1333 = vsel %vm1332, %v1309, 0.0
  %v1334 = vsel %vm1332, %v1311, 0.0
  %v1335 = vsel %vm1332, %v1313, 0.0
  %v1336 = vsel %vm1332, %v1315, 0.0
  %v1337 = vsel %vm1332, %v1317, 0.0
  %v1338 = vsel %vm1332, %v1319, 0.0
  %v1339 = vsel %vm1332, %v1321, 0.0
  %v1340 = vsel %vm1332, %v1323, 0.0
  %v1341 = vld [vmem:[%s1 + $0x3f1] ss:$0 sm:$0xff]
  %v1342 = vmul.f32 %v1333, %v1341
  %v1343 = vmul.f32 %v1334, %v1341
  %v1344 = vmul.f32 %v1335, %v1341
  %v1345 = vmul.f32 %v1336, %v1341
  %v1346 = vmul.f32 %v1337, %v1341
  %v1347 = vmul.f32 %v1338, %v1341
  %v1348 = vmul.f32 %v1339, %v1341
  %v1349 = vmul.f32 %v1340, %v1341
  %1350 = vrot.lane.b32.xlu0 %v1276, 126
  %v1351 = vpop.permute.xlu0 %1350
  %1352 = vrot.lane.b32.xlu0 %v1277, 126
  %v1353 = vpop.permute.xlu0 %1352
  %1354 = vrot.lane.b32.xlu0 %v1278, 126
  %v1355 = vpop.permute.xlu0 %1354
  %1356 = vrot.lane.b32.xlu0 %v1279, 126
  %v1357 = vpop.permute.xlu0 %1356
  %1358 = vrot.lane.b32.xlu0 %v1280, 126
  %v1359 = vpop.permute.xlu0 %1358
  %1360 = vrot.lane.b32.xlu0 %v1281, 126
  %v1361 = vpop.permute.xlu0 %1360
  %1362 = vrot.lane.b32.xlu0 %v1282, 126
  %v1363 = vpop.permute.xlu0 %1362
  %1364 = vrot.lane.b32.xlu0 %v1283, 126
  %v1365 = vpop.permute.xlu0 %1364
  %vm1374 = vcmask 48128
  %v1375 = vsel %vm1374, %v1351, 0.0
  %v1376 = vsel %vm1374, %v1353, 0.0
  %v1377 = vsel %vm1374, %v1355, 0.0
  %v1378 = vsel %vm1374, %v1357, 0.0
  %v1379 = vsel %vm1374, %v1359, 0.0
  %v1380 = vsel %vm1374, %v1361, 0.0
  %v1381 = vsel %vm1374, %v1363, 0.0
  %v1382 = vsel %vm1374, %v1365, 0.0
  %v1383 = vld [vmem:[%s1 + $0x3f2] ss:$0 sm:$0xff]
  %v1384 = vmul.f32 %v1375, %v1383
  %v1385 = vmul.f32 %v1376, %v1383
  %v1386 = vmul.f32 %v1377, %v1383
  %v1387 = vmul.f32 %v1378, %v1383
  %v1388 = vmul.f32 %v1379, %v1383
  %v1389 = vmul.f32 %v1380, %v1383
  %v1390 = vmul.f32 %v1381, %v1383
  %v1391 = vmul.f32 %v1382, %v1383
  %v1393 = vsel %vm966, %v1285, 0
  %v1396 = vsel %vm966, %v1287, 0
  %v1399 = vsel %vm966, %v1289, 0
  %v1402 = vsel %vm966, %v1291, 0
  %v1405 = vsel %vm966, %v1293, 0
  %v1408 = vsel %vm966, %v1295, 0
  %v1411 = vsel %vm966, %v1297, 0
  %v1414 = vsel %vm966, %v1299, 0
  %1416 = vmatprep.subr.mxu0 0.0
  %1417 = vmatpush1.msra.mxu0 %v1349
  %1418 = vmatprep.subr.mxu0 0.0
  %1419 = vmatpush1.msra.mxu0 %v1348
  %1420 = vmatprep.subr.mxu0 0.0
  %1421 = vmatpush1.msra.mxu0 %v1347
  %1422 = vmatprep.subr.mxu0 0.0
  %1423 = vmatpush1.msra.mxu0 %v1346
  %1424 = vmatprep.subr.mxu0 0.0
  %1425 = vmatpush1.msra.mxu0 %v1345
  %1426 = vmatprep.subr.mxu0 0.0
  %1427 = vmatpush1.msra.mxu0 %v1344
  %1428 = vmatprep.subr.mxu0 0.0
  %1429 = vmatpush1.msra.mxu0 %v1343
  %1430 = vmatprep.subr.mxu0 0.0
  %1431 = vmatpush1.msra.mxu0 %v1342
  %1432 = vmatprep.subr.mxu0 0.0
  %1433 = vmatpush1.msra.mxu0 %v1283
  %1434 = vmatprep.subr.mxu0 0.0
  %1435 = vmatpush1.msra.mxu0 %v1282
  %1436 = vmatprep.subr.mxu0 0.0
  %1437 = vmatpush1.msra.mxu0 %v1281
  %1438 = vmatprep.subr.mxu0 0.0
  %1439 = vmatpush1.msra.mxu0 %v1280
  %1440 = vmatprep.subr.mxu0 0.0
  %1441 = vmatpush1.msra.mxu0 %v1279
  %1442 = vmatprep.subr.mxu0 0.0
  %1443 = vmatpush1.msra.mxu0 %v1278
  %1444 = vmatprep.subr.mxu0 0.0
  %1445 = vmatpush1.msra.mxu0 %v1277
  %1446 = vmatprep.subr.mxu0 0.0
  %1447 = vmatpush1.msra.mxu0 %v1276
  %1448 = vmatprep.subr.mxu0 0.0
  %1449 = vmatpush2.msra.mxu0 0.0
  %1450 = vmatprep.subr.mxu0 0.0
  %1451 = vmatpush2.msra.mxu0 0.0
  %1452 = vmatprep.subr.mxu0 0.0
  %1453 = vmatpush2.msra.mxu0 0.0
  %1454 = vmatprep.subr.mxu0 0.0
  %1455 = vmatpush2.msra.mxu0 0.0
  %1456 = vmatprep.subr.mxu0 0.0
  %1457 = vmatpush2.msra.mxu0 0.0
  %1458 = vmatprep.subr.mxu0 0.0
  %1459 = vmatpush2.msra.mxu0 0.0
  %1460 = vmatprep.subr.mxu0 0.0
  %1461 = vmatpush2.msra.mxu0 0.0
  %1462 = vmatprep.subr.mxu0 0.0
  %1463 = vmatpush2.msra.mxu0 %v40
  %1464 = vmatprep.subr.mxu0 0.0
  %1465 = vmatpush2.msra.mxu0 %v1391
  %1466 = vmatprep.subr.mxu0 0.0
  %1467 = vmatpush2.msra.mxu0 %v1390
  %1468 = vmatprep.subr.mxu0 0.0
  %1469 = vmatpush2.msra.mxu0 %v1389
  %1470 = vmatprep.subr.mxu0 0.0
  %1471 = vmatpush2.msra.mxu0 %v1388
  %1472 = vmatprep.subr.mxu0 0.0
  %1473 = vmatpush2.msra.mxu0 %v1387
  %1474 = vmatprep.subr.mxu0 0.0
  %1475 = vmatpush2.msra.mxu0 %v1386
  %1476 = vmatprep.subr.mxu0 0.0
  %1477 = vmatpush2.msra.mxu0 %v1385
  %1478 = vmatprep.subr.mxu0 0.0
  %1479 = vmatpush2.msra.mxu0 %v1384
  %1480 = vmatprep.mubr.f32.mxu0 %v1393
  %1481 = vmatmul.mubr.f32.gmra.mxu0 %v1284
  %v1482 = vpop.f32.mrf.mxu0
  %v1483 = vadd.f32 0.0, %v1482
  %v1484 = vpop.f32.mrf.mxu0
  %1485 = vmatprep.mubr.f32.mxu0 %v1396
  %1486 = vmatmul.mubr.f32.gmra.mxu0 %v1286
  %v1487 = vpop.f32.mrf.mxu0
  %v1488 = vadd.f32 0.0, %v1487
  %v1489 = vpop.f32.mrf.mxu0
  %1490 = vmatprep.mubr.f32.mxu0 %v1399
  %1491 = vmatmul.mubr.f32.gmra.mxu0 %v1288
  %v1492 = vpop.f32.mrf.mxu0
  %v1493 = vadd.f32 0.0, %v1492
  %v1494 = vpop.f32.mrf.mxu0
  %1495 = vmatprep.mubr.f32.mxu0 %v1402
  %1496 = vmatmul.mubr.f32.gmra.mxu0 %v1290
  %v1497 = vpop.f32.mrf.mxu0
  %v1498 = vadd.f32 0.0, %v1497
  %v1499 = vpop.f32.mrf.mxu0
  %1500 = vmatprep.mubr.f32.mxu0 %v1405
  %1501 = vmatmul.mubr.f32.gmra.mxu0 %v1292
  %v1502 = vpop.f32.mrf.mxu0
  %v1503 = vadd.f32 0.0, %v1502
  %v1504 = vpop.f32.mrf.mxu0
  %1505 = vmatprep.mubr.f32.mxu0 %v1408
  %1506 = vmatmul.mubr.f32.gmra.mxu0 %v1294
  %v1507 = vpop.f32.mrf.mxu0
  %v1508 = vadd.f32 0.0, %v1507
  %v1509 = vpop.f32.mrf.mxu0
  %1510 = vmatprep.mubr.f32.mxu0 %v1411
  %1511 = vmatmul.mubr.f32.gmra.mxu0 %v1296
  %v1512 = vpop.f32.mrf.mxu0
  %v1513 = vadd.f32 0.0, %v1512
  %v1514 = vpop.f32.mrf.mxu0
  %1515 = vmatprep.mubr.f32.mxu0 %v1414
  %1516 = vmatmul.mubr.f32.gmra.mxu0 %v1298
  %v1517 = vpop.f32.mrf.mxu0
  %v1518 = vadd.f32 0.0, %v1517
  %v1519 = vpop.f32.mrf.mxu0
  %1520 = vdwg.mxu0
  %1529 = vrot.lane.b32.xlu0 %v1483, 127
  %v1530 = vpop.permute.xlu0 %1529
  %1531 = vrot.lane.b32.xlu0 %v1488, 127
  %v1532 = vpop.permute.xlu0 %1531
  %1533 = vrot.lane.b32.xlu0 %v1493, 127
  %v1534 = vpop.permute.xlu0 %1533
  %1535 = vrot.lane.b32.xlu0 %v1498, 127
  %v1536 = vpop.permute.xlu0 %1535
  %1537 = vrot.lane.b32.xlu0 %v1503, 127
  %v1538 = vpop.permute.xlu0 %1537
  %1539 = vrot.lane.b32.xlu0 %v1508, 127
  %v1540 = vpop.permute.xlu0 %1539
  %1541 = vrot.lane.b32.xlu0 %v1513, 127
  %v1542 = vpop.permute.xlu0 %1541
  %1543 = vrot.lane.b32.xlu0 %v1518, 127
  %v1544 = vpop.permute.xlu0 %1543
  %v1553 = vsel %vm1332, %v1530, 0.0
  %v1554 = vsel %vm1332, %v1532, 0.0
  %v1555 = vsel %vm1332, %v1534, 0.0
  %v1556 = vsel %vm1332, %v1536, 0.0
  %v1557 = vsel %vm1332, %v1538, 0.0
  %v1558 = vsel %vm1332, %v1540, 0.0
  %v1559 = vsel %vm1332, %v1542, 0.0
  %v1560 = vsel %vm1332, %v1544, 0.0
  %v1561 = vmax.f32 %v1483, %v1553
  %v1562 = vmax.f32 %v1488, %v1554
  %v1563 = vmax.f32 %v1493, %v1555
  %v1564 = vmax.f32 %v1498, %v1556
  %v1565 = vmax.f32 %v1503, %v1557
  %v1566 = vmax.f32 %v1508, %v1558
  %v1567 = vmax.f32 %v1513, %v1559
  %v1568 = vmax.f32 %v1518, %v1560
  %v1569 = vld [vmem:[%s1 + $0x400] sm:$0xff]
  %vm1570 = vcmask 64512
  %v1572 = vsel %vm1570, %v1561, 0
  %v1575 = vsel %vm1570, %v1562, 0
  %v1578 = vsel %vm1570, %v1563, 0
  %v1581 = vsel %vm1570, %v1564, 0
  %v1584 = vsel %vm1570, %v1565, 0
  %v1587 = vsel %vm1570, %v1566, 0
  %v1590 = vsel %vm1570, %v1567, 0
  %v1593 = vsel %vm1570, %v1568, 0
  %1595 = vmatprep.subr.mxu0 0.0
  %1596 = vmatpush1.msra.mxu0 0.0
  %1597 = vmatprep.subr.mxu0 0.0
  %1598 = vmatpush1.msra.mxu0 0.0
  %1599 = vmatprep.subr.mxu0 0.0
  %1600 = vmatpush1.msra.mxu0 0.0
  %1601 = vmatprep.subr.mxu0 0.0
  %1602 = vmatpush1.msra.mxu0 0.0
  %1603 = vmatprep.subr.mxu0 0.0
  %1604 = vmatpush1.msra.mxu0 0.0
  %1605 = vmatprep.subr.mxu0 0.0
  %1606 = vmatpush1.msra.mxu0 0.0
  %1607 = vmatprep.subr.mxu0 0.0
  %1608 = vmatpush1.msra.mxu0 0.0
  %1609 = vmatprep.subr.mxu0 0.0
  %1610 = vmatpush1.msra.mxu0 0.0
  %1611 = vmatprep.subr.mxu0 0.0
  %1612 = vmatpush1.msra.mxu0 0.0
  %1613 = vmatprep.subr.mxu0 0.0
  %1614 = vmatpush1.msra.mxu0 0.0
  %1615 = vmatprep.subr.mxu0 0.0
  %1616 = vmatpush1.msra.mxu0 0.0
  %1617 = vmatprep.subr.mxu0 0.0
  %1618 = vmatpush1.msra.mxu0 0.0
  %1619 = vmatprep.subr.mxu0 0.0
  %1620 = vmatpush1.msra.mxu0 0.0
  %1621 = vmatprep.subr.mxu0 0.0
  %1622 = vmatpush1.msra.mxu0 0.0
  %1623 = vmatprep.subr.mxu0 0.0
  %1624 = vmatpush1.msra.mxu0 0.0
  %1625 = vmatprep.subr.mxu0 0.0
  %1626 = vmatpush1.msra.mxu0 %v1569
  %1627 = vmatprep.subr.mxu0 0.0
  %1628 = vmatpush2.msra.mxu0 0.0
  %1629 = vmatprep.subr.mxu0 0.0
  %1630 = vmatpush2.msra.mxu0 0.0
  %1631 = vmatprep.subr.mxu0 0.0
  %1632 = vmatpush2.msra.mxu0 0.0
  %1633 = vmatprep.subr.mxu0 0.0
  %1634 = vmatpush2.msra.mxu0 0.0
  %1635 = vmatprep.subr.mxu0 0.0
  %1636 = vmatpush2.msra.mxu0 0.0
  %1637 = vmatprep.subr.mxu0 0.0
  %1638 = vmatpush2.msra.mxu0 0.0
  %1639 = vmatprep.subr.mxu0 0.0
  %1640 = vmatpush2.msra.mxu0 0.0
  %1641 = vmatprep.subr.mxu0 0.0
  %1642 = vmatpush2.msra.mxu0 0.0
  %1643 = vmatprep.subr.mxu0 0.0
  %1644 = vmatpush2.msra.mxu0 0.0
  %1645 = vmatprep.subr.mxu0 0.0
  %1646 = vmatpush2.msra.mxu0 0.0
  %1647 = vmatprep.subr.mxu0 0.0
  %1648 = vmatpush2.msra.mxu0 0.0
  %1649 = vmatprep.subr.mxu0 0.0
  %1650 = vmatpush2.msra.mxu0 0.0
  %1651 = vmatprep.subr.mxu0 0.0
  %1652 = vmatpush2.msra.mxu0 0.0
  %1653 = vmatprep.subr.mxu0 0.0
  %1654 = vmatpush2.msra.mxu0 0.0
  %1655 = vmatprep.subr.mxu0 0.0
  %1656 = vmatpush2.msra.mxu0 0.0
  %1657 = vmatprep.subr.mxu0 0.0
  %1658 = vmatpush2.msra.mxu0 0.0
  %1659 = vmatprep.mubr.f32.mxu0 0.0
  %1660 = vmatmul.mubr.f32.gmra.mxu0 %v1572
  %v1661 = vpop.f32.mrf.mxu0
  %v1662 = vadd.f32 0.0, %v1661
  %v1663 = vpop.f32.mrf.mxu0
  %1664 = vmatprep.mubr.f32.mxu0 0.0
  %1665 = vmatmul.mubr.f32.gmra.mxu0 %v1575
  %v1666 = vpop.f32.mrf.mxu0
  %v1667 = vadd.f32 0.0, %v1666
  %v1668 = vpop.f32.mrf.mxu0
  %1669 = vmatprep.mubr.f32.mxu0 0.0
  %1670 = vmatmul.mubr.f32.gmra.mxu0 %v1578
  %v1671 = vpop.f32.mrf.mxu0
  %v1672 = vadd.f32 0.0, %v1671
  %v1673 = vpop.f32.mrf.mxu0
  %1674 = vmatprep.mubr.f32.mxu0 0.0
  %1675 = vmatmul.mubr.f32.gmra.mxu0 %v1581
  %v1676 = vpop.f32.mrf.mxu0
  %v1677 = vadd.f32 0.0, %v1676
  %v1678 = vpop.f32.mrf.mxu0
  %1679 = vmatprep.mubr.f32.mxu0 0.0
  %1680 = vmatmul.mubr.f32.gmra.mxu0 %v1584
  %v1681 = vpop.f32.mrf.mxu0
  %v1682 = vadd.f32 0.0, %v1681
  %v1683 = vpop.f32.mrf.mxu0
  %1684 = vmatprep.mubr.f32.mxu0 0.0
  %1685 = vmatmul.mubr.f32.gmra.mxu0 %v1587
  %v1686 = vpop.f32.mrf.mxu0
  %v1687 = vadd.f32 0.0, %v1686
  %v1688 = vpop.f32.mrf.mxu0
  %1689 = vmatprep.mubr.f32.mxu0 0.0
  %1690 = vmatmul.mubr.f32.gmra.mxu0 %v1590
  %v1691 = vpop.f32.mrf.mxu0
  %v1692 = vadd.f32 0.0, %v1691
  %v1693 = vpop.f32.mrf.mxu0
  %1694 = vmatprep.mubr.f32.mxu0 0.0
  %1695 = vmatmul.mubr.f32.gmra.mxu0 %v1593
  %v1696 = vpop.f32.mrf.mxu0
  %v1697 = vadd.f32 0.0, %v1696
  %v1698 = vpop.f32.mrf.mxu0
  %1699 = vdwg.mxu0
  %v1700 = vmax.f32 %v1662, 0.0
  %v1701 = vmax.f32 %v1667, 0.0
  %v1702 = vmax.f32 %v1672, 0.0
  %v1703 = vmax.f32 %v1677, 0.0
  %v1704 = vmax.f32 %v1682, 0.0
  %v1705 = vmax.f32 %v1687, 0.0
  %v1706 = vmax.f32 %v1692, 0.0
  %v1707 = vmax.f32 %v1697, 0.0
  %v1708 = vld [vmem:[%s1 + $0x410] sm:$0xff]
  %v1709 = vld [vmem:[%s1 + $0x420] sm:$0xff]
  %v1711 = vsel %vm966, %v1708, 0
  %v1714 = vsel %vm966, %v1709, 0
  %1716 = vmatprep.subr.mxu0 0.0
  %1717 = vmatpush1.msra.mxu0 0.0
  %1718 = vmatprep.subr.mxu0 0.0
  %1719 = vmatpush1.msra.mxu0 0.0
  %1720 = vmatprep.subr.mxu0 0.0
  %1721 = vmatpush1.msra.mxu0 0.0
  %1722 = vmatprep.subr.mxu0 0.0
  %1723 = vmatpush1.msra.mxu0 0.0
  %1724 = vmatprep.subr.mxu0 0.0
  %1725 = vmatpush1.msra.mxu0 0.0
  %1726 = vmatprep.subr.mxu0 0.0
  %1727 = vmatpush1.msra.mxu0 0.0
  %1728 = vmatprep.subr.mxu0 0.0
  %1729 = vmatpush1.msra.mxu0 0.0
  %1730 = vmatprep.subr.mxu0 0.0
  %1731 = vmatpush1.msra.mxu0 %v40
  %1732 = vmatprep.subr.mxu0 0.0
  %1733 = vmatpush1.msra.mxu0 %v1707
  %1734 = vmatprep.subr.mxu0 0.0
  %1735 = vmatpush1.msra.mxu0 %v1706
  %1736 = vmatprep.subr.mxu0 0.0
  %1737 = vmatpush1.msra.mxu0 %v1705
  %1738 = vmatprep.subr.mxu0 0.0
  %1739 = vmatpush1.msra.mxu0 %v1704
  %1740 = vmatprep.subr.mxu0 0.0
  %1741 = vmatpush1.msra.mxu0 %v1703
  %1742 = vmatprep.subr.mxu0 0.0
  %1743 = vmatpush1.msra.mxu0 %v1702
  %1744 = vmatprep.subr.mxu0 0.0
  %1745 = vmatpush1.msra.mxu0 %v1701
  %1746 = vmatprep.subr.mxu0 0.0
  %1747 = vmatpush1.msra.mxu0 %v1700
  %1748 = vmatprep.subr.mxu0 0.0
  %1749 = vmatpush2.msra.mxu0 0.0
  %1750 = vmatprep.subr.mxu0 0.0
  %1751 = vmatpush2.msra.mxu0 0.0
  %1752 = vmatprep.subr.mxu0 0.0
  %1753 = vmatpush2.msra.mxu0 0.0
  %1754 = vmatprep.subr.mxu0 0.0
  %1755 = vmatpush2.msra.mxu0 0.0
  %1756 = vmatprep.subr.mxu0 0.0
  %1757 = vmatpush2.msra.mxu0 0.0
  %1758 = vmatprep.subr.mxu0 0.0
  %1759 = vmatpush2.msra.mxu0 0.0
  %1760 = vmatprep.subr.mxu0 0.0
  %1761 = vmatpush2.msra.mxu0 0.0
  %1762 = vmatprep.subr.mxu0 0.0
  %1763 = vmatpush2.msra.mxu0 0.0
  %1764 = vmatprep.subr.mxu0 0.0
  %1765 = vmatpush2.msra.mxu0 0.0
  %1766 = vmatprep.subr.mxu0 0.0
  %1767 = vmatpush2.msra.mxu0 0.0
  %1768 = vmatprep.subr.mxu0 0.0
  %1769 = vmatpush2.msra.mxu0 0.0
  %1770 = vmatprep.subr.mxu0 0.0
  %1771 = vmatpush2.msra.mxu0 0.0
  %1772 = vmatprep.subr.mxu0 0.0
  %1773 = vmatpush2.msra.mxu0 0.0
  %1774 = vmatprep.subr.mxu0 0.0
  %1775 = vmatpush2.msra.mxu0 0.0
  %1776 = vmatprep.subr.mxu0 0.0
  %1777 = vmatpush2.msra.mxu0 0.0
  %1778 = vmatprep.subr.mxu0 0.0
  %1779 = vmatpush2.msra.mxu0 0.0
  %1780 = vmatprep.mubr.f32.mxu0 0.0
  %1781 = vmatmul.mubr.f32.gmra.mxu0 %v1711
  %v1782 = vpop.f32.mrf.mxu0
  %v1783 = vadd.f32 0.0, %v1782
  %v1784 = vpop.f32.mrf.mxu0
  %1785 = vmatprep.mubr.f32.mxu0 0.0
  %1786 = vmatmul.mubr.f32.gmra.mxu0 %v1714
  %v1787 = vpop.f32.mrf.mxu0
  %v1788 = vadd.f32 0.0, %v1787
  %v1789 = vpop.f32.mrf.mxu0
  %1790 = vdwg.mxu0
  %v1791 = vmax.f32 %v1783, 0.0
  %v1792 = vmax.f32 %v1788, 0.0
  %v1793 = vld [vmem:[%s1 + $0x430] sm:$0xff]
  %v1794 = vld [vmem:[%s1 + $0x440] sm:$0xff]
  %v1795 = vld [vmem:[%s1 + $0x450] sm:$0xff]
  %v1796 = vld [vmem:[%s1 + $0x460] sm:$0xff]
  %v1797 = vld [vmem:[%s1 + $0x470] sm:$0xff]
  %v1798 = vld [vmem:[%s1 + $0x480] sm:$0xff]
  %v1799 = vld [vmem:[%s1 + $0x490] sm:$0xff]
  %v1800 = vld [vmem:[%s1 + $0x4a0] sm:$0xff]
  %vm1801 = vcmask 138240
  %v1803 = vsel %vm1801, %v1793, 0
  %v1806 = vsel %vm1801, %v1794, 0
  %v1809 = vsel %vm1801, %v1795, 0
  %v1812 = vsel %vm1801, %v1796, 0
  %v1815 = vsel %vm1801, %v1797, 0
  %v1818 = vsel %vm1801, %v1798, 0
  %v1821 = vsel %vm1801, %v1799, 0
  %v1824 = vsel %vm1801, %v1800, 0
  %1826 = vmatprep.subr.mxu0 0.0
  %1827 = vmatpush1.msra.mxu0 0.0
  %1828 = vmatprep.subr.mxu0 0.0
  %1829 = vmatpush1.msra.mxu0 0.0
  %1830 = vmatprep.subr.mxu0 0.0
  %1831 = vmatpush1.msra.mxu0 0.0
  %1832 = vmatprep.subr.mxu0 0.0
  %1833 = vmatpush1.msra.mxu0 0.0
  %1834 = vmatprep.subr.mxu0 0.0
  %1835 = vmatpush1.msra.mxu0 0.0
  %1836 = vmatprep.subr.mxu0 0.0
  %1837 = vmatpush1.msra.mxu0 0.0
  %1838 = vmatprep.subr.mxu0 0.0
  %1839 = vmatpush1.msra.mxu0 0.0
  %1840 = vmatprep.subr.mxu0 0.0
  %1841 = vmatpush1.msra.mxu0 0.0
  %1842 = vmatprep.subr.mxu0 0.0
  %1843 = vmatpush1.msra.mxu0 0.0
  %1844 = vmatprep.subr.mxu0 0.0
  %1845 = vmatpush1.msra.mxu0 0.0
  %1846 = vmatprep.subr.mxu0 0.0
  %1847 = vmatpush1.msra.mxu0 0.0
  %1848 = vmatprep.subr.mxu0 0.0
  %1849 = vmatpush1.msra.mxu0 0.0
  %1850 = vmatprep.subr.mxu0 0.0
  %1851 = vmatpush1.msra.mxu0 0.0
  %1852 = vmatprep.subr.mxu0 0.0
  %1853 = vmatpush1.msra.mxu0 %v40
  %1854 = vmatprep.subr.mxu0 0.0
  %1855 = vmatpush1.msra.mxu0 %v1792
  %1856 = vmatprep.subr.mxu0 0.0
  %1857 = vmatpush1.msra.mxu0 %v1791
  %1858 = vmatprep.subr.mxu0 0.0
  %1859 = vmatpush2.msra.mxu0 0.0
  %1860 = vmatprep.subr.mxu0 0.0
  %1861 = vmatpush2.msra.mxu0 0.0
  %1862 = vmatprep.subr.mxu0 0.0
  %1863 = vmatpush2.msra.mxu0 0.0
  %1864 = vmatprep.subr.mxu0 0.0
  %1865 = vmatpush2.msra.mxu0 0.0
  %1866 = vmatprep.subr.mxu0 0.0
  %1867 = vmatpush2.msra.mxu0 0.0
  %1868 = vmatprep.subr.mxu0 0.0
  %1869 = vmatpush2.msra.mxu0 0.0
  %1870 = vmatprep.subr.mxu0 0.0
  %1871 = vmatpush2.msra.mxu0 0.0
  %1872 = vmatprep.subr.mxu0 0.0
  %1873 = vmatpush2.msra.mxu0 0.0
  %1874 = vmatprep.subr.mxu0 0.0
  %1875 = vmatpush2.msra.mxu0 0.0
  %1876 = vmatprep.subr.mxu0 0.0
  %1877 = vmatpush2.msra.mxu0 0.0
  %1878 = vmatprep.subr.mxu0 0.0
  %1879 = vmatpush2.msra.mxu0 0.0
  %1880 = vmatprep.subr.mxu0 0.0
  %1881 = vmatpush2.msra.mxu0 0.0
  %1882 = vmatprep.subr.mxu0 0.0
  %1883 = vmatpush2.msra.mxu0 0.0
  %1884 = vmatprep.subr.mxu0 0.0
  %1885 = vmatpush2.msra.mxu0 0.0
  %1886 = vmatprep.subr.mxu0 0.0
  %1887 = vmatpush2.msra.mxu0 0.0
  %1888 = vmatprep.subr.mxu0 0.0
  %1889 = vmatpush2.msra.mxu0 0.0
  %1890 = vmatprep.mubr.f32.mxu0 0.0
  %1891 = vmatmul.mubr.f32.gmra.mxu0 %v1803
  %v1892 = vpop.f32.mrf.mxu0
  %v1893 = vadd.f32 0.0, %v1892
  %v1894 = vpop.f32.mrf.mxu0
  %1895 = vmatprep.mubr.f32.mxu0 0.0
  %1896 = vmatmul.mubr.f32.gmra.mxu0 %v1806
  %v1897 = vpop.f32.mrf.mxu0
  %v1898 = vadd.f32 0.0, %v1897
  %v1899 = vpop.f32.mrf.mxu0
  %1900 = vmatprep.mubr.f32.mxu0 0.0
  %1901 = vmatmul.mubr.f32.gmra.mxu0 %v1809
  %v1902 = vpop.f32.mrf.mxu0
  %v1903 = vadd.f32 0.0, %v1902
  %v1904 = vpop.f32.mrf.mxu0
  %1905 = vmatprep.mubr.f32.mxu0 0.0
  %1906 = vmatmul.mubr.f32.gmra.mxu0 %v1812
  %v1907 = vpop.f32.mrf.mxu0
  %v1908 = vadd.f32 0.0, %v1907
  %v1909 = vpop.f32.mrf.mxu0
  %1910 = vmatprep.mubr.f32.mxu0 0.0
  %1911 = vmatmul.mubr.f32.gmra.mxu0 %v1815
  %v1912 = vpop.f32.mrf.mxu0
  %v1913 = vadd.f32 0.0, %v1912
  %v1914 = vpop.f32.mrf.mxu0
  %1915 = vmatprep.mubr.f32.mxu0 0.0
  %1916 = vmatmul.mubr.f32.gmra.mxu0 %v1818
  %v1917 = vpop.f32.mrf.mxu0
  %v1918 = vadd.f32 0.0, %v1917
  %v1919 = vpop.f32.mrf.mxu0
  %1920 = vmatprep.mubr.f32.mxu0 0.0
  %1921 = vmatmul.mubr.f32.gmra.mxu0 %v1821
  %v1922 = vpop.f32.mrf.mxu0
  %v1923 = vadd.f32 0.0, %v1922
  %v1924 = vpop.f32.mrf.mxu0
  %1925 = vmatprep.mubr.f32.mxu0 0.0
  %1926 = vmatmul.mubr.f32.gmra.mxu0 %v1824
  %v1927 = vpop.f32.mrf.mxu0
  %v1928 = vadd.f32 0.0, %v1927
  %v1929 = vpop.f32.mrf.mxu0
  %1930 = vdwg.mxu0
  %v1931 = vmax.f32 %v1893, 0.0
  %v1932 = vmax.f32 %v1898, 0.0
  %v1933 = vmax.f32 %v1903, 0.0
  %v1934 = vmax.f32 %v1908, 0.0
  %v1935 = vmax.f32 %v1913, 0.0
  %v1936 = vmax.f32 %v1918, 0.0
  %v1937 = vmax.f32 %v1923, 0.0
  %v1938 = vmax.f32 %v1928, 0.0
  %v1939 = vld [vmem:[%s1 + $0x4b0] sm:$0xff]
  %v1940 = vld [vmem:[%s1 + $0x4c0] sm:$0xff]
  %v1941 = vld [vmem:[%s1 + $0x4d0] sm:$0xff]
  %v1942 = vld [vmem:[%s1 + $0x4e0] sm:$0xff]
  %v1943 = vld [vmem:[%s1 + $0x4f0] sm:$0xff]
  %v1944 = vld [vmem:[%s1 + $0x500] sm:$0xff]
  %v1945 = vld [vmem:[%s1 + $0x510] sm:$0xff]
  %v1946 = vld [vmem:[%s1 + $0x520] sm:$0xff]
  %v1947 = vld [vmem:[%s1 + $0x530] sm:$0xff]
  %v1948 = vld [vmem:[%s1 + $0x540] sm:$0xff]
  %v1949 = vld [vmem:[%s1 + $0x550] sm:$0xff]
  %v1950 = vld [vmem:[%s1 + $0x560] sm:$0xff]
  %v1951 = vld [vmem:[%s1 + $0x570] sm:$0xff]
  %v1952 = vld [vmem:[%s1 + $0x580] sm:$0xff]
  %v1953 = vld [vmem:[%s1 + $0x590] sm:$0xff]
  %v1954 = vld [vmem:[%s1 + $0x5a0] sm:$0xff]
  %v1955 = vld [vmem:[%s1 + $0x5b0] sm:$0xff]
  %v1956 = vld [vmem:[%s1 + $0x5c0] sm:$0xff]
  %v1957 = vld [vmem:[%s1 + $0x5d0] sm:$0xff]
  %v1958 = vld [vmem:[%s1 + $0x5e0] sm:$0xff]
  %v1959 = vld [vmem:[%s1 + $0x5f0] sm:$0xff]
  %v1960 = vld [vmem:[%s1 + $0x600] sm:$0xff]
  %v1961 = vld [vmem:[%s1 + $0x610] sm:$0xff]
  %v1962 = vld [vmem:[%s1 + $0x620] sm:$0xff]
  %v1963 = vld [vmem:[%s1 + $0x630] sm:$0xff]
  %v1964 = vld [vmem:[%s1 + $0x640] sm:$0xff]
  %v1965 = vld [vmem:[%s1 + $0x650] sm:$0xff]
  %v1966 = vld [vmem:[%s1 + $0x660] sm:$0xff]
  %v1967 = vld [vmem:[%s1 + $0x670] sm:$0xff]
  %v1968 = vld [vmem:[%s1 + $0x680] sm:$0xff]
  %v1969 = vld [vmem:[%s1 + $0x690] sm:$0xff]
  %v1970 = vld [vmem:[%s1 + $0x6a0] sm:$0xff]
  %v1972 = vsel %vm966, %v1939, 0
  %v1975 = vsel %vm966, %v1940, 0
  %v1978 = vsel %vm966, %v1941, 0
  %v1981 = vsel %vm966, %v1942, 0
  %v1984 = vsel %vm966, %v1943, 0
  %v1987 = vsel %vm966, %v1944, 0
  %v1990 = vsel %vm966, %v1945, 0
  %v1993 = vsel %vm966, %v1946, 0
  %v1996 = vsel %vm966, %v1947, 0
  %v1999 = vsel %vm966, %v1948, 0
  %v2002 = vsel %vm966, %v1949, 0
  %v2005 = vsel %vm966, %v1950, 0
  %v2008 = vsel %vm966, %v1951, 0
  %v2011 = vsel %vm966, %v1952, 0
  %v2014 = vsel %vm966, %v1953, 0
  %v2017 = vsel %vm966, %v1954, 0
  %v2020 = vsel %vm966, %v1955, 0
  %v2023 = vsel %vm966, %v1956, 0
  %v2026 = vsel %vm966, %v1957, 0
  %v2029 = vsel %vm966, %v1958, 0
  %v2032 = vsel %vm966, %v1959, 0
  %v2035 = vsel %vm966, %v1960, 0
  %v2038 = vsel %vm966, %v1961, 0
  %v2041 = vsel %vm966, %v1962, 0
  %v2044 = vsel %vm966, %v1963, 0
  %v2047 = vsel %vm966, %v1964, 0
  %v2050 = vsel %vm966, %v1965, 0
  %v2053 = vsel %vm966, %v1966, 0
  %v2056 = vsel %vm966, %v1967, 0
  %v2059 = vsel %vm966, %v1968, 0
  %v2062 = vsel %vm966, %v1969, 0
  %v2065 = vsel %vm966, %v1970, 0
  %2067 = vmatprep.subr.mxu0 0.0
  %2068 = vmatpush1.msra.mxu0 0.0
  %2069 = vmatprep.subr.mxu0 0.0
  %2070 = vmatpush1.msra.mxu0 0.0
  %2071 = vmatprep.subr.mxu0 0.0
  %2072 = vmatpush1.msra.mxu0 0.0
  %2073 = vmatprep.subr.mxu0 0.0
  %2074 = vmatpush1.msra.mxu0 0.0
  %2075 = vmatprep.subr.mxu0 0.0
  %2076 = vmatpush1.msra.mxu0 0.0
  %2077 = vmatprep.subr.mxu0 0.0
  %2078 = vmatpush1.msra.mxu0 0.0
  %2079 = vmatprep.subr.mxu0 0.0
  %2080 = vmatpush1.msra.mxu0 0.0
  %2081 = vmatprep.subr.mxu0 0.0
  %2082 = vmatpush1.msra.mxu0 %v40
  %2083 = vmatprep.subr.mxu0 0.0
  %2084 = vmatpush1.msra.mxu0 %v1938
  %2085 = vmatprep.subr.mxu0 0.0
  %2086 = vmatpush1.msra.mxu0 %v1937
  %2087 = vmatprep.subr.mxu0 0.0
  %2088 = vmatpush1.msra.mxu0 %v1936
  %2089 = vmatprep.subr.mxu0 0.0
  %2090 = vmatpush1.msra.mxu0 %v1935
  %2091 = vmatprep.subr.mxu0 0.0
  %2092 = vmatpush1.msra.mxu0 %v1934
  %2093 = vmatprep.subr.mxu0 0.0
  %2094 = vmatpush1.msra.mxu0 %v1933
  %2095 = vmatprep.subr.mxu0 0.0
  %2096 = vmatpush1.msra.mxu0 %v1932
  %2097 = vmatprep.subr.mxu0 0.0
  %2098 = vmatpush1.msra.mxu0 %v1931
  %2099 = vmatprep.subr.mxu0 0.0
  %2100 = vmatpush2.msra.mxu0 0.0
  %2101 = vmatprep.subr.mxu0 0.0
  %2102 = vmatpush2.msra.mxu0 0.0
  %2103 = vmatprep.subr.mxu0 0.0
  %2104 = vmatpush2.msra.mxu0 0.0
  %2105 = vmatprep.subr.mxu0 0.0
  %2106 = vmatpush2.msra.mxu0 0.0
  %2107 = vmatprep.subr.mxu0 0.0
  %2108 = vmatpush2.msra.mxu0 0.0
  %2109 = vmatprep.subr.mxu0 0.0
  %2110 = vmatpush2.msra.mxu0 0.0
  %2111 = vmatprep.subr.mxu0 0.0
  %2112 = vmatpush2.msra.mxu0 0.0
  %2113 = vmatprep.subr.mxu0 0.0
  %2114 = vmatpush2.msra.mxu0 0.0
  %2115 = vmatprep.subr.mxu0 0.0
  %2116 = vmatpush2.msra.mxu0 0.0
  %2117 = vmatprep.subr.mxu0 0.0
  %2118 = vmatpush2.msra.mxu0 0.0
  %2119 = vmatprep.subr.mxu0 0.0
  %2120 = vmatpush2.msra.mxu0 0.0
  %2121 = vmatprep.subr.mxu0 0.0
  %2122 = vmatpush2.msra.mxu0 0.0
  %2123 = vmatprep.subr.mxu0 0.0
  %2124 = vmatpush2.msra.mxu0 0.0
  %2125 = vmatprep.subr.mxu0 0.0
  %2126 = vmatpush2.msra.mxu0 0.0
  %2127 = vmatprep.subr.mxu0 0.0
  %2128 = vmatpush2.msra.mxu0 0.0
  %2129 = vmatprep.subr.mxu0 0.0
  %2130 = vmatpush2.msra.mxu0 0.0
  %2131 = vmatprep.mubr.f32.mxu0 0.0
  %2132 = vmatmul.mubr.f32.gmra.mxu0 %v1972
  %v2133 = vpop.f32.mrf.mxu0
  %v2134 = vadd.f32 0.0, %v2133
  %v2135 = vpop.f32.mrf.mxu0
  %2136 = vmatprep.mubr.f32.mxu0 0.0
  %2137 = vmatmul.mubr.f32.gmra.mxu0 %v1975
  %v2138 = vpop.f32.mrf.mxu0
  %v2139 = vadd.f32 0.0, %v2138
  %v2140 = vpop.f32.mrf.mxu0
  %2141 = vmatprep.mubr.f32.mxu0 0.0
  %2142 = vmatmul.mubr.f32.gmra.mxu0 %v1978
  %v2143 = vpop.f32.mrf.mxu0
  %v2144 = vadd.f32 0.0, %v2143
  %v2145 = vpop.f32.mrf.mxu0
  %2146 = vmatprep.mubr.f32.mxu0 0.0
  %2147 = vmatmul.mubr.f32.gmra.mxu0 %v1981
  %v2148 = vpop.f32.mrf.mxu0
  %v2149 = vadd.f32 0.0, %v2148
  %v2150 = vpop.f32.mrf.mxu0
  %2151 = vmatprep.mubr.f32.mxu0 0.0
  %2152 = vmatmul.mubr.f32.gmra.mxu0 %v1984
  %v2153 = vpop.f32.mrf.mxu0
  %v2154 = vadd.f32 0.0, %v2153
  %v2155 = vpop.f32.mrf.mxu0
  %2156 = vmatprep.mubr.f32.mxu0 0.0
  %2157 = vmatmul.mubr.f32.gmra.mxu0 %v1987
  %v2158 = vpop.f32.mrf.mxu0
  %v2159 = vadd.f32 0.0, %v2158
  %v2160 = vpop.f32.mrf.mxu0
  %2161 = vmatprep.mubr.f32.mxu0 0.0
  %2162 = vmatmul.mubr.f32.gmra.mxu0 %v1990
  %v2163 = vpop.f32.mrf.mxu0
  %v2164 = vadd.f32 0.0, %v2163
  %v2165 = vpop.f32.mrf.mxu0
  %2166 = vmatprep.mubr.f32.mxu0 0.0
  %2167 = vmatmul.mubr.f32.gmra.mxu0 %v1993
  %v2168 = vpop.f32.mrf.mxu0
  %v2169 = vadd.f32 0.0, %v2168
  %v2170 = vpop.f32.mrf.mxu0
  %2171 = vmatprep.mubr.f32.mxu0 0.0
  %2172 = vmatmul.mubr.f32.gmra.mxu0 %v1996
  %v2173 = vpop.f32.mrf.mxu0
  %v2174 = vadd.f32 0.0, %v2173
  %v2175 = vpop.f32.mrf.mxu0
  %2176 = vmatprep.mubr.f32.mxu0 0.0
  %2177 = vmatmul.mubr.f32.gmra.mxu0 %v1999
  %v2178 = vpop.f32.mrf.mxu0
  %v2179 = vadd.f32 0.0, %v2178
  %v2180 = vpop.f32.mrf.mxu0
  %2181 = vmatprep.mubr.f32.mxu0 0.0
  %2182 = vmatmul.mubr.f32.gmra.mxu0 %v2002
  %v2183 = vpop.f32.mrf.mxu0
  %v2184 = vadd.f32 0.0, %v2183
  %v2185 = vpop.f32.mrf.mxu0
  %2186 = vmatprep.mubr.f32.mxu0 0.0
  %2187 = vmatmul.mubr.f32.gmra.mxu0 %v2005
  %v2188 = vpop.f32.mrf.mxu0
  %v2189 = vadd.f32 0.0, %v2188
  %v2190 = vpop.f32.mrf.mxu0
  %2191 = vmatprep.mubr.f32.mxu0 0.0
  %2192 = vmatmul.mubr.f32.gmra.mxu0 %v2008
  %v2193 = vpop.f32.mrf.mxu0
  %v2194 = vadd.f32 0.0, %v2193
  %v2195 = vpop.f32.mrf.mxu0
  %2196 = vmatprep.mubr.f32.mxu0 0.0
  %2197 = vmatmul.mubr.f32.gmra.mxu0 %v2011
  %v2198 = vpop.f32.mrf.mxu0
  %v2199 = vadd.f32 0.0, %v2198
  %v2200 = vpop.f32.mrf.mxu0
  %2201 = vmatprep.mubr.f32.mxu0 0.0
  %2202 = vmatmul.mubr.f32.gmra.mxu0 %v2014
  %v2203 = vpop.f32.mrf.mxu0
  %v2204 = vadd.f32 0.0, %v2203
  %v2205 = vpop.f32.mrf.mxu0
  %2206 = vmatprep.mubr.f32.mxu0 0.0
  %2207 = vmatmul.mubr.f32.gmra.mxu0 %v2017
  %v2208 = vpop.f32.mrf.mxu0
  %v2209 = vadd.f32 0.0, %v2208
  %v2210 = vpop.f32.mrf.mxu0
  %2211 = vmatprep.mubr.f32.mxu0 0.0
  %2212 = vmatmul.mubr.f32.gmra.mxu0 %v2020
  %v2213 = vpop.f32.mrf.mxu0
  %v2214 = vadd.f32 0.0, %v2213
  %v2215 = vpop.f32.mrf.mxu0
  %2216 = vmatprep.mubr.f32.mxu0 0.0
  %2217 = vmatmul.mubr.f32.gmra.mxu0 %v2023
  %v2218 = vpop.f32.mrf.mxu0
  %v2219 = vadd.f32 0.0, %v2218
  %v2220 = vpop.f32.mrf.mxu0
  %2221 = vmatprep.mubr.f32.mxu0 0.0
  %2222 = vmatmul.mubr.f32.gmra.mxu0 %v2026
  %v2223 = vpop.f32.mrf.mxu0
  %v2224 = vadd.f32 0.0, %v2223
  %v2225 = vpop.f32.mrf.mxu0
  %2226 = vmatprep.mubr.f32.mxu0 0.0
  %2227 = vmatmul.mubr.f32.gmra.mxu0 %v2029
  %v2228 = vpop.f32.mrf.mxu0
  %v2229 = vadd.f32 0.0, %v2228
  %v2230 = vpop.f32.mrf.mxu0
  %2231 = vmatprep.mubr.f32.mxu0 0.0
  %2232 = vmatmul.mubr.f32.gmra.mxu0 %v2032
  %v2233 = vpop.f32.mrf.mxu0
  %v2234 = vadd.f32 0.0, %v2233
  %v2235 = vpop.f32.mrf.mxu0
  %2236 = vmatprep.mubr.f32.mxu0 0.0
  %2237 = vmatmul.mubr.f32.gmra.mxu0 %v2035
  %v2238 = vpop.f32.mrf.mxu0
  %v2239 = vadd.f32 0.0, %v2238
  %v2240 = vpop.f32.mrf.mxu0
  %2241 = vmatprep.mubr.f32.mxu0 0.0
  %2242 = vmatmul.mubr.f32.gmra.mxu0 %v2038
  %v2243 = vpop.f32.mrf.mxu0
  %v2244 = vadd.f32 0.0, %v2243
  %v2245 = vpop.f32.mrf.mxu0
  %2246 = vmatprep.mubr.f32.mxu0 0.0
  %2247 = vmatmul.mubr.f32.gmra.mxu0 %v2041
  %v2248 = vpop.f32.mrf.mxu0
  %v2249 = vadd.f32 0.0, %v2248
  %v2250 = vpop.f32.mrf.mxu0
  %2251 = vmatprep.mubr.f32.mxu0 0.0
  %2252 = vmatmul.mubr.f32.gmra.mxu0 %v2044
  %v2253 = vpop.f32.mrf.mxu0
  %v2254 = vadd.f32 0.0, %v2253
  %v2255 = vpop.f32.mrf.mxu0
  %2256 = vmatprep.mubr.f32.mxu0 0.0
  %2257 = vmatmul.mubr.f32.gmra.mxu0 %v2047
  %v2258 = vpop.f32.mrf.mxu0
  %v2259 = vadd.f32 0.0, %v2258
  %v2260 = vpop.f32.mrf.mxu0
  %2261 = vmatprep.mubr.f32.mxu0 0.0
  %2262 = vmatmul.mubr.f32.gmra.mxu0 %v2050
  %v2263 = vpop.f32.mrf.mxu0
  %v2264 = vadd.f32 0.0, %v2263
  %v2265 = vpop.f32.mrf.mxu0
  %2266 = vmatprep.mubr.f32.mxu0 0.0
  %2267 = vmatmul.mubr.f32.gmra.mxu0 %v2053
  %v2268 = vpop.f32.mrf.mxu0
  %v2269 = vadd.f32 0.0, %v2268
  %v2270 = vpop.f32.mrf.mxu0
  %2271 = vmatprep.mubr.f32.mxu0 0.0
  %2272 = vmatmul.mubr.f32.gmra.mxu0 %v2056
  %v2273 = vpop.f32.mrf.mxu0
  %v2274 = vadd.f32 0.0, %v2273
  %v2275 = vpop.f32.mrf.mxu0
  %2276 = vmatprep.mubr.f32.mxu0 0.0
  %2277 = vmatmul.mubr.f32.gmra.mxu0 %v2059
  %v2278 = vpop.f32.mrf.mxu0
  %v2279 = vadd.f32 0.0, %v2278
  %v2280 = vpop.f32.mrf.mxu0
  %2281 = vmatprep.mubr.f32.mxu0 0.0
  %2282 = vmatmul.mubr.f32.gmra.mxu0 %v2062
  %v2283 = vpop.f32.mrf.mxu0
  %v2284 = vadd.f32 0.0, %v2283
  %v2285 = vpop.f32.mrf.mxu0
  %2286 = vmatprep.mubr.f32.mxu0 0.0
  %2287 = vmatmul.mubr.f32.gmra.mxu0 %v2065
  %v2288 = vpop.f32.mrf.mxu0
  %v2289 = vadd.f32 0.0, %v2288
  %v2290 = vpop.f32.mrf.mxu0
  %2291 = vdwg.mxu0
  %v2292 = vmax.f32 %v2134, 0.0
  %v2293 = vmax.f32 %v2139, 0.0
  %v2294 = vmax.f32 %v2144, 0.0
  %v2295 = vmax.f32 %v2149, 0.0
  %v2296 = vmax.f32 %v2154, 0.0
  %v2297 = vmax.f32 %v2159, 0.0
  %v2298 = vmax.f32 %v2164, 0.0
  %v2299 = vmax.f32 %v2169, 0.0
  %v2300 = vmax.f32 %v2174, 0.0
  %v2301 = vmax.f32 %v2179, 0.0
  %v2302 = vmax.f32 %v2184, 0.0
  %v2303 = vmax.f32 %v2189, 0.0
  %v2304 = vmax.f32 %v2194, 0.0
  %v2305 = vmax.f32 %v2199, 0.0
  %v2306 = vmax.f32 %v2204, 0.0
  %v2307 = vmax.f32 %v2209, 0.0
  %v2308 = vmax.f32 %v2214, 0.0
  %v2309 = vmax.f32 %v2219, 0.0
  %v2310 = vmax.f32 %v2224, 0.0
  %v2311 = vmax.f32 %v2229, 0.0
  %v2312 = vmax.f32 %v2234, 0.0
  %v2313 = vmax.f32 %v2239, 0.0
  %v2314 = vmax.f32 %v2244, 0.0
  %v2315 = vmax.f32 %v2249, 0.0
  %v2316 = vmax.f32 %v2254, 0.0
  %v2317 = vmax.f32 %v2259, 0.0
  %v2318 = vmax.f32 %v2264, 0.0
  %v2319 = vmax.f32 %v2269, 0.0
  %v2320 = vmax.f32 %v2274, 0.0
  %v2321 = vmax.f32 %v2279, 0.0
  %v2322 = vmax.f32 %v2284, 0.0
  %v2323 = vmax.f32 %v2289, 0.0
  %v2324 = vld [vmem:[%s1 + $0x6b0] sm:$0x3]
  %v2325 = vld [vmem:[%s1 + $0x6c0] sm:$0x3]
  %vm2326 = vcmask 15360
  %v2328 = vsel %vm2326, %v2300, 0
  %v2331 = vsel %vm2326, %v2301, 0
  %v2334 = vsel %vm2326, %v2302, 0
  %v2337 = vsel %vm2326, %v2303, 0
  %v2340 = vsel %vm2326, %v2304, 0
  %v2343 = vsel %vm2326, %v2305, 0
  %v2346 = vsel %vm2326, %v2306, 0
  %v2349 = vsel %vm2326, %v2307, 0
  %vm2351 = vcmask 1041408
  %v2353 = vsel %vm2351, %v2325, 0
  %2355 = vmatprep.subr.mxu0 0.0
  %2356 = vmatpush1.msra.mxu0 0.0
  %2357 = vmatprep.subr.mxu0 0.0
  %2358 = vmatpush1.msra.mxu0 0.0
  %2359 = vmatprep.subr.mxu0 0.0
  %2360 = vmatpush1.msra.mxu0 0.0
  %2361 = vmatprep.subr.mxu0 0.0
  %2362 = vmatpush1.msra.mxu0 0.0
  %2363 = vmatprep.subr.mxu0 0.0
  %2364 = vmatpush1.msra.mxu0 0.0
  %2365 = vmatprep.subr.mxu0 0.0
  %2366 = vmatpush1.msra.mxu0 0.0
  %2367 = vmatprep.subr.mxu0 0.0
  %2368 = vmatpush1.msra.mxu0 0.0
  %2369 = vmatprep.subr.mxu0 0.0
  %2370 = vmatpush1.msra.mxu0 0.0
  %2371 = vmatprep.subr.mxu0 0.0
  %2372 = vmatpush1.msra.mxu0 0.0
  %2373 = vmatprep.subr.mxu0 0.0
  %2374 = vmatpush1.msra.mxu0 0.0
  %2375 = vmatprep.subr.mxu0 0.0
  %2376 = vmatpush1.msra.mxu0 0.0
  %2377 = vmatprep.subr.mxu0 0.0
  %2378 = vmatpush1.msra.mxu0 0.0
  %2379 = vmatprep.subr.mxu0 0.0
  %2380 = vmatpush1.msra.mxu0 0.0
  %2381 = vmatprep.subr.mxu0 0.0
  %2382 = vmatpush1.msra.mxu0 0.0
  %2383 = vmatprep.subr.mxu0 0.0
  %2384 = vmatpush1.msra.mxu0 0.0
  %2385 = vmatprep.subr.mxu0 0.0
  %2386 = vmatpush1.msra.mxu0 %v2353
  %2387 = vmatprep.subr.mxu0 0.0
  %2388 = vmatpush2.msra.mxu0 0.0
  %2389 = vmatprep.subr.mxu0 0.0
  %2390 = vmatpush2.msra.mxu0 0.0
  %2391 = vmatprep.subr.mxu0 0.0
  %2392 = vmatpush2.msra.mxu0 0.0
  %2393 = vmatprep.subr.mxu0 0.0
  %2394 = vmatpush2.msra.mxu0 0.0
  %2395 = vmatprep.subr.mxu0 0.0
  %2396 = vmatpush2.msra.mxu0 0.0
  %2397 = vmatprep.subr.mxu0 0.0
  %2398 = vmatpush2.msra.mxu0 0.0
  %2399 = vmatprep.subr.mxu0 0.0
  %2400 = vmatpush2.msra.mxu0 0.0
  %2401 = vmatprep.subr.mxu0 0.0
  %2402 = vmatpush2.msra.mxu0 0.0
  %2403 = vmatprep.subr.mxu0 0.0
  %2404 = vmatpush2.msra.mxu0 0.0
  %2405 = vmatprep.subr.mxu0 0.0
  %2406 = vmatpush2.msra.mxu0 0.0
  %2407 = vmatprep.subr.mxu0 0.0
  %2408 = vmatpush2.msra.mxu0 0.0
  %2409 = vmatprep.subr.mxu0 0.0
  %2410 = vmatpush2.msra.mxu0 0.0
  %2411 = vmatprep.subr.mxu0 0.0
  %2412 = vmatpush2.msra.mxu0 0.0
  %2413 = vmatprep.subr.mxu0 0.0
  %2414 = vmatpush2.msra.mxu0 0.0
  %2415 = vmatprep.subr.mxu0 0.0
  %2416 = vmatpush2.msra.mxu0 0.0
  %2417 = vmatprep.subr.mxu0 0.0
  %2418 = vmatpush2.msra.mxu0 0.0
  %2419 = vmatprep.mubr.f32.mxu0 0.0
  %2420 = vmatmul.mubr.f32.gmra.mxu0 %v2328
  %v2421 = vpop.f32.mrf.mxu0
  %v2422 = vadd.f32 0.0, %v2421
  %v2423 = vpop.f32.mrf.mxu0
  %2424 = vmatprep.mubr.f32.mxu0 0.0
  %2425 = vmatmul.mubr.f32.gmra.mxu0 %v2331
  %v2426 = vpop.f32.mrf.mxu0
  %v2427 = vadd.f32 0.0, %v2426
  %v2428 = vpop.f32.mrf.mxu0
  %2429 = vmatprep.mubr.f32.mxu0 0.0
  %2430 = vmatmul.mubr.f32.gmra.mxu0 %v2334
  %v2431 = vpop.f32.mrf.mxu0
  %v2432 = vadd.f32 0.0, %v2431
  %v2433 = vpop.f32.mrf.mxu0
  %2434 = vmatprep.mubr.f32.mxu0 0.0
  %2435 = vmatmul.mubr.f32.gmra.mxu0 %v2337
  %v2436 = vpop.f32.mrf.mxu0
  %v2437 = vadd.f32 0.0, %v2436
  %v2438 = vpop.f32.mrf.mxu0
  %2439 = vmatprep.mubr.f32.mxu0 0.0
  %2440 = vmatmul.mubr.f32.gmra.mxu0 %v2340
  %v2441 = vpop.f32.mrf.mxu0
  %v2442 = vadd.f32 0.0, %v2441
  %v2443 = vpop.f32.mrf.mxu0
  %2444 = vmatprep.mubr.f32.mxu0 0.0
  %2445 = vmatmul.mubr.f32.gmra.mxu0 %v2343
  %v2446 = vpop.f32.mrf.mxu0
  %v2447 = vadd.f32 0.0, %v2446
  %v2448 = vpop.f32.mrf.mxu0
  %2449 = vmatprep.mubr.f32.mxu0 0.0
  %2450 = vmatmul.mubr.f32.gmra.mxu0 %v2346
  %v2451 = vpop.f32.mrf.mxu0
  %v2452 = vadd.f32 0.0, %v2451
  %v2453 = vpop.f32.mrf.mxu0
  %2454 = vmatprep.mubr.f32.mxu0 0.0
  %2455 = vmatmul.mubr.f32.gmra.mxu0 %v2349
  %v2456 = vpop.f32.mrf.mxu0
  %v2457 = vadd.f32 0.0, %v2456
  %v2458 = vpop.f32.mrf.mxu0
  %2459 = vdwg.mxu0
  %v2461 = vsel %vm2326, %v2292, 0
  %v2464 = vsel %vm2326, %v2293, 0
  %v2467 = vsel %vm2326, %v2294, 0
  %v2470 = vsel %vm2326, %v2295, 0
  %v2473 = vsel %vm2326, %v2296, 0
  %v2476 = vsel %vm2326, %v2297, 0
  %v2479 = vsel %vm2326, %v2298, 0
  %v2482 = vsel %vm2326, %v2299, 0
  %v2485 = vsel %vm2351, %v2324, 0
  %2487 = vmatprep.subr.mxu0 0.0
  %2488 = vmatpush1.msra.mxu0 0.0
  %2489 = vmatprep.subr.mxu0 0.0
  %2490 = vmatpush1.msra.mxu0 0.0
  %2491 = vmatprep.subr.mxu0 0.0
  %2492 = vmatpush1.msra.mxu0 0.0
  %2493 = vmatprep.subr.mxu0 0.0
  %2494 = vmatpush1.msra.mxu0 0.0
  %2495 = vmatprep.subr.mxu0 0.0
  %2496 = vmatpush1.msra.mxu0 0.0
  %2497 = vmatprep.subr.mxu0 0.0
  %2498 = vmatpush1.msra.mxu0 0.0
  %2499 = vmatprep.subr.mxu0 0.0
  %2500 = vmatpush1.msra.mxu0 0.0
  %2501 = vmatprep.subr.mxu0 0.0
  %2502 = vmatpush1.msra.mxu0 0.0
  %2503 = vmatprep.subr.mxu0 0.0
  %2504 = vmatpush1.msra.mxu0 0.0
  %2505 = vmatprep.subr.mxu0 0.0
  %2506 = vmatpush1.msra.mxu0 0.0
  %2507 = vmatprep.subr.mxu0 0.0
  %2508 = vmatpush1.msra.mxu0 0.0
  %2509 = vmatprep.subr.mxu0 0.0
  %2510 = vmatpush1.msra.mxu0 0.0
  %2511 = vmatprep.subr.mxu0 0.0
  %2512 = vmatpush1.msra.mxu0 0.0
  %2513 = vmatprep.subr.mxu0 0.0
  %2514 = vmatpush1.msra.mxu0 0.0
  %2515 = vmatprep.subr.mxu0 0.0
  %2516 = vmatpush1.msra.mxu0 0.0
  %2517 = vmatprep.subr.mxu0 0.0
  %2518 = vmatpush1.msra.mxu0 %v2485
  %2519 = vmatprep.subr.mxu0 0.0
  %2520 = vmatpush2.msra.mxu0 0.0
  %2521 = vmatprep.subr.mxu0 0.0
  %2522 = vmatpush2.msra.mxu0 0.0
  %2523 = vmatprep.subr.mxu0 0.0
  %2524 = vmatpush2.msra.mxu0 0.0
  %2525 = vmatprep.subr.mxu0 0.0
  %2526 = vmatpush2.msra.mxu0 0.0
  %2527 = vmatprep.subr.mxu0 0.0
  %2528 = vmatpush2.msra.mxu0 0.0
  %2529 = vmatprep.subr.mxu0 0.0
  %2530 = vmatpush2.msra.mxu0 0.0
  %2531 = vmatprep.subr.mxu0 0.0
  %2532 = vmatpush2.msra.mxu0 0.0
  %2533 = vmatprep.subr.mxu0 0.0
  %2534 = vmatpush2.msra.mxu0 0.0
  %2535 = vmatprep.subr.mxu0 0.0
  %2536 = vmatpush2.msra.mxu0 0.0
  %2537 = vmatprep.subr.mxu0 0.0
  %2538 = vmatpush2.msra.mxu0 0.0
  %2539 = vmatprep.subr.mxu0 0.0
  %2540 = vmatpush2.msra.mxu0 0.0
  %2541 = vmatprep.subr.mxu0 0.0
  %2542 = vmatpush2.msra.mxu0 0.0
  %2543 = vmatprep.subr.mxu0 0.0
  %2544 = vmatpush2.msra.mxu0 0.0
  %2545 = vmatprep.subr.mxu0 0.0
  %2546 = vmatpush2.msra.mxu0 0.0
  %2547 = vmatprep.subr.mxu0 0.0
  %2548 = vmatpush2.msra.mxu0 0.0
  %2549 = vmatprep.subr.mxu0 0.0
  %2550 = vmatpush2.msra.mxu0 0.0
  %2551 = vmatprep.mubr.f32.mxu0 0.0
  %2552 = vmatmul.mubr.f32.gmra.mxu0 %v2461
  %v2553 = vpop.f32.mrf.mxu0
  %v2554 = vadd.f32 %v2422, %v2553
  %v2555 = vpop.f32.mrf.mxu0
  %2556 = vmatprep.mubr.f32.mxu0 0.0
  %2557 = vmatmul.mubr.f32.gmra.mxu0 %v2464
  %v2558 = vpop.f32.mrf.mxu0
  %v2559 = vadd.f32 %v2427, %v2558
  %v2560 = vpop.f32.mrf.mxu0
  %2561 = vmatprep.mubr.f32.mxu0 0.0
  %2562 = vmatmul.mubr.f32.gmra.mxu0 %v2467
  %v2563 = vpop.f32.mrf.mxu0
  %v2564 = vadd.f32 %v2432, %v2563
  %v2565 = vpop.f32.mrf.mxu0
  %2566 = vmatprep.mubr.f32.mxu0 0.0
  %2567 = vmatmul.mubr.f32.gmra.mxu0 %v2470
  %v2568 = vpop.f32.mrf.mxu0
  %v2569 = vadd.f32 %v2437, %v2568
  %v2570 = vpop.f32.mrf.mxu0
  %2571 = vmatprep.mubr.f32.mxu0 0.0
  %2572 = vmatmul.mubr.f32.gmra.mxu0 %v2473
  %v2573 = vpop.f32.mrf.mxu0
  %v2574 = vadd.f32 %v2442, %v2573
  %v2575 = vpop.f32.mrf.mxu0
  %2576 = vmatprep.mubr.f32.mxu0 0.0
  %2577 = vmatmul.mubr.f32.gmra.mxu0 %v2476
  %v2578 = vpop.f32.mrf.mxu0
  %v2579 = vadd.f32 %v2447, %v2578
  %v2580 = vpop.f32.mrf.mxu0
  %2581 = vmatprep.mubr.f32.mxu0 0.0
  %2582 = vmatmul.mubr.f32.gmra.mxu0 %v2479
  %v2583 = vpop.f32.mrf.mxu0
  %v2584 = vadd.f32 %v2452, %v2583
  %v2585 = vpop.f32.mrf.mxu0
  %2586 = vmatprep.mubr.f32.mxu0 0.0
  %2587 = vmatmul.mubr.f32.gmra.mxu0 %v2482
  %v2588 = vpop.f32.mrf.mxu0
  %v2589 = vadd.f32 %v2457, %v2588
  %v2590 = vpop.f32.mrf.mxu0
  %2591 = vdwg.mxu0
  %v2592 = vld [vmem:[%s1 + $0x6d0] sm:$0x3]
  %v2594 = vsel %vm2326, %v2308, 0
  %v2597 = vsel %vm2326, %v2309, 0
  %v2600 = vsel %vm2326, %v2310, 0
  %v2603 = vsel %vm2326, %v2311, 0
  %v2606 = vsel %vm2326, %v2312, 0
  %v2609 = vsel %vm2326, %v2313, 0
  %v2612 = vsel %vm2326, %v2314, 0
  %v2615 = vsel %vm2326, %v2315, 0
  %v2618 = vsel %vm2351, %v2592, 0
  %2620 = vmatprep.subr.mxu0 0.0
  %2621 = vmatpush1.msra.mxu0 0.0
  %2622 = vmatprep.subr.mxu0 0.0
  %2623 = vmatpush1.msra.mxu0 0.0
  %2624 = vmatprep.subr.mxu0 0.0
  %2625 = vmatpush1.msra.mxu0 0.0
  %2626 = vmatprep.subr.mxu0 0.0
  %2627 = vmatpush1.msra.mxu0 0.0
  %2628 = vmatprep.subr.mxu0 0.0
  %2629 = vmatpush1.msra.mxu0 0.0
  %2630 = vmatprep.subr.mxu0 0.0
  %2631 = vmatpush1.msra.mxu0 0.0
  %2632 = vmatprep.subr.mxu0 0.0
  %2633 = vmatpush1.msra.mxu0 0.0
  %2634 = vmatprep.subr.mxu0 0.0
  %2635 = vmatpush1.msra.mxu0 0.0
  %2636 = vmatprep.subr.mxu0 0.0
  %2637 = vmatpush1.msra.mxu0 0.0
  %2638 = vmatprep.subr.mxu0 0.0
  %2639 = vmatpush1.msra.mxu0 0.0
  %2640 = vmatprep.subr.mxu0 0.0
  %2641 = vmatpush1.msra.mxu0 0.0
  %2642 = vmatprep.subr.mxu0 0.0
  %2643 = vmatpush1.msra.mxu0 0.0
  %2644 = vmatprep.subr.mxu0 0.0
  %2645 = vmatpush1.msra.mxu0 0.0
  %2646 = vmatprep.subr.mxu0 0.0
  %2647 = vmatpush1.msra.mxu0 0.0
  %2648 = vmatprep.subr.mxu0 0.0
  %2649 = vmatpush1.msra.mxu0 0.0
  %2650 = vmatprep.subr.mxu0 0.0
  %2651 = vmatpush1.msra.mxu0 %v2618
  %2652 = vmatprep.subr.mxu0 0.0
  %2653 = vmatpush2.msra.mxu0 0.0
  %2654 = vmatprep.subr.mxu0 0.0
  %2655 = vmatpush2.msra.mxu0 0.0
  %2656 = vmatprep.subr.mxu0 0.0
  %2657 = vmatpush2.msra.mxu0 0.0
  %2658 = vmatprep.subr.mxu0 0.0
  %2659 = vmatpush2.msra.mxu0 0.0
  %2660 = vmatprep.subr.mxu0 0.0
  %2661 = vmatpush2.msra.mxu0 0.0
  %2662 = vmatprep.subr.mxu0 0.0
  %2663 = vmatpush2.msra.mxu0 0.0
  %2664 = vmatprep.subr.mxu0 0.0
  %2665 = vmatpush2.msra.mxu0 0.0
  %2666 = vmatprep.subr.mxu0 0.0
  %2667 = vmatpush2.msra.mxu0 0.0
  %2668 = vmatprep.subr.mxu0 0.0
  %2669 = vmatpush2.msra.mxu0 0.0
  %2670 = vmatprep.subr.mxu0 0.0
  %2671 = vmatpush2.msra.mxu0 0.0
  %2672 = vmatprep.subr.mxu0 0.0
  %2673 = vmatpush2.msra.mxu0 0.0
  %2674 = vmatprep.subr.mxu0 0.0
  %2675 = vmatpush2.msra.mxu0 0.0
  %2676 = vmatprep.subr.mxu0 0.0
  %2677 = vmatpush2.msra.mxu0 0.0
  %2678 = vmatprep.subr.mxu0 0.0
  %2679 = vmatpush2.msra.mxu0 0.0
  %2680 = vmatprep.subr.mxu0 0.0
  %2681 = vmatpush2.msra.mxu0 0.0
  %2682 = vmatprep.subr.mxu0 0.0
  %2683 = vmatpush2.msra.mxu0 0.0
  %2684 = vmatprep.mubr.f32.mxu0 0.0
  %2685 = vmatmul.mubr.f32.gmra.mxu0 %v2594
  %v2686 = vpop.f32.mrf.mxu0
  %v2687 = vadd.f32 0.0, %v2686
  %v2688 = vpop.f32.mrf.mxu0
  %2689 = vmatprep.mubr.f32.mxu0 0.0
  %2690 = vmatmul.mubr.f32.gmra.mxu0 %v2597
  %v2691 = vpop.f32.mrf.mxu0
  %v2692 = vadd.f32 0.0, %v2691
  %v2693 = vpop.f32.mrf.mxu0
  %2694 = vmatprep.mubr.f32.mxu0 0.0
  %2695 = vmatmul.mubr.f32.gmra.mxu0 %v2600
  %v2696 = vpop.f32.mrf.mxu0
  %v2697 = vadd.f32 0.0, %v2696
  %v2698 = vpop.f32.mrf.mxu0
  %2699 = vmatprep.mubr.f32.mxu0 0.0
  %2700 = vmatmul.mubr.f32.gmra.mxu0 %v2603
  %v2701 = vpop.f32.mrf.mxu0
  %v2702 = vadd.f32 0.0, %v2701
  %v2703 = vpop.f32.mrf.mxu0
  %2704 = vmatprep.mubr.f32.mxu0 0.0
  %2705 = vmatmul.mubr.f32.gmra.mxu0 %v2606
  %v2706 = vpop.f32.mrf.mxu0
  %v2707 = vadd.f32 0.0, %v2706
  %v2708 = vpop.f32.mrf.mxu0
  %2709 = vmatprep.mubr.f32.mxu0 0.0
  %2710 = vmatmul.mubr.f32.gmra.mxu0 %v2609
  %v2711 = vpop.f32.mrf.mxu0
  %v2712 = vadd.f32 0.0, %v2711
  %v2713 = vpop.f32.mrf.mxu0
  %2714 = vmatprep.mubr.f32.mxu0 0.0
  %2715 = vmatmul.mubr.f32.gmra.mxu0 %v2612
  %v2716 = vpop.f32.mrf.mxu0
  %v2717 = vadd.f32 0.0, %v2716
  %v2718 = vpop.f32.mrf.mxu0
  %2719 = vmatprep.mubr.f32.mxu0 0.0
  %2720 = vmatmul.mubr.f32.gmra.mxu0 %v2615
  %v2721 = vpop.f32.mrf.mxu0
  %v2722 = vadd.f32 0.0, %v2721
  %v2723 = vpop.f32.mrf.mxu0
  %2724 = vdwg.mxu0
  %v2725 = vadd.f32 %v2554, %v2687
  %v2726 = vadd.f32 %v2559, %v2692
  %v2727 = vadd.f32 %v2564, %v2697
  %v2728 = vadd.f32 %v2569, %v2702
  %v2729 = vadd.f32 %v2574, %v2707
  %v2730 = vadd.f32 %v2579, %v2712
  %v2731 = vadd.f32 %v2584, %v2717
  %v2732 = vadd.f32 %v2589, %v2722
  %v2733 = vld [vmem:[%s1 + $0x6e0] sm:$0x3]
  %v2735 = vsel %vm2326, %v2316, 0
  %v2738 = vsel %vm2326, %v2317, 0
  %v2741 = vsel %vm2326, %v2318, 0
  %v2744 = vsel %vm2326, %v2319, 0
  %v2747 = vsel %vm2326, %v2320, 0
  %v2750 = vsel %vm2326, %v2321, 0
  %v2753 = vsel %vm2326, %v2322, 0
  %v2756 = vsel %vm2326, %v2323, 0
  %v2759 = vsel %vm2351, %v2733, 0
  %2761 = vmatprep.subr.mxu0 0.0
  %2762 = vmatpush1.msra.mxu0 0.0
  %2763 = vmatprep.subr.mxu0 0.0
  %2764 = vmatpush1.msra.mxu0 0.0
  %2765 = vmatprep.subr.mxu0 0.0
  %2766 = vmatpush1.msra.mxu0 0.0
  %2767 = vmatprep.subr.mxu0 0.0
  %2768 = vmatpush1.msra.mxu0 0.0
  %2769 = vmatprep.subr.mxu0 0.0
  %2770 = vmatpush1.msra.mxu0 0.0
  %2771 = vmatprep.subr.mxu0 0.0
  %2772 = vmatpush1.msra.mxu0 0.0
  %2773 = vmatprep.subr.mxu0 0.0
  %2774 = vmatpush1.msra.mxu0 0.0
  %2775 = vmatprep.subr.mxu0 0.0
  %2776 = vmatpush1.msra.mxu0 0.0
  %2777 = vmatprep.subr.mxu0 0.0
  %2778 = vmatpush1.msra.mxu0 0.0
  %2779 = vmatprep.subr.mxu0 0.0
  %2780 = vmatpush1.msra.mxu0 0.0
  %2781 = vmatprep.subr.mxu0 0.0
  %2782 = vmatpush1.msra.mxu0 0.0
  %2783 = vmatprep.subr.mxu0 0.0
  %2784 = vmatpush1.msra.mxu0 0.0
  %2785 = vmatprep.subr.mxu0 0.0
  %2786 = vmatpush1.msra.mxu0 0.0
  %2787 = vmatprep.subr.mxu0 0.0
  %2788 = vmatpush1.msra.mxu0 0.0
  %2789 = vmatprep.subr.mxu0 0.0
  %2790 = vmatpush1.msra.mxu0 0.0
  %2791 = vmatprep.subr.mxu0 0.0
  %2792 = vmatpush1.msra.mxu0 %v2759
  %2793 = vmatprep.subr.mxu0 0.0
  %2794 = vmatpush2.msra.mxu0 0.0
  %2795 = vmatprep.subr.mxu0 0.0
  %2796 = vmatpush2.msra.mxu0 0.0
  %2797 = vmatprep.subr.mxu0 0.0
  %2798 = vmatpush2.msra.mxu0 0.0
  %2799 = vmatprep.subr.mxu0 0.0
  %2800 = vmatpush2.msra.mxu0 0.0
  %2801 = vmatprep.subr.mxu0 0.0
  %2802 = vmatpush2.msra.mxu0 0.0
  %2803 = vmatprep.subr.mxu0 0.0
  %2804 = vmatpush2.msra.mxu0 0.0
  %2805 = vmatprep.subr.mxu0 0.0
  %2806 = vmatpush2.msra.mxu0 0.0
  %2807 = vmatprep.subr.mxu0 0.0
  %2808 = vmatpush2.msra.mxu0 0.0
  %2809 = vmatprep.subr.mxu0 0.0
  %2810 = vmatpush2.msra.mxu0 0.0
  %2811 = vmatprep.subr.mxu0 0.0
  %2812 = vmatpush2.msra.mxu0 0.0
  %2813 = vmatprep.subr.mxu0 0.0
  %2814 = vmatpush2.msra.mxu0 0.0
  %2815 = vmatprep.subr.mxu0 0.0
  %2816 = vmatpush2.msra.mxu0 0.0
  %2817 = vmatprep.subr.mxu0 0.0
  %2818 = vmatpush2.msra.mxu0 0.0
  %2819 = vmatprep.subr.mxu0 0.0
  %2820 = vmatpush2.msra.mxu0 0.0
  %2821 = vmatprep.subr.mxu0 0.0
  %2822 = vmatpush2.msra.mxu0 0.0
  %2823 = vmatprep.subr.mxu0 0.0
  %2824 = vmatpush2.msra.mxu0 0.0
  %2825 = vmatprep.mubr.f32.mxu0 0.0
  %2826 = vmatmul.mubr.f32.gmra.mxu0 %v2735
  %v2827 = vpop.f32.mrf.mxu0
  %v2828 = vadd.f32 0.0, %v2827
  %v2829 = vpop.f32.mrf.mxu0
  %2830 = vmatprep.mubr.f32.mxu0 0.0
  %2831 = vmatmul.mubr.f32.gmra.mxu0 %v2738
  %v2832 = vpop.f32.mrf.mxu0
  %v2833 = vadd.f32 0.0, %v2832
  %v2834 = vpop.f32.mrf.mxu0
  %2835 = vmatprep.mubr.f32.mxu0 0.0
  %2836 = vmatmul.mubr.f32.gmra.mxu0 %v2741
  %v2837 = vpop.f32.mrf.mxu0
  %v2838 = vadd.f32 0.0, %v2837
  %v2839 = vpop.f32.mrf.mxu0
  %2840 = vmatprep.mubr.f32.mxu0 0.0
  %2841 = vmatmul.mubr.f32.gmra.mxu0 %v2744
  %v2842 = vpop.f32.mrf.mxu0
  %v2843 = vadd.f32 0.0, %v2842
  %v2844 = vpop.f32.mrf.mxu0
  %2845 = vmatprep.mubr.f32.mxu0 0.0
  %2846 = vmatmul.mubr.f32.gmra.mxu0 %v2747
  %v2847 = vpop.f32.mrf.mxu0
  %v2848 = vadd.f32 0.0, %v2847
  %v2849 = vpop.f32.mrf.mxu0
  %2850 = vmatprep.mubr.f32.mxu0 0.0
  %2851 = vmatmul.mubr.f32.gmra.mxu0 %v2750
  %v2852 = vpop.f32.mrf.mxu0
  %v2853 = vadd.f32 0.0, %v2852
  %v2854 = vpop.f32.mrf.mxu0
  %2855 = vmatprep.mubr.f32.mxu0 0.0
  %2856 = vmatmul.mubr.f32.gmra.mxu0 %v2753
  %v2857 = vpop.f32.mrf.mxu0
  %v2858 = vadd.f32 0.0, %v2857
  %v2859 = vpop.f32.mrf.mxu0
  %2860 = vmatprep.mubr.f32.mxu0 0.0
  %2861 = vmatmul.mubr.f32.gmra.mxu0 %v2756
  %v2862 = vpop.f32.mrf.mxu0
  %v2863 = vadd.f32 0.0, %v2862
  %v2864 = vpop.f32.mrf.mxu0
  %2865 = vdwg.mxu0
  %v2866 = vadd.f32 %v2725, %v2828
  %v2867 = vadd.f32 %v2726, %v2833
  %v2868 = vadd.f32 %v2727, %v2838
  %v2869 = vadd.f32 %v2728, %v2843
  %v2870 = vadd.f32 %v2729, %v2848
  %v2871 = vadd.f32 %v2730, %v2853
  %v2872 = vadd.f32 %v2731, %v2858
  %v2873 = vadd.f32 %v2732, %v2863
  %v2874 = vld [vmem:[%s1 + $0x6f0] sm:$0xff]
  %v2875 = vld [vmem:[%s1 + $0x6f8] sm:$0xff]
  %v2876 = vld [vmem:[%s1 + $0x700] sm:$0xff]
  %v2877 = vld [vmem:[%s1 + $0x708] sm:$0xff]
  %v2878 = vld [vmem:[%s1 + $0x710] sm:$0xff]
  %v2879 = vld [vmem:[%s1 + $0x718] sm:$0xff]
  %v2880 = vld [vmem:[%s1 + $0x720] sm:$0xff]
  %v2881 = vld [vmem:[%s1 + $0x728] sm:$0xff]
  %v2882 = vld [vmem:[%s1 + $0x730] sm:$0xff]
  %v2883 = vld [vmem:[%s1 + $0x738] sm:$0xff]
  %v2884 = vld [vmem:[%s1 + $0x740] sm:$0xff]
  %v2885 = vld [vmem:[%s1 + $0x748] sm:$0xff]
  %v2886 = vld [vmem:[%s1 + $0x750] sm:$0xff]
  %v2887 = vld [vmem:[%s1 + $0x758] sm:$0xff]
  %v2888 = vld [vmem:[%s1 + $0x760] sm:$0xff]
  %v2889 = vld [vmem:[%s1 + $0x768] sm:$0xff]
  %v2890 = vld [vmem:[%s1 + $0x770] sm:$0xff]
  %v2891 = vld [vmem:[%s1 + $0x778] sm:$0xff]
  %v2892 = vld [vmem:[%s1 + $0x780] sm:$0xff]
  %v2893 = vld [vmem:[%s1 + $0x788] sm:$0xff]
  %v2894 = vld [vmem:[%s1 + $0x790] sm:$0xff]
  %v2895 = vld [vmem:[%s1 + $0x798] sm:$0xff]
  %v2896 = vld [vmem:[%s1 + $0x7a0] sm:$0xff]
  %v2897 = vld [vmem:[%s1 + $0x7a8] sm:$0xff]
  %v2898 = vld [vmem:[%s1 + $0x7b0] sm:$0xff]
  %v2899 = vld [vmem:[%s1 + $0x7b8] sm:$0xff]
  %v2900 = vld [vmem:[%s1 + $0x7c0] sm:$0xff]
  %v2901 = vld [vmem:[%s1 + $0x7c8] sm:$0xff]
  %v2902 = vld [vmem:[%s1 + $0x7d0] sm:$0xff]
  %v2903 = vld [vmem:[%s1 + $0x7d8] sm:$0xff]
  %v2904 = vld [vmem:[%s1 + $0x7e0] sm:$0xff]
  %v2905 = vld [vmem:[%s1 + $0x7e8] sm:$0xff]
  %2914 = vrot.lane.b32.xlu0 %v2866, 127
  %v2915 = vpop.permute.xlu0 %2914
  %2916 = vrot.lane.b32.xlu0 %v2867, 127
  %v2917 = vpop.permute.xlu0 %2916
  %2918 = vrot.lane.b32.xlu0 %v2868, 127
  %v2919 = vpop.permute.xlu0 %2918
  %2920 = vrot.lane.b32.xlu0 %v2869, 127
  %v2921 = vpop.permute.xlu0 %2920
  %2922 = vrot.lane.b32.xlu0 %v2870, 127
  %v2923 = vpop.permute.xlu0 %2922
  %2924 = vrot.lane.b32.xlu0 %v2871, 127
  %v2925 = vpop.permute.xlu0 %2924
  %2926 = vrot.lane.b32.xlu0 %v2872, 127
  %v2927 = vpop.permute.xlu0 %2926
  %2928 = vrot.lane.b32.xlu0 %v2873, 127
  %v2929 = vpop.permute.xlu0 %2928
  %v2938 = vsel %vm1332, %v2915, 0.0
  %v2939 = vsel %vm1332, %v2917, 0.0
  %v2940 = vsel %vm1332, %v2919, 0.0
  %v2941 = vsel %vm1332, %v2921, 0.0
  %v2942 = vsel %vm1332, %v2923, 0.0
  %v2943 = vsel %vm1332, %v2925, 0.0
  %v2944 = vsel %vm1332, %v2927, 0.0
  %v2945 = vsel %vm1332, %v2929, 0.0
  %v2946 = vld [vmem:[%s1 + $0x7f1] ss:$0 sm:$0xff]
  %v2947 = vmul.f32 %v2938, %v2946
  %v2948 = vmul.f32 %v2939, %v2946
  %v2949 = vmul.f32 %v2940, %v2946
  %v2950 = vmul.f32 %v2941, %v2946
  %v2951 = vmul.f32 %v2942, %v2946
  %v2952 = vmul.f32 %v2943, %v2946
  %v2953 = vmul.f32 %v2944, %v2946
  %v2954 = vmul.f32 %v2945, %v2946
  %v2956 = vsel %vm31, %v2875, 0
  %v2959 = vsel %vm31, %v2877, 0
  %v2962 = vsel %vm31, %v2879, 0
  %v2965 = vsel %vm31, %v2881, 0
  %v2968 = vsel %vm31, %v2883, 0
  %v2971 = vsel %vm31, %v2885, 0
  %v2974 = vsel %vm31, %v2887, 0
  %v2977 = vsel %vm31, %v2889, 0
  %v2980 = vsel %vm31, %v2891, 0
  %v2983 = vsel %vm31, %v2893, 0
  %v2986 = vsel %vm31, %v2895, 0
  %v2989 = vsel %vm31, %v2897, 0
  %v2992 = vsel %vm31, %v2899, 0
  %v2995 = vsel %vm31, %v2901, 0
  %v2998 = vsel %vm31, %v2903, 0
  %v3001 = vsel %vm31, %v2905, 0
  %3003 = vmatprep.subr.mxu0 0.0
  %3004 = vmatpush1.msra.mxu0 %v2954
  %3005 = vmatprep.subr.mxu0 0.0
  %3006 = vmatpush1.msra.mxu0 %v2953
  %3007 = vmatprep.subr.mxu0 0.0
  %3008 = vmatpush1.msra.mxu0 %v2952
  %3009 = vmatprep.subr.mxu0 0.0
  %3010 = vmatpush1.msra.mxu0 %v2951
  %3011 = vmatprep.subr.mxu0 0.0
  %3012 = vmatpush1.msra.mxu0 %v2950
  %3013 = vmatprep.subr.mxu0 0.0
  %3014 = vmatpush1.msra.mxu0 %v2949
  %3015 = vmatprep.subr.mxu0 0.0
  %3016 = vmatpush1.msra.mxu0 %v2948
  %3017 = vmatprep.subr.mxu0 0.0
  %3018 = vmatpush1.msra.mxu0 %v2947
  %3019 = vmatprep.subr.mxu0 0.0
  %3020 = vmatpush1.msra.mxu0 %v2873
  %3021 = vmatprep.subr.mxu0 0.0
  %3022 = vmatpush1.msra.mxu0 %v2872
  %3023 = vmatprep.subr.mxu0 0.0
  %3024 = vmatpush1.msra.mxu0 %v2871
  %3025 = vmatprep.subr.mxu0 0.0
  %3026 = vmatpush1.msra.mxu0 %v2870
  %3027 = vmatprep.subr.mxu0 0.0
  %3028 = vmatpush1.msra.mxu0 %v2869
  %3029 = vmatprep.subr.mxu0 0.0
  %3030 = vmatpush1.msra.mxu0 %v2868
  %3031 = vmatprep.subr.mxu0 0.0
  %3032 = vmatpush1.msra.mxu0 %v2867
  %3033 = vmatprep.subr.mxu0 0.0
  %3034 = vmatpush1.msra.mxu0 %v2866
  %3035 = vmatprep.subr.mxu0 0.0
  %3036 = vmatpush2.msra.mxu0 0.0
  %3037 = vmatprep.subr.mxu0 0.0
  %3038 = vmatpush2.msra.mxu0 0.0
  %3039 = vmatprep.subr.mxu0 0.0
  %3040 = vmatpush2.msra.mxu0 0.0
  %3041 = vmatprep.subr.mxu0 0.0
  %3042 = vmatpush2.msra.mxu0 0.0
  %3043 = vmatprep.subr.mxu0 0.0
  %3044 = vmatpush2.msra.mxu0 0.0
  %3045 = vmatprep.subr.mxu0 0.0
  %3046 = vmatpush2.msra.mxu0 0.0
  %3047 = vmatprep.subr.mxu0 0.0
  %3048 = vmatpush2.msra.mxu0 0.0
  %3049 = vmatprep.subr.mxu0 0.0
  %3050 = vmatpush2.msra.mxu0 0.0
  %3051 = vmatprep.subr.mxu0 0.0
  %3052 = vmatpush2.msra.mxu0 0.0
  %3053 = vmatprep.subr.mxu0 0.0
  %3054 = vmatpush2.msra.mxu0 0.0
  %3055 = vmatprep.subr.mxu0 0.0
  %3056 = vmatpush2.msra.mxu0 0.0
  %3057 = vmatprep.subr.mxu0 0.0
  %3058 = vmatpush2.msra.mxu0 0.0
  %3059 = vmatprep.subr.mxu0 0.0
  %3060 = vmatpush2.msra.mxu0 0.0
  %3061 = vmatprep.subr.mxu0 0.0
  %3062 = vmatpush2.msra.mxu0 0.0
  %3063 = vmatprep.subr.mxu0 0.0
  %3064 = vmatpush2.msra.mxu0 0.0
  %3065 = vmatprep.subr.mxu0 0.0
  %3066 = vmatpush2.msra.mxu0 %v40
  %3067 = vmatprep.mubr.f32.mxu0 %v2956
  %3068 = vmatmul.mubr.f32.gmra.mxu0 %v2874
  %v3069 = vpop.f32.mrf.mxu0
  %v3070 = vadd.f32 0.0, %v3069
  %v3071 = vpop.f32.mrf.mxu0
  %3072 = vmatprep.mubr.f32.mxu0 %v2959
  %3073 = vmatmul.mubr.f32.gmra.mxu0 %v2876
  %v3074 = vpop.f32.mrf.mxu0
  %v3075 = vadd.f32 0.0, %v3074
  %v3076 = vpop.f32.mrf.mxu0
  %3077 = vmatprep.mubr.f32.mxu0 %v2962
  %3078 = vmatmul.mubr.f32.gmra.mxu0 %v2878
  %v3079 = vpop.f32.mrf.mxu0
  %v3080 = vadd.f32 0.0, %v3079
  %v3081 = vpop.f32.mrf.mxu0
  %3082 = vmatprep.mubr.f32.mxu0 %v2965
  %3083 = vmatmul.mubr.f32.gmra.mxu0 %v2880
  %v3084 = vpop.f32.mrf.mxu0
  %v3085 = vadd.f32 0.0, %v3084
  %v3086 = vpop.f32.mrf.mxu0
  %3087 = vmatprep.mubr.f32.mxu0 %v2968
  %3088 = vmatmul.mubr.f32.gmra.mxu0 %v2882
  %v3089 = vpop.f32.mrf.mxu0
  %v3090 = vadd.f32 0.0, %v3089
  %v3091 = vpop.f32.mrf.mxu0
  %3092 = vmatprep.mubr.f32.mxu0 %v2971
  %3093 = vmatmul.mubr.f32.gmra.mxu0 %v2884
  %v3094 = vpop.f32.mrf.mxu0
  %v3095 = vadd.f32 0.0, %v3094
  %v3096 = vpop.f32.mrf.mxu0
  %3097 = vmatprep.mubr.f32.mxu0 %v2974
  %3098 = vmatmul.mubr.f32.gmra.mxu0 %v2886
  %v3099 = vpop.f32.mrf.mxu0
  %v3100 = vadd.f32 0.0, %v3099
  %v3101 = vpop.f32.mrf.mxu0
  %3102 = vmatprep.mubr.f32.mxu0 %v2977
  %3103 = vmatmul.mubr.f32.gmra.mxu0 %v2888
  %v3104 = vpop.f32.mrf.mxu0
  %v3105 = vadd.f32 0.0, %v3104
  %v3106 = vpop.f32.mrf.mxu0
  %3107 = vmatprep.mubr.f32.mxu0 %v2980
  %3108 = vmatmul.mubr.f32.gmra.mxu0 %v2890
  %v3109 = vpop.f32.mrf.mxu0
  %v3110 = vadd.f32 0.0, %v3109
  %v3111 = vpop.f32.mrf.mxu0
  %3112 = vmatprep.mubr.f32.mxu0 %v2983
  %3113 = vmatmul.mubr.f32.gmra.mxu0 %v2892
  %v3114 = vpop.f32.mrf.mxu0
  %v3115 = vadd.f32 0.0, %v3114
  %v3116 = vpop.f32.mrf.mxu0
  %3117 = vmatprep.mubr.f32.mxu0 %v2986
  %3118 = vmatmul.mubr.f32.gmra.mxu0 %v2894
  %v3119 = vpop.f32.mrf.mxu0
  %v3120 = vadd.f32 0.0, %v3119
  %v3121 = vpop.f32.mrf.mxu0
  %3122 = vmatprep.mubr.f32.mxu0 %v2989
  %3123 = vmatmul.mubr.f32.gmra.mxu0 %v2896
  %v3124 = vpop.f32.mrf.mxu0
  %v3125 = vadd.f32 0.0, %v3124
  %v3126 = vpop.f32.mrf.mxu0
  %3127 = vmatprep.mubr.f32.mxu0 %v2992
  %3128 = vmatmul.mubr.f32.gmra.mxu0 %v2898
  %v3129 = vpop.f32.mrf.mxu0
  %v3130 = vadd.f32 0.0, %v3129
  %v3131 = vpop.f32.mrf.mxu0
  %3132 = vmatprep.mubr.f32.mxu0 %v2995
  %3133 = vmatmul.mubr.f32.gmra.mxu0 %v2900
  %v3134 = vpop.f32.mrf.mxu0
  %v3135 = vadd.f32 0.0, %v3134
  %v3136 = vpop.f32.mrf.mxu0
  %3137 = vmatprep.mubr.f32.mxu0 %v2998
  %3138 = vmatmul.mubr.f32.gmra.mxu0 %v2902
  %v3139 = vpop.f32.mrf.mxu0
  %v3140 = vadd.f32 0.0, %v3139
  %v3141 = vpop.f32.mrf.mxu0
  %3142 = vmatprep.mubr.f32.mxu0 %v3001
  %3143 = vmatmul.mubr.f32.gmra.mxu0 %v2904
  %v3144 = vpop.f32.mrf.mxu0
  %v3145 = vadd.f32 0.0, %v3144
  %v3146 = vpop.f32.mrf.mxu0
  %3147 = vdwg.mxu0
  %v3148 = vmax.f32 %v3070, 0.0
  %v3149 = vmax.f32 %v3075, 0.0
  %v3150 = vmax.f32 %v3080, 0.0
  %v3151 = vmax.f32 %v3085, 0.0
  %v3152 = vmax.f32 %v3090, 0.0
  %v3153 = vmax.f32 %v3095, 0.0
  %v3154 = vmax.f32 %v3100, 0.0
  %v3155 = vmax.f32 %v3105, 0.0
  %v3156 = vmax.f32 %v3110, 0.0
  %v3157 = vmax.f32 %v3115, 0.0
  %v3158 = vmax.f32 %v3120, 0.0
  %v3159 = vmax.f32 %v3125, 0.0
  %v3160 = vmax.f32 %v3130, 0.0
  %v3161 = vmax.f32 %v3135, 0.0
  %v3162 = vmax.f32 %v3140, 0.0
  %v3163 = vmax.f32 %v3145, 0.0
  %v3164 = vld [vmem:[%s1 + $0x800] sm:$0xff]
  %v3165 = vld [vmem:[%s1 + $0x810] sm:$0xff]
  %v3167 = vsel %vm1570, %v3156, 0
  %v3170 = vsel %vm1570, %v3157, 0
  %v3173 = vsel %vm1570, %v3158, 0
  %v3176 = vsel %vm1570, %v3159, 0
  %v3179 = vsel %vm1570, %v3160, 0
  %v3182 = vsel %vm1570, %v3161, 0
  %v3185 = vsel %vm1570, %v3162, 0
  %v3188 = vsel %vm1570, %v3163, 0
  %3190 = vmatprep.subr.mxu0 0.0
  %3191 = vmatpush1.msra.mxu0 0.0
  %3192 = vmatprep.subr.mxu0 0.0
  %3193 = vmatpush1.msra.mxu0 0.0
  %3194 = vmatprep.subr.mxu0 0.0
  %3195 = vmatpush1.msra.mxu0 0.0
  %3196 = vmatprep.subr.mxu0 0.0
  %3197 = vmatpush1.msra.mxu0 0.0
  %3198 = vmatprep.subr.mxu0 0.0
  %3199 = vmatpush1.msra.mxu0 0.0
  %3200 = vmatprep.subr.mxu0 0.0
  %3201 = vmatpush1.msra.mxu0 0.0
  %3202 = vmatprep.subr.mxu0 0.0
  %3203 = vmatpush1.msra.mxu0 0.0
  %3204 = vmatprep.subr.mxu0 0.0
  %3205 = vmatpush1.msra.mxu0 0.0
  %3206 = vmatprep.subr.mxu0 0.0
  %3207 = vmatpush1.msra.mxu0 0.0
  %3208 = vmatprep.subr.mxu0 0.0
  %3209 = vmatpush1.msra.mxu0 0.0
  %3210 = vmatprep.subr.mxu0 0.0
  %3211 = vmatpush1.msra.mxu0 0.0
  %3212 = vmatprep.subr.mxu0 0.0
  %3213 = vmatpush1.msra.mxu0 0.0
  %3214 = vmatprep.subr.mxu0 0.0
  %3215 = vmatpush1.msra.mxu0 0.0
  %3216 = vmatprep.subr.mxu0 0.0
  %3217 = vmatpush1.msra.mxu0 0.0
  %3218 = vmatprep.subr.mxu0 0.0
  %3219 = vmatpush1.msra.mxu0 0.0
  %3220 = vmatprep.subr.mxu0 0.0
  %3221 = vmatpush1.msra.mxu0 %v3165
  %3222 = vmatprep.subr.mxu0 0.0
  %3223 = vmatpush2.msra.mxu0 0.0
  %3224 = vmatprep.subr.mxu0 0.0
  %3225 = vmatpush2.msra.mxu0 0.0
  %3226 = vmatprep.subr.mxu0 0.0
  %3227 = vmatpush2.msra.mxu0 0.0
  %3228 = vmatprep.subr.mxu0 0.0
  %3229 = vmatpush2.msra.mxu0 0.0
  %3230 = vmatprep.subr.mxu0 0.0
  %3231 = vmatpush2.msra.mxu0 0.0
  %3232 = vmatprep.subr.mxu0 0.0
  %3233 = vmatpush2.msra.mxu0 0.0
  %3234 = vmatprep.subr.mxu0 0.0
  %3235 = vmatpush2.msra.mxu0 0.0
  %3236 = vmatprep.subr.mxu0 0.0
  %3237 = vmatpush2.msra.mxu0 0.0
  %3238 = vmatprep.subr.mxu0 0.0
  %3239 = vmatpush2.msra.mxu0 0.0
  %3240 = vmatprep.subr.mxu0 0.0
  %3241 = vmatpush2.msra.mxu0 0.0
  %3242 = vmatprep.subr.mxu0 0.0
  %3243 = vmatpush2.msra.mxu0 0.0
  %3244 = vmatprep.subr.mxu0 0.0
  %3245 = vmatpush2.msra.mxu0 0.0
  %3246 = vmatprep.subr.mxu0 0.0
  %3247 = vmatpush2.msra.mxu0 0.0
  %3248 = vmatprep.subr.mxu0 0.0
  %3249 = vmatpush2.msra.mxu0 0.0
  %3250 = vmatprep.subr.mxu0 0.0
  %3251 = vmatpush2.msra.mxu0 0.0
  %3252 = vmatprep.subr.mxu0 0.0
  %3253 = vmatpush2.msra.mxu0 0.0
  %3254 = vmatprep.mubr.f32.mxu0 0.0
  %3255 = vmatmul.mubr.f32.gmra.mxu0 %v3167
  %v3256 = vpop.f32.mrf.mxu0
  %v3257 = vadd.f32 0.0, %v3256
  %v3258 = vpop.f32.mrf.mxu0
  %3259 = vmatprep.mubr.f32.mxu0 0.0
  %3260 = vmatmul.mubr.f32.gmra.mxu0 %v3170
  %v3261 = vpop.f32.mrf.mxu0
  %v3262 = vadd.f32 0.0, %v3261
  %v3263 = vpop.f32.mrf.mxu0
  %3264 = vmatprep.mubr.f32.mxu0 0.0
  %3265 = vmatmul.mubr.f32.gmra.mxu0 %v3173
  %v3266 = vpop.f32.mrf.mxu0
  %v3267 = vadd.f32 0.0, %v3266
  %v3268 = vpop.f32.mrf.mxu0
  %3269 = vmatprep.mubr.f32.mxu0 0.0
  %3270 = vmatmul.mubr.f32.gmra.mxu0 %v3176
  %v3271 = vpop.f32.mrf.mxu0
  %v3272 = vadd.f32 0.0, %v3271
  %v3273 = vpop.f32.mrf.mxu0
  %3274 = vmatprep.mubr.f32.mxu0 0.0
  %3275 = vmatmul.mubr.f32.gmra.mxu0 %v3179
  %v3276 = vpop.f32.mrf.mxu0
  %v3277 = vadd.f32 0.0, %v3276
  %v3278 = vpop.f32.mrf.mxu0
  %3279 = vmatprep.mubr.f32.mxu0 0.0
  %3280 = vmatmul.mubr.f32.gmra.mxu0 %v3182
  %v3281 = vpop.f32.mrf.mxu0
  %v3282 = vadd.f32 0.0, %v3281
  %v3283 = vpop.f32.mrf.mxu0
  %3284 = vmatprep.mubr.f32.mxu0 0.0
  %3285 = vmatmul.mubr.f32.gmra.mxu0 %v3185
  %v3286 = vpop.f32.mrf.mxu0
  %v3287 = vadd.f32 0.0, %v3286
  %v3288 = vpop.f32.mrf.mxu0
  %3289 = vmatprep.mubr.f32.mxu0 0.0
  %3290 = vmatmul.mubr.f32.gmra.mxu0 %v3188
  %v3291 = vpop.f32.mrf.mxu0
  %v3292 = vadd.f32 0.0, %v3291
  %v3293 = vpop.f32.mrf.mxu0
  %3294 = vdwg.mxu0
  %v3296 = vsel %vm1570, %v3148, 0
  %v3299 = vsel %vm1570, %v3149, 0
  %v3302 = vsel %vm1570, %v3150, 0
  %v3305 = vsel %vm1570, %v3151, 0
  %v3308 = vsel %vm1570, %v3152, 0
  %v3311 = vsel %vm1570, %v3153, 0
  %v3314 = vsel %vm1570, %v3154, 0
  %v3317 = vsel %vm1570, %v3155, 0
  %3319 = vmatprep.subr.mxu0 0.0
  %3320 = vmatpush1.msra.mxu0 0.0
  %3321 = vmatprep.subr.mxu0 0.0
  %3322 = vmatpush1.msra.mxu0 0.0
  %3323 = vmatprep.subr.mxu0 0.0
  %3324 = vmatpush1.msra.mxu0 0.0
  %3325 = vmatprep.subr.mxu0 0.0
  %3326 = vmatpush1.msra.mxu0 0.0
  %3327 = vmatprep.subr.mxu0 0.0
  %3328 = vmatpush1.msra.mxu0 0.0
  %3329 = vmatprep.subr.mxu0 0.0
  %3330 = vmatpush1.msra.mxu0 0.0
  %3331 = vmatprep.subr.mxu0 0.0
  %3332 = vmatpush1.msra.mxu0 0.0
  %3333 = vmatprep.subr.mxu0 0.0
  %3334 = vmatpush1.msra.mxu0 0.0
  %3335 = vmatprep.subr.mxu0 0.0
  %3336 = vmatpush1.msra.mxu0 0.0
  %3337 = vmatprep.subr.mxu0 0.0
  %3338 = vmatpush1.msra.mxu0 0.0
  %3339 = vmatprep.subr.mxu0 0.0
  %3340 = vmatpush1.msra.mxu0 0.0
  %3341 = vmatprep.subr.mxu0 0.0
  %3342 = vmatpush1.msra.mxu0 0.0
  %3343 = vmatprep.subr.mxu0 0.0
  %3344 = vmatpush1.msra.mxu0 0.0
  %3345 = vmatprep.subr.mxu0 0.0
  %3346 = vmatpush1.msra.mxu0 0.0
  %3347 = vmatprep.subr.mxu0 0.0
  %3348 = vmatpush1.msra.mxu0 0.0
  %3349 = vmatprep.subr.mxu0 0.0
  %3350 = vmatpush1.msra.mxu0 %v3164
  %3351 = vmatprep.subr.mxu0 0.0
  %3352 = vmatpush2.msra.mxu0 0.0
  %3353 = vmatprep.subr.mxu0 0.0
  %3354 = vmatpush2.msra.mxu0 0.0
  %3355 = vmatprep.subr.mxu0 0.0
  %3356 = vmatpush2.msra.mxu0 0.0
  %3357 = vmatprep.subr.mxu0 0.0
  %3358 = vmatpush2.msra.mxu0 0.0
  %3359 = vmatprep.subr.mxu0 0.0
  %3360 = vmatpush2.msra.mxu0 0.0
  %3361 = vmatprep.subr.mxu0 0.0
  %3362 = vmatpush2.msra.mxu0 0.0
  %3363 = vmatprep.subr.mxu0 0.0
  %3364 = vmatpush2.msra.mxu0 0.0
  %3365 = vmatprep.subr.mxu0 0.0
  %3366 = vmatpush2.msra.mxu0 0.0
  %3367 = vmatprep.subr.mxu0 0.0
  %3368 = vmatpush2.msra.mxu0 0.0
  %3369 = vmatprep.subr.mxu0 0.0
  %3370 = vmatpush2.msra.mxu0 0.0
  %3371 = vmatprep.subr.mxu0 0.0
  %3372 = vmatpush2.msra.mxu0 0.0
  %3373 = vmatprep.subr.mxu0 0.0
  %3374 = vmatpush2.msra.mxu0 0.0
  %3375 = vmatprep.subr.mxu0 0.0
  %3376 = vmatpush2.msra.mxu0 0.0
  %3377 = vmatprep.subr.mxu0 0.0
  %3378 = vmatpush2.msra.mxu0 0.0
  %3379 = vmatprep.subr.mxu0 0.0
  %3380 = vmatpush2.msra.mxu0 0.0
  %3381 = vmatprep.subr.mxu0 0.0
  %3382 = vmatpush2.msra.mxu0 0.0
  %3383 = vmatprep.mubr.f32.mxu0 0.0
  %3384 = vmatmul.mubr.f32.gmra.mxu0 %v3296
  %v3385 = vpop.f32.mrf.mxu0
  %v3386 = vadd.f32 %v3257, %v3385
  %v3387 = vpop.f32.mrf.mxu0
  %3388 = vmatprep.mubr.f32.mxu0 0.0
  %3389 = vmatmul.mubr.f32.gmra.mxu0 %v3299
  %v3390 = vpop.f32.mrf.mxu0
  %v3391 = vadd.f32 %v3262, %v3390
  %v3392 = vpop.f32.mrf.mxu0
  %3393 = vmatprep.mubr.f32.mxu0 0.0
  %3394 = vmatmul.mubr.f32.gmra.mxu0 %v3302
  %v3395 = vpop.f32.mrf.mxu0
  %v3396 = vadd.f32 %v3267, %v3395
  %v3397 = vpop.f32.mrf.mxu0
  %3398 = vmatprep.mubr.f32.mxu0 0.0
  %3399 = vmatmul.mubr.f32.gmra.mxu0 %v3305
  %v3400 = vpop.f32.mrf.mxu0
  %v3401 = vadd.f32 %v3272, %v3400
  %v3402 = vpop.f32.mrf.mxu0
  %3403 = vmatprep.mubr.f32.mxu0 0.0
  %3404 = vmatmul.mubr.f32.gmra.mxu0 %v3308
  %v3405 = vpop.f32.mrf.mxu0
  %v3406 = vadd.f32 %v3277, %v3405
  %v3407 = vpop.f32.mrf.mxu0
  %3408 = vmatprep.mubr.f32.mxu0 0.0
  %3409 = vmatmul.mubr.f32.gmra.mxu0 %v3311
  %v3410 = vpop.f32.mrf.mxu0
  %v3411 = vadd.f32 %v3282, %v3410
  %v3412 = vpop.f32.mrf.mxu0
  %3413 = vmatprep.mubr.f32.mxu0 0.0
  %3414 = vmatmul.mubr.f32.gmra.mxu0 %v3314
  %v3415 = vpop.f32.mrf.mxu0
  %v3416 = vadd.f32 %v3287, %v3415
  %v3417 = vpop.f32.mrf.mxu0
  %3418 = vmatprep.mubr.f32.mxu0 0.0
  %3419 = vmatmul.mubr.f32.gmra.mxu0 %v3317
  %v3420 = vpop.f32.mrf.mxu0
  %v3421 = vadd.f32 %v3292, %v3420
  %v3422 = vpop.f32.mrf.mxu0
  %3423 = vdwg.mxu0
  %v3424 = vld [vmem:[%s1 + $0x820] sm:$0xff]
  %v3425 = vld [vmem:[%s1 + $0x828] sm:$0xff]
  %v3426 = vld [vmem:[%s1 + $0x830] sm:$0xff]
  %v3427 = vld [vmem:[%s1 + $0x838] sm:$0xff]
  %v3428 = vld [vmem:[%s1 + $0x840] sm:$0xff]
  %v3429 = vld [vmem:[%s1 + $0x848] sm:$0xff]
  %v3430 = vld [vmem:[%s1 + $0x850] sm:$0xff]
  %v3431 = vld [vmem:[%s1 + $0x858] sm:$0xff]
  %v3432 = vld [vmem:[%s1 + $0x860] sm:$0xff]
  %v3433 = vld [vmem:[%s1 + $0x868] sm:$0xff]
  %v3434 = vld [vmem:[%s1 + $0x870] sm:$0xff]
  %v3435 = vld [vmem:[%s1 + $0x878] sm:$0xff]
  %v3436 = vld [vmem:[%s1 + $0x880] sm:$0xff]
  %v3437 = vld [vmem:[%s1 + $0x888] sm:$0xff]
  %v3438 = vld [vmem:[%s1 + $0x890] sm:$0xff]
  %v3439 = vld [vmem:[%s1 + $0x898] sm:$0xff]
  %3448 = vrot.lane.b32.xlu0 %v3386, 127
  %v3449 = vpop.permute.xlu0 %3448
  %3450 = vrot.lane.b32.xlu0 %v3391, 127
  %v3451 = vpop.permute.xlu0 %3450
  %3452 = vrot.lane.b32.xlu0 %v3396, 127
  %v3453 = vpop.permute.xlu0 %3452
  %3454 = vrot.lane.b32.xlu0 %v3401, 127
  %v3455 = vpop.permute.xlu0 %3454
  %3456 = vrot.lane.b32.xlu0 %v3406, 127
  %v3457 = vpop.permute.xlu0 %3456
  %3458 = vrot.lane.b32.xlu0 %v3411, 127
  %v3459 = vpop.permute.xlu0 %3458
  %3460 = vrot.lane.b32.xlu0 %v3416, 127
  %v3461 = vpop.permute.xlu0 %3460
  %3462 = vrot.lane.b32.xlu0 %v3421, 127
  %v3463 = vpop.permute.xlu0 %3462
  %v3472 = vsel %vm948, %v3449, 0.0
  %v3473 = vsel %vm948, %v3451, 0.0
  %v3474 = vsel %vm948, %v3453, 0.0
  %v3475 = vsel %vm948, %v3455, 0.0
  %v3476 = vsel %vm948, %v3457, 0.0
  %v3477 = vsel %vm948, %v3459, 0.0
  %v3478 = vsel %vm948, %v3461, 0.0
  %v3479 = vsel %vm948, %v3463, 0.0
  %v3480 = vld [vmem:[%s1 + $0x8a1] ss:$0 sm:$0xff]
  %v3481 = vmul.f32 %v3472, %v3480
  %v3482 = vmul.f32 %v3473, %v3480
  %v3483 = vmul.f32 %v3474, %v3480
  %v3484 = vmul.f32 %v3475, %v3480
  %v3485 = vmul.f32 %v3476, %v3480
  %v3486 = vmul.f32 %v3477, %v3480
  %v3487 = vmul.f32 %v3478, %v3480
  %v3488 = vmul.f32 %v3479, %v3480
  %v3490 = vsel %vm31, %v3425, 0
  %v3493 = vsel %vm31, %v3427, 0
  %v3496 = vsel %vm31, %v3429, 0
  %v3499 = vsel %vm31, %v3431, 0
  %v3502 = vsel %vm31, %v3433, 0
  %v3505 = vsel %vm31, %v3435, 0
  %v3508 = vsel %vm31, %v3437, 0
  %v3511 = vsel %vm31, %v3439, 0
  %3513 = vmatprep.subr.mxu0 0.0
  %3514 = vmatpush1.msra.mxu0 %v3488
  %3515 = vmatprep.subr.mxu0 0.0
  %3516 = vmatpush1.msra.mxu0 %v3487
  %3517 = vmatprep.subr.mxu0 0.0
  %3518 = vmatpush1.msra.mxu0 %v3486
  %3519 = vmatprep.subr.mxu0 0.0
  %3520 = vmatpush1.msra.mxu0 %v3485
  %3521 = vmatprep.subr.mxu0 0.0
  %3522 = vmatpush1.msra.mxu0 %v3484
  %3523 = vmatprep.subr.mxu0 0.0
  %3524 = vmatpush1.msra.mxu0 %v3483
  %3525 = vmatprep.subr.mxu0 0.0
  %3526 = vmatpush1.msra.mxu0 %v3482
  %3527 = vmatprep.subr.mxu0 0.0
  %3528 = vmatpush1.msra.mxu0 %v3481
  %3529 = vmatprep.subr.mxu0 0.0
  %3530 = vmatpush1.msra.mxu0 %v3421
  %3531 = vmatprep.subr.mxu0 0.0
  %3532 = vmatpush1.msra.mxu0 %v3416
  %3533 = vmatprep.subr.mxu0 0.0
  %3534 = vmatpush1.msra.mxu0 %v3411
  %3535 = vmatprep.subr.mxu0 0.0
  %3536 = vmatpush1.msra.mxu0 %v3406
  %3537 = vmatprep.subr.mxu0 0.0
  %3538 = vmatpush1.msra.mxu0 %v3401
  %3539 = vmatprep.subr.mxu0 0.0
  %3540 = vmatpush1.msra.mxu0 %v3396
  %3541 = vmatprep.subr.mxu0 0.0
  %3542 = vmatpush1.msra.mxu0 %v3391
  %3543 = vmatprep.subr.mxu0 0.0
  %3544 = vmatpush1.msra.mxu0 %v3386
  %3545 = vmatprep.subr.mxu0 0.0
  %3546 = vmatpush2.msra.mxu0 0.0
  %3547 = vmatprep.subr.mxu0 0.0
  %3548 = vmatpush2.msra.mxu0 0.0
  %3549 = vmatprep.subr.mxu0 0.0
  %3550 = vmatpush2.msra.mxu0 0.0
  %3551 = vmatprep.subr.mxu0 0.0
  %3552 = vmatpush2.msra.mxu0 0.0
  %3553 = vmatprep.subr.mxu0 0.0
  %3554 = vmatpush2.msra.mxu0 0.0
  %3555 = vmatprep.subr.mxu0 0.0
  %3556 = vmatpush2.msra.mxu0 0.0
  %3557 = vmatprep.subr.mxu0 0.0
  %3558 = vmatpush2.msra.mxu0 0.0
  %3559 = vmatprep.subr.mxu0 0.0
  %3560 = vmatpush2.msra.mxu0 0.0
  %3561 = vmatprep.subr.mxu0 0.0
  %3562 = vmatpush2.msra.mxu0 0.0
  %3563 = vmatprep.subr.mxu0 0.0
  %3564 = vmatpush2.msra.mxu0 0.0
  %3565 = vmatprep.subr.mxu0 0.0
  %3566 = vmatpush2.msra.mxu0 0.0
  %3567 = vmatprep.subr.mxu0 0.0
  %3568 = vmatpush2.msra.mxu0 0.0
  %3569 = vmatprep.subr.mxu0 0.0
  %3570 = vmatpush2.msra.mxu0 0.0
  %3571 = vmatprep.subr.mxu0 0.0
  %3572 = vmatpush2.msra.mxu0 0.0
  %3573 = vmatprep.subr.mxu0 0.0
  %3574 = vmatpush2.msra.mxu0 0.0
  %3575 = vmatprep.subr.mxu0 0.0
  %3576 = vmatpush2.msra.mxu0 %v40
  %3577 = vmatprep.mubr.f32.mxu0 %v3490
  %3578 = vmatmul.mubr.f32.gmra.mxu0 %v3424
  %v3579 = vpop.f32.mrf.mxu0
  %v3580 = vadd.f32 0.0, %v3579
  %v3581 = vpop.f32.mrf.mxu0
  %3582 = vmatprep.mubr.f32.mxu0 %v3493
  %3583 = vmatmul.mubr.f32.gmra.mxu0 %v3426
  %v3584 = vpop.f32.mrf.mxu0
  %v3585 = vadd.f32 0.0, %v3584
  %v3586 = vpop.f32.mrf.mxu0
  %3587 = vmatprep.mubr.f32.mxu0 %v3496
  %3588 = vmatmul.mubr.f32.gmra.mxu0 %v3428
  %v3589 = vpop.f32.mrf.mxu0
  %v3590 = vadd.f32 0.0, %v3589
  %v3591 = vpop.f32.mrf.mxu0
  %3592 = vmatprep.mubr.f32.mxu0 %v3499
  %3593 = vmatmul.mubr.f32.gmra.mxu0 %v3430
  %v3594 = vpop.f32.mrf.mxu0
  %v3595 = vadd.f32 0.0, %v3594
  %v3596 = vpop.f32.mrf.mxu0
  %3597 = vmatprep.mubr.f32.mxu0 %v3502
  %3598 = vmatmul.mubr.f32.gmra.mxu0 %v3432
  %v3599 = vpop.f32.mrf.mxu0
  %v3600 = vadd.f32 0.0, %v3599
  %v3601 = vpop.f32.mrf.mxu0
  %3602 = vmatprep.mubr.f32.mxu0 %v3505
  %3603 = vmatmul.mubr.f32.gmra.mxu0 %v3434
  %v3604 = vpop.f32.mrf.mxu0
  %v3605 = vadd.f32 0.0, %v3604
  %v3606 = vpop.f32.mrf.mxu0
  %3607 = vmatprep.mubr.f32.mxu0 %v3508
  %3608 = vmatmul.mubr.f32.gmra.mxu0 %v3436
  %v3609 = vpop.f32.mrf.mxu0
  %v3610 = vadd.f32 0.0, %v3609
  %v3611 = vpop.f32.mrf.mxu0
  %3612 = vmatprep.mubr.f32.mxu0 %v3511
  %3613 = vmatmul.mubr.f32.gmra.mxu0 %v3438
  %v3614 = vpop.f32.mrf.mxu0
  %v3615 = vadd.f32 0.0, %v3614
  %v3616 = vpop.f32.mrf.mxu0
  %3617 = vdwg.mxu0
  %v3618 = vmax.f32 %v3580, 0.0
  %v3619 = vmax.f32 %v3585, 0.0
  %v3620 = vmax.f32 %v3590, 0.0
  %v3621 = vmax.f32 %v3595, 0.0
  %v3622 = vmax.f32 %v3600, 0.0
  %v3623 = vmax.f32 %v3605, 0.0
  %v3624 = vmax.f32 %v3610, 0.0
  %v3625 = vmax.f32 %v3615, 0.0
  %v3626 = vld [vmem:[%s1 + $0x8b0] sm:$0xff]
  %v3627 = vld [vmem:[%s1 + $0x8c0] sm:$0xff]
  %v3628 = vld [vmem:[%s1 + $0x8d0] sm:$0xff]
  %v3629 = vld [vmem:[%s1 + $0x8e0] sm:$0xff]
  %v3631 = vsel %vm1146, %v3622, 0
  %v3634 = vsel %vm1146, %v3623, 0
  %v3637 = vsel %vm1146, %v3624, 0
  %v3640 = vsel %vm1146, %v3625, 0
  %3642 = vmatprep.subr.mxu0 0.0
  %3643 = vmatpush1.msra.mxu0 0.0
  %3644 = vmatprep.subr.mxu0 0.0
  %3645 = vmatpush1.msra.mxu0 0.0
  %3646 = vmatprep.subr.mxu0 0.0
  %3647 = vmatpush1.msra.mxu0 0.0
  %3648 = vmatprep.subr.mxu0 0.0
  %3649 = vmatpush1.msra.mxu0 0.0
  %3650 = vmatprep.subr.mxu0 0.0
  %3651 = vmatpush1.msra.mxu0 0.0
  %3652 = vmatprep.subr.mxu0 0.0
  %3653 = vmatpush1.msra.mxu0 0.0
  %3654 = vmatprep.subr.mxu0 0.0
  %3655 = vmatpush1.msra.mxu0 0.0
  %3656 = vmatprep.subr.mxu0 0.0
  %3657 = vmatpush1.msra.mxu0 0.0
  %3658 = vmatprep.subr.mxu0 0.0
  %3659 = vmatpush1.msra.mxu0 0.0
  %3660 = vmatprep.subr.mxu0 0.0
  %3661 = vmatpush1.msra.mxu0 0.0
  %3662 = vmatprep.subr.mxu0 0.0
  %3663 = vmatpush1.msra.mxu0 0.0
  %3664 = vmatprep.subr.mxu0 0.0
  %3665 = vmatpush1.msra.mxu0 0.0
  %3666 = vmatprep.subr.mxu0 0.0
  %3667 = vmatpush1.msra.mxu0 0.0
  %3668 = vmatprep.subr.mxu0 0.0
  %3669 = vmatpush1.msra.mxu0 0.0
  %3670 = vmatprep.subr.mxu0 0.0
  %3671 = vmatpush1.msra.mxu0 %v3629
  %3672 = vmatprep.subr.mxu0 0.0
  %3673 = vmatpush1.msra.mxu0 %v3628
  %3674 = vmatprep.subr.mxu0 0.0
  %3675 = vmatpush2.msra.mxu0 0.0
  %3676 = vmatprep.subr.mxu0 0.0
  %3677 = vmatpush2.msra.mxu0 0.0
  %3678 = vmatprep.subr.mxu0 0.0
  %3679 = vmatpush2.msra.mxu0 0.0
  %3680 = vmatprep.subr.mxu0 0.0
  %3681 = vmatpush2.msra.mxu0 0.0
  %3682 = vmatprep.subr.mxu0 0.0
  %3683 = vmatpush2.msra.mxu0 0.0
  %3684 = vmatprep.subr.mxu0 0.0
  %3685 = vmatpush2.msra.mxu0 0.0
  %3686 = vmatprep.subr.mxu0 0.0
  %3687 = vmatpush2.msra.mxu0 0.0
  %3688 = vmatprep.subr.mxu0 0.0
  %3689 = vmatpush2.msra.mxu0 0.0
  %3690 = vmatprep.subr.mxu0 0.0
  %3691 = vmatpush2.msra.mxu0 0.0
  %3692 = vmatprep.subr.mxu0 0.0
  %3693 = vmatpush2.msra.mxu0 0.0
  %3694 = vmatprep.subr.mxu0 0.0
  %3695 = vmatpush2.msra.mxu0 0.0
  %3696 = vmatprep.subr.mxu0 0.0
  %3697 = vmatpush2.msra.mxu0 0.0
  %3698 = vmatprep.subr.mxu0 0.0
  %3699 = vmatpush2.msra.mxu0 0.0
  %3700 = vmatprep.subr.mxu0 0.0
  %3701 = vmatpush2.msra.mxu0 0.0
  %3702 = vmatprep.subr.mxu0 0.0
  %3703 = vmatpush2.msra.mxu0 0.0
  %3704 = vmatprep.subr.mxu0 0.0
  %3705 = vmatpush2.msra.mxu0 0.0
  %3706 = vmatprep.mubr.f32.mxu0 0.0
  %3707 = vmatmul.mubr.f32.gmra.mxu0 %v3631
  %v3708 = vpop.f32.mrf.mxu0
  %v3709 = vadd.f32 0.0, %v3708
  %v3710 = vpop.f32.mrf.mxu0
  %3711 = vmatprep.mubr.f32.mxu0 0.0
  %3712 = vmatmul.mubr.f32.gmra.mxu0 %v3634
  %v3713 = vpop.f32.mrf.mxu0
  %v3714 = vadd.f32 0.0, %v3713
  %v3715 = vpop.f32.mrf.mxu0
  %3716 = vmatprep.mubr.f32.mxu0 0.0
  %3717 = vmatmul.mubr.f32.gmra.mxu0 %v3637
  %v3718 = vpop.f32.mrf.mxu0
  %v3719 = vadd.f32 0.0, %v3718
  %v3720 = vpop.f32.mrf.mxu0
  %3721 = vmatprep.mubr.f32.mxu0 0.0
  %3722 = vmatmul.mubr.f32.gmra.mxu0 %v3640
  %v3723 = vpop.f32.mrf.mxu0
  %v3724 = vadd.f32 0.0, %v3723
  %v3725 = vpop.f32.mrf.mxu0
  %3726 = vdwg.mxu0
  %v3728 = vsel %vm1146, %v3618, 0
  %v3731 = vsel %vm1146, %v3619, 0
  %v3734 = vsel %vm1146, %v3620, 0
  %v3737 = vsel %vm1146, %v3621, 0
  %3739 = vmatprep.subr.mxu0 0.0
  %3740 = vmatpush1.msra.mxu0 0.0
  %3741 = vmatprep.subr.mxu0 0.0
  %3742 = vmatpush1.msra.mxu0 0.0
  %3743 = vmatprep.subr.mxu0 0.0
  %3744 = vmatpush1.msra.mxu0 0.0
  %3745 = vmatprep.subr.mxu0 0.0
  %3746 = vmatpush1.msra.mxu0 0.0
  %3747 = vmatprep.subr.mxu0 0.0
  %3748 = vmatpush1.msra.mxu0 0.0
  %3749 = vmatprep.subr.mxu0 0.0
  %3750 = vmatpush1.msra.mxu0 0.0
  %3751 = vmatprep.subr.mxu0 0.0
  %3752 = vmatpush1.msra.mxu0 0.0
  %3753 = vmatprep.subr.mxu0 0.0
  %3754 = vmatpush1.msra.mxu0 0.0
  %3755 = vmatprep.subr.mxu0 0.0
  %3756 = vmatpush1.msra.mxu0 0.0
  %3757 = vmatprep.subr.mxu0 0.0
  %3758 = vmatpush1.msra.mxu0 0.0
  %3759 = vmatprep.subr.mxu0 0.0
  %3760 = vmatpush1.msra.mxu0 0.0
  %3761 = vmatprep.subr.mxu0 0.0
  %3762 = vmatpush1.msra.mxu0 0.0
  %3763 = vmatprep.subr.mxu0 0.0
  %3764 = vmatpush1.msra.mxu0 0.0
  %3765 = vmatprep.subr.mxu0 0.0
  %3766 = vmatpush1.msra.mxu0 0.0
  %3767 = vmatprep.subr.mxu0 0.0
  %3768 = vmatpush1.msra.mxu0 %v3627
  %3769 = vmatprep.subr.mxu0 0.0
  %3770 = vmatpush1.msra.mxu0 %v3626
  %3771 = vmatprep.subr.mxu0 0.0
  %3772 = vmatpush2.msra.mxu0 0.0
  %3773 = vmatprep.subr.mxu0 0.0
  %3774 = vmatpush2.msra.mxu0 0.0
  %3775 = vmatprep.subr.mxu0 0.0
  %3776 = vmatpush2.msra.mxu0 0.0
  %3777 = vmatprep.subr.mxu0 0.0
  %3778 = vmatpush2.msra.mxu0 0.0
  %3779 = vmatprep.subr.mxu0 0.0
  %3780 = vmatpush2.msra.mxu0 0.0
  %3781 = vmatprep.subr.mxu0 0.0
  %3782 = vmatpush2.msra.mxu0 0.0
  %3783 = vmatprep.subr.mxu0 0.0
  %3784 = vmatpush2.msra.mxu0 0.0
  %3785 = vmatprep.subr.mxu0 0.0
  %3786 = vmatpush2.msra.mxu0 0.0
  %3787 = vmatprep.subr.mxu0 0.0
  %3788 = vmatpush2.msra.mxu0 0.0
  %3789 = vmatprep.subr.mxu0 0.0
  %3790 = vmatpush2.msra.mxu0 0.0
  %3791 = vmatprep.subr.mxu0 0.0
  %3792 = vmatpush2.msra.mxu0 0.0
  %3793 = vmatprep.subr.mxu0 0.0
  %3794 = vmatpush2.msra.mxu0 0.0
  %3795 = vmatprep.subr.mxu0 0.0
  %3796 = vmatpush2.msra.mxu0 0.0
  %3797 = vmatprep.subr.mxu0 0.0
  %3798 = vmatpush2.msra.mxu0 0.0
  %3799 = vmatprep.subr.mxu0 0.0
  %3800 = vmatpush2.msra.mxu0 0.0
  %3801 = vmatprep.subr.mxu0 0.0
  %3802 = vmatpush2.msra.mxu0 0.0
  %3803 = vmatprep.mubr.f32.mxu0 0.0
  %3804 = vmatmul.mubr.f32.gmra.mxu0 %v3728
  %v3805 = vpop.f32.mrf.mxu0
  %v3806 = vadd.f32 %v3709, %v3805
  %v3807 = vpop.f32.mrf.mxu0
  %3808 = vmatprep.mubr.f32.mxu0 0.0
  %3809 = vmatmul.mubr.f32.gmra.mxu0 %v3731
  %v3810 = vpop.f32.mrf.mxu0
  %v3811 = vadd.f32 %v3714, %v3810
  %v3812 = vpop.f32.mrf.mxu0
  %3813 = vmatprep.mubr.f32.mxu0 0.0
  %3814 = vmatmul.mubr.f32.gmra.mxu0 %v3734
  %v3815 = vpop.f32.mrf.mxu0
  %v3816 = vadd.f32 %v3719, %v3815
  %v3817 = vpop.f32.mrf.mxu0
  %3818 = vmatprep.mubr.f32.mxu0 0.0
  %3819 = vmatmul.mubr.f32.gmra.mxu0 %v3737
  %v3820 = vpop.f32.mrf.mxu0
  %v3821 = vadd.f32 %v3724, %v3820
  %v3822 = vpop.f32.mrf.mxu0
  %3823 = vdwg.mxu0
  %v3824 = vld [vmem:[%s1 + $0x8f0] sm:$0xff]
  %v3825 = vld [vmem:[%s1 + $0x900] sm:$0xff]
  %v3826 = vld [vmem:[%s1 + $0x910] sm:$0xff]
  %v3827 = vld [vmem:[%s1 + $0x920] sm:$0xff]
  %3832 = vrot.lane.b32.xlu0 %v3806, 127
  %v3833 = vpop.permute.xlu0 %3832
  %3834 = vrot.lane.b32.xlu0 %v3811, 127
  %v3835 = vpop.permute.xlu0 %3834
  %3836 = vrot.lane.b32.xlu0 %v3816, 127
  %v3837 = vpop.permute.xlu0 %3836
  %3838 = vrot.lane.b32.xlu0 %v3821, 127
  %v3839 = vpop.permute.xlu0 %3838
  %v3844 = vsel %vm529, %v3833, 0.0
  %v3845 = vsel %vm529, %v3835, 0.0
  %v3846 = vsel %vm529, %v3837, 0.0
  %v3847 = vsel %vm529, %v3839, 0.0
  %v3848 = vld [vmem:[%s1 + $0x931] ss:$0 sm:$0xff]
  %v3849 = vmul.f32 %v3844, %v3848
  %v3850 = vmul.f32 %v3845, %v3848
  %v3851 = vmul.f32 %v3846, %v3848
  %v3852 = vmul.f32 %v3847, %v3848
  %v3854 = vsel %vm966, %v3824, 0
  %v3857 = vsel %vm966, %v3825, 0
  %v3860 = vsel %vm966, %v3826, 0
  %v3863 = vsel %vm966, %v3827, 0
  %3865 = vmatprep.subr.mxu0 0.0
  %3866 = vmatpush1.msra.mxu0 0.0
  %3867 = vmatprep.subr.mxu0 0.0
  %3868 = vmatpush1.msra.mxu0 0.0
  %3869 = vmatprep.subr.mxu0 0.0
  %3870 = vmatpush1.msra.mxu0 0.0
  %3871 = vmatprep.subr.mxu0 0.0
  %3872 = vmatpush1.msra.mxu0 0.0
  %3873 = vmatprep.subr.mxu0 0.0
  %3874 = vmatpush1.msra.mxu0 0.0
  %3875 = vmatprep.subr.mxu0 0.0
  %3876 = vmatpush1.msra.mxu0 0.0
  %3877 = vmatprep.subr.mxu0 0.0
  %3878 = vmatpush1.msra.mxu0 0.0
  %3879 = vmatprep.subr.mxu0 0.0
  %3880 = vmatpush1.msra.mxu0 %v40
  %3881 = vmatprep.subr.mxu0 0.0
  %3882 = vmatpush1.msra.mxu0 %v3852
  %3883 = vmatprep.subr.mxu0 0.0
  %3884 = vmatpush1.msra.mxu0 %v3851
  %3885 = vmatprep.subr.mxu0 0.0
  %3886 = vmatpush1.msra.mxu0 %v3850
  %3887 = vmatprep.subr.mxu0 0.0
  %3888 = vmatpush1.msra.mxu0 %v3849
  %3889 = vmatprep.subr.mxu0 0.0
  %3890 = vmatpush1.msra.mxu0 %v3821
  %3891 = vmatprep.subr.mxu0 0.0
  %3892 = vmatpush1.msra.mxu0 %v3816
  %3893 = vmatprep.subr.mxu0 0.0
  %3894 = vmatpush1.msra.mxu0 %v3811
  %3895 = vmatprep.subr.mxu0 0.0
  %3896 = vmatpush1.msra.mxu0 %v3806
  %3897 = vmatprep.subr.mxu0 0.0
  %3898 = vmatpush2.msra.mxu0 0.0
  %3899 = vmatprep.subr.mxu0 0.0
  %3900 = vmatpush2.msra.mxu0 0.0
  %3901 = vmatprep.subr.mxu0 0.0
  %3902 = vmatpush2.msra.mxu0 0.0
  %3903 = vmatprep.subr.mxu0 0.0
  %3904 = vmatpush2.msra.mxu0 0.0
  %3905 = vmatprep.subr.mxu0 0.0
  %3906 = vmatpush2.msra.mxu0 0.0
  %3907 = vmatprep.subr.mxu0 0.0
  %3908 = vmatpush2.msra.mxu0 0.0
  %3909 = vmatprep.subr.mxu0 0.0
  %3910 = vmatpush2.msra.mxu0 0.0
  %3911 = vmatprep.subr.mxu0 0.0
  %3912 = vmatpush2.msra.mxu0 0.0
  %3913 = vmatprep.subr.mxu0 0.0
  %3914 = vmatpush2.msra.mxu0 0.0
  %3915 = vmatprep.subr.mxu0 0.0
  %3916 = vmatpush2.msra.mxu0 0.0
  %3917 = vmatprep.subr.mxu0 0.0
  %3918 = vmatpush2.msra.mxu0 0.0
  %3919 = vmatprep.subr.mxu0 0.0
  %3920 = vmatpush2.msra.mxu0 0.0
  %3921 = vmatprep.subr.mxu0 0.0
  %3922 = vmatpush2.msra.mxu0 0.0
  %3923 = vmatprep.subr.mxu0 0.0
  %3924 = vmatpush2.msra.mxu0 0.0
  %3925 = vmatprep.subr.mxu0 0.0
  %3926 = vmatpush2.msra.mxu0 0.0
  %3927 = vmatprep.subr.mxu0 0.0
  %3928 = vmatpush2.msra.mxu0 0.0
  %3929 = vmatprep.mubr.f32.mxu0 0.0
  %3930 = vmatmul.mubr.f32.gmra.mxu0 %v3854
  %v3931 = vpop.f32.mrf.mxu0
  %v3932 = vadd.f32 0.0, %v3931
  %v3933 = vpop.f32.mrf.mxu0
  %3934 = vmatprep.mubr.f32.mxu0 0.0
  %3935 = vmatmul.mubr.f32.gmra.mxu0 %v3857
  %v3936 = vpop.f32.mrf.mxu0
  %v3937 = vadd.f32 0.0, %v3936
  %v3938 = vpop.f32.mrf.mxu0
  %3939 = vmatprep.mubr.f32.mxu0 0.0
  %3940 = vmatmul.mubr.f32.gmra.mxu0 %v3860
  %v3941 = vpop.f32.mrf.mxu0
  %v3942 = vadd.f32 0.0, %v3941
  %v3943 = vpop.f32.mrf.mxu0
  %3944 = vmatprep.mubr.f32.mxu0 0.0
  %3945 = vmatmul.mubr.f32.gmra.mxu0 %v3863
  %v3946 = vpop.f32.mrf.mxu0
  %v3947 = vadd.f32 0.0, %v3946
  %v3948 = vpop.f32.mrf.mxu0
  %3949 = vdwg.mxu0
  %v3950 = vmax.f32 %v3932, 0.0
  %v3951 = vmax.f32 %v3937, 0.0
  %v3952 = vmax.f32 %v3942, 0.0
  %v3953 = vmax.f32 %v3947, 0.0
  %v3954 = vld [vmem:[%s1 + $0x940] sm:$0xff]
  %v3955 = vld [vmem:[%s1 + $0x950] sm:$0xff]
  %v3956 = vld [vmem:[%s1 + $0x960] sm:$0xff]
  %v3957 = vld [vmem:[%s1 + $0x970] sm:$0xff]
  %v3958 = vld [vmem:[%s1 + $0x980] sm:$0xff]
  %v3959 = vld [vmem:[%s1 + $0x990] sm:$0xff]
  %v3960 = vld [vmem:[%s1 + $0x9a0] sm:$0xff]
  %v3961 = vld [vmem:[%s1 + $0x9b0] sm:$0xff]
  %v3963 = vsel %vm721, %v3952, 0
  %v3966 = vsel %vm721, %v3953, 0
  %3968 = vmatprep.subr.mxu0 0.0
  %3969 = vmatpush1.msra.mxu0 0.0
  %3970 = vmatprep.subr.mxu0 0.0
  %3971 = vmatpush1.msra.mxu0 0.0
  %3972 = vmatprep.subr.mxu0 0.0
  %3973 = vmatpush1.msra.mxu0 0.0
  %3974 = vmatprep.subr.mxu0 0.0
  %3975 = vmatpush1.msra.mxu0 0.0
  %3976 = vmatprep.subr.mxu0 0.0
  %3977 = vmatpush1.msra.mxu0 0.0
  %3978 = vmatprep.subr.mxu0 0.0
  %3979 = vmatpush1.msra.mxu0 0.0
  %3980 = vmatprep.subr.mxu0 0.0
  %3981 = vmatpush1.msra.mxu0 0.0
  %3982 = vmatprep.subr.mxu0 0.0
  %3983 = vmatpush1.msra.mxu0 0.0
  %3984 = vmatprep.subr.mxu0 0.0
  %3985 = vmatpush1.msra.mxu0 0.0
  %3986 = vmatprep.subr.mxu0 0.0
  %3987 = vmatpush1.msra.mxu0 0.0
  %3988 = vmatprep.subr.mxu0 0.0
  %3989 = vmatpush1.msra.mxu0 0.0
  %3990 = vmatprep.subr.mxu0 0.0
  %3991 = vmatpush1.msra.mxu0 0.0
  %3992 = vmatprep.subr.mxu0 0.0
  %3993 = vmatpush1.msra.mxu0 %v3961
  %3994 = vmatprep.subr.mxu0 0.0
  %3995 = vmatpush1.msra.mxu0 %v3960
  %3996 = vmatprep.subr.mxu0 0.0
  %3997 = vmatpush1.msra.mxu0 %v3959
  %3998 = vmatprep.subr.mxu0 0.0
  %3999 = vmatpush1.msra.mxu0 %v3958
  %4000 = vmatprep.subr.mxu0 0.0
  %4001 = vmatpush2.msra.mxu0 0.0
  %4002 = vmatprep.subr.mxu0 0.0
  %4003 = vmatpush2.msra.mxu0 0.0
  %4004 = vmatprep.subr.mxu0 0.0
  %4005 = vmatpush2.msra.mxu0 0.0
  %4006 = vmatprep.subr.mxu0 0.0
  %4007 = vmatpush2.msra.mxu0 0.0
  %4008 = vmatprep.subr.mxu0 0.0
  %4009 = vmatpush2.msra.mxu0 0.0
  %4010 = vmatprep.subr.mxu0 0.0
  %4011 = vmatpush2.msra.mxu0 0.0
  %4012 = vmatprep.subr.mxu0 0.0
  %4013 = vmatpush2.msra.mxu0 0.0
  %4014 = vmatprep.subr.mxu0 0.0
  %4015 = vmatpush2.msra.mxu0 0.0
  %4016 = vmatprep.subr.mxu0 0.0
  %4017 = vmatpush2.msra.mxu0 0.0
  %4018 = vmatprep.subr.mxu0 0.0
  %4019 = vmatpush2.msra.mxu0 0.0
  %4020 = vmatprep.subr.mxu0 0.0
  %4021 = vmatpush2.msra.mxu0 0.0
  %4022 = vmatprep.subr.mxu0 0.0
  %4023 = vmatpush2.msra.mxu0 0.0
  %4024 = vmatprep.subr.mxu0 0.0
  %4025 = vmatpush2.msra.mxu0 0.0
  %4026 = vmatprep.subr.mxu0 0.0
  %4027 = vmatpush2.msra.mxu0 0.0
  %4028 = vmatprep.subr.mxu0 0.0
  %4029 = vmatpush2.msra.mxu0 0.0
  %4030 = vmatprep.subr.mxu0 0.0
  %4031 = vmatpush2.msra.mxu0 0.0
  %4032 = vmatprep.mubr.f32.mxu0 0.0
  %4033 = vmatmul.mubr.f32.gmra.mxu0 %v3963
  %v4034 = vpop.f32.mrf.mxu0
  %v4035 = vadd.f32 0.0, %v4034
  %v4036 = vpop.f32.mrf.mxu0
  %4037 = vmatprep.mubr.f32.mxu0 0.0
  %4038 = vmatmul.mubr.f32.gmra.mxu0 %v3966
  %v4039 = vpop.f32.mrf.mxu0
  %v4040 = vadd.f32 0.0, %v4039
  %v4041 = vpop.f32.mrf.mxu0
  %4042 = vdwg.mxu0
  %v4044 = vsel %vm721, %v3950, 0
  %v4047 = vsel %vm721, %v3951, 0
  %4049 = vmatprep.subr.mxu0 0.0
  %4050 = vmatpush1.msra.mxu0 0.0
  %4051 = vmatprep.subr.mxu0 0.0
  %4052 = vmatpush1.msra.mxu0 0.0
  %4053 = vmatprep.subr.mxu0 0.0
  %4054 = vmatpush1.msra.mxu0 0.0
  %4055 = vmatprep.subr.mxu0 0.0
  %4056 = vmatpush1.msra.mxu0 0.0
  %4057 = vmatprep.subr.mxu0 0.0
  %4058 = vmatpush1.msra.mxu0 0.0
  %4059 = vmatprep.subr.mxu0 0.0
  %4060 = vmatpush1.msra.mxu0 0.0
  %4061 = vmatprep.subr.mxu0 0.0
  %4062 = vmatpush1.msra.mxu0 0.0
  %4063 = vmatprep.subr.mxu0 0.0
  %4064 = vmatpush1.msra.mxu0 0.0
  %4065 = vmatprep.subr.mxu0 0.0
  %4066 = vmatpush1.msra.mxu0 0.0
  %4067 = vmatprep.subr.mxu0 0.0
  %4068 = vmatpush1.msra.mxu0 0.0
  %4069 = vmatprep.subr.mxu0 0.0
  %4070 = vmatpush1.msra.mxu0 0.0
  %4071 = vmatprep.subr.mxu0 0.0
  %4072 = vmatpush1.msra.mxu0 0.0
  %4073 = vmatprep.subr.mxu0 0.0
  %4074 = vmatpush1.msra.mxu0 %v3957
  %4075 = vmatprep.subr.mxu0 0.0
  %4076 = vmatpush1.msra.mxu0 %v3956
  %4077 = vmatprep.subr.mxu0 0.0
  %4078 = vmatpush1.msra.mxu0 %v3955
  %4079 = vmatprep.subr.mxu0 0.0
  %4080 = vmatpush1.msra.mxu0 %v3954
  %4081 = vmatprep.subr.mxu0 0.0
  %4082 = vmatpush2.msra.mxu0 0.0
  %4083 = vmatprep.subr.mxu0 0.0
  %4084 = vmatpush2.msra.mxu0 0.0
  %4085 = vmatprep.subr.mxu0 0.0
  %4086 = vmatpush2.msra.mxu0 0.0
  %4087 = vmatprep.subr.mxu0 0.0
  %4088 = vmatpush2.msra.mxu0 0.0
  %4089 = vmatprep.subr.mxu0 0.0
  %4090 = vmatpush2.msra.mxu0 0.0
  %4091 = vmatprep.subr.mxu0 0.0
  %4092 = vmatpush2.msra.mxu0 0.0
  %4093 = vmatprep.subr.mxu0 0.0
  %4094 = vmatpush2.msra.mxu0 0.0
  %4095 = vmatprep.subr.mxu0 0.0
  %4096 = vmatpush2.msra.mxu0 0.0
  %4097 = vmatprep.subr.mxu0 0.0
  %4098 = vmatpush2.msra.mxu0 0.0
  %4099 = vmatprep.subr.mxu0 0.0
  %4100 = vmatpush2.msra.mxu0 0.0
  %4101 = vmatprep.subr.mxu0 0.0
  %4102 = vmatpush2.msra.mxu0 0.0
  %4103 = vmatprep.subr.mxu0 0.0
  %4104 = vmatpush2.msra.mxu0 0.0
  %4105 = vmatprep.subr.mxu0 0.0
  %4106 = vmatpush2.msra.mxu0 0.0
  %4107 = vmatprep.subr.mxu0 0.0
  %4108 = vmatpush2.msra.mxu0 0.0
  %4109 = vmatprep.subr.mxu0 0.0
  %4110 = vmatpush2.msra.mxu0 0.0
  %4111 = vmatprep.subr.mxu0 0.0
  %4112 = vmatpush2.msra.mxu0 0.0
  %4113 = vmatprep.mubr.f32.mxu0 0.0
  %4114 = vmatmul.mubr.f32.gmra.mxu0 %v4044
  %v4115 = vpop.f32.mrf.mxu0
  %v4116 = vadd.f32 %v4035, %v4115
  %v4117 = vpop.f32.mrf.mxu0
  %4118 = vmatprep.mubr.f32.mxu0 0.0
  %4119 = vmatmul.mubr.f32.gmra.mxu0 %v4047
  %v4120 = vpop.f32.mrf.mxu0
  %v4121 = vadd.f32 %v4040, %v4120
  %v4122 = vpop.f32.mrf.mxu0
  %4123 = vdwg.mxu0
  %v4124 = vld [vmem:[%s1 + $0x9c0] sm:$0xff]
  %v4125 = vld [vmem:[%s1 + $0x9d0] sm:$0xff]
  %v4126 = vld [vmem:[%s1 + $0x9e0] sm:$0xff]
  %v4127 = vld [vmem:[%s1 + $0x9f0] sm:$0xff]
  %v4128 = vld [vmem:[%s1 + $0xa00] sm:$0xff]
  %v4129 = vld [vmem:[%s1 + $0xa10] sm:$0xff]
  %v4130 = vld [vmem:[%s1 + $0xa20] sm:$0xff]
  %v4131 = vld [vmem:[%s1 + $0xa30] sm:$0xff]
  %4134 = vrot.lane.b32.xlu0 %v4116, 1
  %v4135 = vpop.permute.xlu0 %4134
  %4136 = vrot.lane.b32.xlu0 %v4121, 1
  %v4137 = vpop.permute.xlu0 %4136
  %v4140 = vsel %vm31, 0.0, %v4135
  %v4141 = vsel %vm31, 0.0, %v4137
  %v4142 = vld [vmem:[%s1 + $0xa40] ss:$0 sm:$0xff]
  %v4143 = vmul.f32 %v4140, %v4142
  %v4144 = vmul.f32 %v4141, %v4142
  %4145 = vrot.lane.b32.xlu0 %v4116, 127
  %v4146 = vpop.permute.xlu0 %4145
  %4147 = vrot.lane.b32.xlu0 %v4121, 127
  %v4148 = vpop.permute.xlu0 %4147
  %v4151 = vsel %vm246, %v4146, 0.0
  %v4152 = vsel %vm246, %v4148, 0.0
  %v4153 = vld [vmem:[%s1 + $0xa42] ss:$0 sm:$0xff]
  %v4154 = vmul.f32 %v4151, %v4153
  %v4155 = vmul.f32 %v4152, %v4153
  %v4157 = vsel %vm252, %v4124, 0
  %v4160 = vsel %vm252, %v4125, 0
  %v4163 = vsel %vm252, %v4126, 0
  %v4166 = vsel %vm252, %v4127, 0
  %v4169 = vsel %vm252, %v4128, 0
  %v4172 = vsel %vm252, %v4129, 0
  %v4175 = vsel %vm252, %v4130, 0
  %v4178 = vsel %vm252, %v4131, 0
  %4180 = vmatprep.subr.mxu0 0.0
  %4181 = vmatpush1.msra.mxu0 0.0
  %4182 = vmatprep.subr.mxu0 0.0
  %4183 = vmatpush1.msra.mxu0 0.0
  %4184 = vmatprep.subr.mxu0 0.0
  %4185 = vmatpush1.msra.mxu0 0.0
  %4186 = vmatprep.subr.mxu0 0.0
  %4187 = vmatpush1.msra.mxu0 0.0
  %4188 = vmatprep.subr.mxu0 0.0
  %4189 = vmatpush1.msra.mxu0 0.0
  %4190 = vmatprep.subr.mxu0 0.0
  %4191 = vmatpush1.msra.mxu0 0.0
  %4192 = vmatprep.subr.mxu0 0.0
  %4193 = vmatpush1.msra.mxu0 0.0
  %4194 = vmatprep.subr.mxu0 0.0
  %4195 = vmatpush1.msra.mxu0 0.0
  %4196 = vmatprep.subr.mxu0 0.0
  %4197 = vmatpush1.msra.mxu0 0.0
  %4198 = vmatprep.subr.mxu0 0.0
  %4199 = vmatpush1.msra.mxu0 %v40
  %4200 = vmatprep.subr.mxu0 0.0
  %4201 = vmatpush1.msra.mxu0 %v4155
  %4202 = vmatprep.subr.mxu0 0.0
  %4203 = vmatpush1.msra.mxu0 %v4154
  %4204 = vmatprep.subr.mxu0 0.0
  %4205 = vmatpush1.msra.mxu0 %v4121
  %4206 = vmatprep.subr.mxu0 0.0
  %4207 = vmatpush1.msra.mxu0 %v4116
  %4208 = vmatprep.subr.mxu0 0.0
  %4209 = vmatpush1.msra.mxu0 %v4144
  %4210 = vmatprep.subr.mxu0 0.0
  %4211 = vmatpush1.msra.mxu0 %v4143
  %4212 = vmatprep.subr.mxu0 0.0
  %4213 = vmatpush2.msra.mxu0 0.0
  %4214 = vmatprep.subr.mxu0 0.0
  %4215 = vmatpush2.msra.mxu0 0.0
  %4216 = vmatprep.subr.mxu0 0.0
  %4217 = vmatpush2.msra.mxu0 0.0
  %4218 = vmatprep.subr.mxu0 0.0
  %4219 = vmatpush2.msra.mxu0 0.0
  %4220 = vmatprep.subr.mxu0 0.0
  %4221 = vmatpush2.msra.mxu0 0.0
  %4222 = vmatprep.subr.mxu0 0.0
  %4223 = vmatpush2.msra.mxu0 0.0
  %4224 = vmatprep.subr.mxu0 0.0
  %4225 = vmatpush2.msra.mxu0 0.0
  %4226 = vmatprep.subr.mxu0 0.0
  %4227 = vmatpush2.msra.mxu0 0.0
  %4228 = vmatprep.subr.mxu0 0.0
  %4229 = vmatpush2.msra.mxu0 0.0
  %4230 = vmatprep.subr.mxu0 0.0
  %4231 = vmatpush2.msra.mxu0 0.0
  %4232 = vmatprep.subr.mxu0 0.0
  %4233 = vmatpush2.msra.mxu0 0.0
  %4234 = vmatprep.subr.mxu0 0.0
  %4235 = vmatpush2.msra.mxu0 0.0
  %4236 = vmatprep.subr.mxu0 0.0
  %4237 = vmatpush2.msra.mxu0 0.0
  %4238 = vmatprep.subr.mxu0 0.0
  %4239 = vmatpush2.msra.mxu0 0.0
  %4240 = vmatprep.subr.mxu0 0.0
  %4241 = vmatpush2.msra.mxu0 0.0
  %4242 = vmatprep.subr.mxu0 0.0
  %4243 = vmatpush2.msra.mxu0 0.0
  %4244 = vmatprep.mubr.f32.mxu0 0.0
  %4245 = vmatmul.mubr.f32.gmra.mxu0 %v4157
  %v4246 = vpop.f32.mrf.mxu0
  %v4247 = vadd.f32 0.0, %v4246
  %v4248 = vpop.f32.mrf.mxu0
  %4249 = vmatprep.mubr.f32.mxu0 0.0
  %4250 = vmatmul.mubr.f32.gmra.mxu0 %v4160
  %v4251 = vpop.f32.mrf.mxu0
  %v4252 = vadd.f32 0.0, %v4251
  %v4253 = vpop.f32.mrf.mxu0
  %4254 = vmatprep.mubr.f32.mxu0 0.0
  %4255 = vmatmul.mubr.f32.gmra.mxu0 %v4163
  %v4256 = vpop.f32.mrf.mxu0
  %v4257 = vadd.f32 0.0, %v4256
  %v4258 = vpop.f32.mrf.mxu0
  %4259 = vmatprep.mubr.f32.mxu0 0.0
  %4260 = vmatmul.mubr.f32.gmra.mxu0 %v4166
  %v4261 = vpop.f32.mrf.mxu0
  %v4262 = vadd.f32 0.0, %v4261
  %v4263 = vpop.f32.mrf.mxu0
  %4264 = vmatprep.mubr.f32.mxu0 0.0
  %4265 = vmatmul.mubr.f32.gmra.mxu0 %v4169
  %v4266 = vpop.f32.mrf.mxu0
  %v4267 = vadd.f32 0.0, %v4266
  %v4268 = vpop.f32.mrf.mxu0
  %4269 = vmatprep.mubr.f32.mxu0 0.0
  %4270 = vmatmul.mubr.f32.gmra.mxu0 %v4172
  %v4271 = vpop.f32.mrf.mxu0
  %v4272 = vadd.f32 0.0, %v4271
  %v4273 = vpop.f32.mrf.mxu0
  %4274 = vmatprep.mubr.f32.mxu0 0.0
  %4275 = vmatmul.mubr.f32.gmra.mxu0 %v4175
  %v4276 = vpop.f32.mrf.mxu0
  %v4277 = vadd.f32 0.0, %v4276
  %v4278 = vpop.f32.mrf.mxu0
  %4279 = vmatprep.mubr.f32.mxu0 0.0
  %4280 = vmatmul.mubr.f32.gmra.mxu0 %v4178
  %v4281 = vpop.f32.mrf.mxu0
  %v4282 = vadd.f32 0.0, %v4281
  %v4283 = vpop.f32.mrf.mxu0
  %4284 = vdwg.mxu0
  %v4285 = vmax.f32 %v4247, 0.0
  %v4286 = vmax.f32 %v4252, 0.0
  %v4287 = vmax.f32 %v4257, 0.0
  %v4288 = vmax.f32 %v4262, 0.0
  %v4289 = vmax.f32 %v4267, 0.0
  %v4290 = vmax.f32 %v4272, 0.0
  %v4291 = vmax.f32 %v4277, 0.0
  %v4292 = vmax.f32 %v4282, 0.0
  %v4293 = vsel %vm2326, %v1791, 0.0
  %v4294 = vsel %vm2326, %v1792, 0.0
  %4298 = vrot.lane.b32.xlu0 %v4293, 64
  %v4299 = vpop.permute.xlu0 %4298
  %4300 = vrot.lane.b32.xlu0 %v4294, 64
  %v4301 = vpop.permute.xlu0 %4300
  %4302 = vrot.lane.b32.xlu0 0.0, 64
  %v4303 = vpop.permute.xlu0 %4302
  %v4307 = vsel %vm382, %v4285, %v4299
  %v4308 = vsel %vm382, %v4286, %v4301
  %v4309 = vsel %vm382, %v4287, %v4303
  %v4310 = vsel %vm382, %v4288, %v4303
  %v4311 = vsel %vm382, %v4289, %v4303
  %v4312 = vsel %vm382, %v4290, %v4303
  %v4313 = vsel %vm382, %v4291, %v4303
  %v4314 = vsel %vm382, %v4292, %v4303
  %4315 = vst [vmem:[%s2] sm:$0xff] %v4307
  %4316 = vst [vmem:[%s2 + $0x8] sm:$0xff] %v4308
  %4317 = vst [vmem:[%s2 + $0x10] sm:$0xff] %v4309
  %4318 = vst [vmem:[%s2 + $0x18] sm:$0xff] %v4310
  %4319 = vst [vmem:[%s2 + $0x20] sm:$0xff] %v4311
  %4320 = vst [vmem:[%s2 + $0x28] sm:$0xff] %v4312
  %4321 = vst [vmem:[%s2 + $0x30] sm:$0xff] %v4313
  %4322 = vst [vmem:[%s2 + $0x38] sm:$0xff] %v4314
  // Predicated region
  $region10: #{_lambda_.1} parent=0 // pred_check
    _
  $region11: #{_lambda_.1} parent=0 // pred_check_branch
    %4324 = sbr.rel (0) target = $region13
  $region12: #{_lambda_.1} parent=0 // pred_region
    _
  $region13: #{_lambda_.1} parent=0 // pred_fallthru
    _
  // Predicated region
  $region14: #{_lambda_.1} parent=0 // pred_check
    _
  $region15: #{_lambda_.1} parent=0 // pred_check_branch
    %4326 = sbr.rel (0) target = $region17
  $region16: #{_lambda_.1} parent=0 // pred_region
    _
  $region17: #{_lambda_.1} parent=0 // pred_fallthru
    _

</llo_original>
